<compile_context>
chip_gen: v6e
topology: v6e:2x2x1
jax: 0.10.0
libtpu: 0.0.40
codegen_flags: <defaults>
</compile_context>

<pallas_src>
import functools

import numpy as np
import jax
import jax.numpy as jnp
from jax.experimental import pallas as pl
from jax.experimental.pallas import tpu as pltpu

# LeNet geometry (image_resize = (32, 32)).
H0, W0, C0 = 32, 32, 3           # input (H, W, C)
K = 5                            # conv kernel size
C1, H1 = 6, 28                   # conv1 output channels / height
P1W = 14                         # pool1 width
C2, H2 = 16, 10                  # conv2 output channels / height
P2H, P2W = 5, 5                  # pool2 output
F1, F2 = 120, 84                 # fc hidden sizes
LANES = 128                      # lane-dense padded feature width


# ------------------------------ fused, batched LeNet kernel ------------------------------

def _lenet_kernel(x_ref, t1_ref, cb1_ref, t2_ref, cb2_ref,
                  w1_ref, fb1_ref, w2_ref, fb2_ref, w3_ref, fb3_ref,
                  o_ref, s1_ref, p1_ref, s2_ref, p2_ref, *, tb):
    """Full LeNet forward for TB images of one model; all intermediates stay in VMEM."""
    f32, bf16 = jnp.float32, jnp.bfloat16
    r1 = tb * H0                 # tall conv1 input rows   (32 per image)
    m1 = r1 - (K - 1)            # tall conv1 output rows actually computed
    r2 = r1 // 2                 # pool1 rows              (16 per image: 14 valid + 2 junk)
    m2 = r2 - (K - 1)            # tall conv2 output rows actually computed
    r3 = r2 // 2                 # pool2 rows              (8 per image: 5 valid + 3 junk)

    def conv_widthpool(get_rows, get_tap_w, bias, m, dst_ref):
        # "Tall" width-Toeplitz conv: one 256-lane bf16 GEMM per tap (even|odd parities
        # merged along lanes), then fused bias + ReLU + width-direction 2x2 max-pool as a
        # vreg-aligned lane-half max.  Junk tail rows are zeroed so later strided reads
        # never touch uninitialized VMEM.
        acc = None
        for di in range(K):
            t = jnp.dot(get_rows(di, m).astype(bf16), get_tap_w(di),
                        preferred_element_type=f32)
            acc = t if acc is None else acc + t
        pooled_w = jnp.maximum(acc[:, :LANES], acc[:, LANES:])
        dst_ref[pl.ds(0, m), :] = jnp.maximum(pooled_w + bias, 0.0)
        dst_ref[pl.ds(m, K - 1), :] = jnp.zeros((K - 1, LANES), f32)

    def pool_height(src_ref, n_out, dst_ref):
        # 2x2 max-pool along height via stride-2 sublane reads.
        dst_ref[...] = jnp.maximum(src_ref[pl.ds(0, n_out, 2), :],
                                   src_ref[pl.ds(1, n_out, 2), :])

    # conv1(3->6, 5x5) + bias + relu + width-pool -> s1 (28 valid rows / image)
    conv_widthpool(lambda di, m: x_ref[0, pl.ds(di, m), :],
                   lambda di: t1_ref[0, di], cb1_ref[0], m1, s1_ref)
    pool_height(s1_ref, r2, p1_ref)                              # pool1 -> (tb*16, 128)

    # conv2(6->16, 5x5) + bias + relu + width-pool -> s2 (10 valid rows / image)
    conv_widthpool(lambda di, m: p1_ref[pl.ds(di, m), :],
                   lambda di: t2_ref[0, di], cb2_ref[0], m2, s2_ref)
    pool_height(s2_ref, r3, p2_ref)                              # pool2 -> (tb*8, 128)

    # fc1: PyTorch's NCHW flatten is folded into the host-permuted per-row weight blocks;
    # a stride-8 read picks row `ph` of every image, so each tap is a (TB,128)@(128,128) dot.
    h = None
    for ph in range(P2H):
        rows = p2_ref[pl.ds(ph, tb, 8), :].astype(bf16)
        t = jnp.dot(rows, w1_ref[0, ph], preferred_element_type=f32)
        h = t if h is None else h + t
    h = jnp.maximum(h + fb1_ref[0], 0.0)                         # (tb, 128) [120 valid]

    # fc2 + relu, fc3 (all weights pre-transposed and zero-padded to 128 lanes on the host)
    h = jnp.maximum(jnp.dot(h.astype(bf16), w2_ref[0], preferred_element_type=f32)
                    + fb2_ref[0], 0.0)                           # (tb, 128) [84 valid]
    logits = jnp.dot(h.astype(bf16), w3_ref[0], preferred_element_type=f32) + fb3_ref[0]
    o_ref[0] = logits.astype(o_ref.dtype)                        # (tb, 128) [nc valid]


# --------------------------- host-side parameter re-layout ---------------------------

def _merged_width_toeplitz(w_oihw, k_rows, pooled_w):
    """(Cout,Cin,K,K) conv weight -> (K, k_rows, 256) merged even|odd width-Toeplitz.

    For parity in {0,1} (lane half) and pooled width index p:
      conv[oh, 2*p+parity, co] == sum_di (slab[oh+di, :] @ T[di])[parity*128 + p*Cout + co]
    where slab[h, w*Cin + ci] is the lane-dense activation layout.  Unused rows/cols are 0.
    """
    cout, cin, kh, kw = w_oihw.shape
    T = np.zeros((kh, k_rows, 2 * LANES), np.float32)
    for parity in range(2):
        base = parity * LANES
        for di in range(kh):
            for p in range(pooled_w):
                ow = 2 * p + parity
                for dj in range(kw):
                    col = ow + dj
                    T[di, col * cin:(col + 1) * cin,
                      base + p * cout: base + (p + 1) * cout] = w_oihw[:, :, di, dj].T
    return T


def _lane_pad(v):
    out = np.zeros((1, LANES), np.float32)
    out[0, :v.shape[0]] = np.asarray(v, np.float32)
    return out


def prepare_lenet_params(p, num_classes):
    """One-time host-side re-layout of PyTorch-style LeNet params into kernel operands."""
    assert num_classes <= LANES
    w1 = np.asarray(p["conv1_w"], np.float32)      # (6, 3, 5, 5)
    b1 = np.asarray(p["conv1_b"], np.float32)
    w2 = np.asarray(p["conv2_w"], np.float32)      # (16, 6, 5, 5)
    b2 = np.asarray(p["conv2_b"], np.float32)
    fc1_w = np.asarray(p["fc1_w"], np.float32)     # (120, 400)
    fc1_b = np.asarray(p["fc1_b"], np.float32)
    fc2_w = np.asarray(p["fc2_w"], np.float32)     # (84, 120)
    fc2_b = np.asarray(p["fc2_b"], np.float32)
    fc3_w = np.asarray(p["fc3_w"], np.float32)     # (NC, 84)
    fc3_b = np.asarray(p["fc3_b"], np.float32)

    # fc1 consumes PyTorch's NCHW flatten (c*25 + ph*5 + pw); fold that permutation into
    # per-height-row, zero-padded (128, 128) blocks matching the kernel's (pw*16 + c) lanes.
    w1r = fc1_w.reshape(F1, C2, P2H, P2W).transpose(2, 3, 1, 0)    # (ph, pw, c, f)
    w1blk = np.zeros((P2H, LANES, LANES), np.float32)
    w1blk[:, :P2W * C2, :F1] = w1r.reshape(P2H, P2W * C2, F1)

    w2p = np.zeros((LANES, LANES), np.float32)
    w2p[:F1, :F2] = fc2_w.T
    w3p = np.zeros((LANES, LANES), np.float32)
    w3p[:F2, :num_classes] = fc3_w.T

    return {
        "t1": _merged_width_toeplitz(w1, W0 * C0, P1W),    # (5, 96, 256)
        "cb1": _lane_pad(np.tile(b1, P1W)),                # (1, 128) [84 valid]
        "t2": _merged_width_toeplitz(w2, LANES, P2W),      # (5, 128, 256)
        "cb2": _lane_pad(np.tile(b2, P2W)),                # (1, 128) [80 valid]
        "w1": w1blk,                                       # (5, 128, 128)
        "fb1": _lane_pad(fc1_b),                           # (1, 128)
        "w2": w2p,                                         # (128, 128)
        "fb2": _lane_pad(fc2_b),
        "w3": w3p,                                         # (128, 128)
        "fb3": _lane_pad(fc3_b),
    }


_BF16_KEYS = ("t1", "t2", "w1", "w2", "w3")   # MXU operands -> bf16; biases stay f32


def stack_model_params(prep1, prep2):
    """Stack model1/model2 operands along a leading axis of size 2 (the model grid axis)."""
    out = {}
    for k in prep1:
        dt = jnp.bfloat16 if k in _BF16_KEYS else jnp.float32
        out[k] = jnp.asarray(np.stack([prep1[k], prep2[k]], axis=0), dtype=dt)
    return out


# --------------------------------- forward wrapper ---------------------------------

def doublenet_forward(tensor_s, tensor_p, stacked, num_classes,
                      image_resize=(32, 32), batch_tile=32):
    rh, rw = image_resize
    assert (rh, rw) == (H0, W0), "kernel geometry assumes 32x32 LeNet inputs"
    s = tensor_s.reshape(-1, 3, rh, rw)
    q = tensor_p.reshape(-1, 3, rh, rw)
    B = s.shape[0]

    tb = int(min(batch_tile, B))
    if B > tb and tb % 8:          # multi-block case: keep (8,128) store alignment
        tb = max(8, (tb // 8) * 8)
    nblk = int(pl.cdiv(B, tb))
    bp = nblk * tb

    def to_slab(x):
        # NCHW -> lane-dense (B, H, W*C) slab (single fused host pass); zero-pad batch tail.
        x = jnp.transpose(x, (0, 2, 3, 1)).reshape(B, rh, rw * 3).astype(jnp.float32)
        if bp > B:
            x = jnp.concatenate([x, jnp.zeros((bp - B, rh, rw * 3), jnp.float32)], axis=0)
        return x

    # (2, bp*32, 96): each grid step sees one contiguous "tall" (tb*32, 96) slab.
    x_all = jnp.stack([to_slab(s), to_slab(q)], axis=0).reshape(2, bp * rh, rw * 3)

    order = ["t1", "cb1", "t2", "cb2", "w1", "fb1", "w2", "fb2", "w3", "fb3"]
    w_specs = {
        "t1":  pl.BlockSpec((1, K, W0 * C0, 2 * LANES), lambda m, b: (m, 0, 0, 0)),
        "cb1": pl.BlockSpec((1, 1, LANES),              lambda m, b: (m, 0, 0)),
        "t2":  pl.BlockSpec((1, K, LANES, 2 * LANES),   lambda m, b: (m, 0, 0, 0)),
        "cb2": pl.BlockSpec((1, 1, LANES),              lambda m, b: (m, 0, 0)),
        "w1":  pl.BlockSpec((1, P2H, LANES, LANES),     lambda m, b: (m, 0, 0, 0)),
        "fb1": pl.BlockSpec((1, 1, LANES),              lambda m, b: (m, 0, 0)),
        "w2":  pl.BlockSpec((1, LANES, LANES),          lambda m, b: (m, 0, 0)),
        "fb2": pl.BlockSpec((1, 1, LANES),              lambda m, b: (m, 0, 0)),
        "w3":  pl.BlockSpec((1, LANES, LANES),          lambda m, b: (m, 0, 0)),
        "fb3": pl.BlockSpec((1, 1, LANES),              lambda m, b: (m, 0, 0)),
    }

    out = pl.pallas_call(
        functools.partial(_lenet_kernel, tb=tb),
        out_shape=jax.ShapeDtypeStruct((2, bp, LANES), jnp.float32),
        grid=(2, nblk),
        in_specs=[pl.BlockSpec((1, tb * H0, W0 * C0), lambda m, b: (m, b, 0))]
                 + [w_specs[k] for k in order],
        out_specs=pl.BlockSpec((1, tb, LANES), lambda m, b: (m, b, 0)),
        scratch_shapes=[
            pltpu.VMEM((tb * H0, LANES), jnp.float32),        # conv1 width-pooled (tall)
            pltpu.VMEM((tb * (H0 // 2), LANES), jnp.float32),  # pool1
            pltpu.VMEM((tb * (H0 // 2), LANES), jnp.float32),  # conv2 width-pooled (tall)
            pltpu.VMEM((tb * (H0 // 4), LANES), jnp.float32),  # pool2
        ],
        compiler_params=pltpu.CompilerParams(
            dimension_semantics=("parallel", "arbitrary")),
    )(x_all, *[stacked[k] for k in order])

    sub_probs = out[0, :B, :num_classes]     # model1 logits
    pare_probs = out[1, :B, :num_classes]    # model2 logits
    return sub_probs, pare_probs             # cross_entropy path


# ------------------------------- deterministic init --------------------------------

def init_lenet_params(key, num_classes=10):
    keys = jax.random.split(key, 10)

    def u(k, shape, fan_in):
        bound = 1.0 / float(fan_in) ** 0.5
        return jax.random.uniform(k, shape, jnp.float32, -bound, bound)

    return {
        "conv1_w": u(keys[0], (6, 3, 5, 5), 3 * 5 * 5),
        "conv1_b": u(keys[1], (6,), 3 * 5 * 5),
        "conv2_w": u(keys[2], (16, 6, 5, 5), 6 * 5 * 5),
        "conv2_b": u(keys[3], (16,), 6 * 5 * 5),
        "fc1_w":   u(keys[4], (120, 16 * 5 * 5), 16 * 5 * 5),
        "fc1_b":   u(keys[5], (120,), 16 * 5 * 5),
        "fc2_w":   u(keys[6], (84, 120), 120),
        "fc2_b":   u(keys[7], (84,), 120),
        "fc3_w":   u(keys[8], (num_classes, 84), 84),
        "fc3_b":   u(keys[9], (num_classes,), 84),
    }


# ----------------------------------------- main -------------------------------------

if __name__ == "__main__":
    B, C, H, W = 2, 3, 32, 32
    num_classes = 10

    key = jax.random.PRNGKey(0)
    k_s, k_p, k_m1, k_m2 = jax.random.split(key, 4)

    tensor_s = jax.random.normal(k_s, (B, C, H, W), dtype=jnp.float32)
    tensor_p = jax.random.normal(k_p, (B, C, H, W), dtype=jnp.float32)

    params1 = init_lenet_params(k_m1, num_classes)   # model1
    params2 = init_lenet_params(k_m2, num_classes)   # model2

    stacked = stack_model_params(prepare_lenet_params(params1, num_classes),
                                 prepare_lenet_params(params2, num_classes))

    fwd = jax.jit(functools.partial(doublenet_forward,
                                    stacked=stacked, num_classes=num_classes))
    sub_probs, pare_probs = fwd(tensor_s, tensor_p)
    jax.block_until_ready((sub_probs, pare_probs))

    assert sub_probs.shape == (B, num_classes)
    assert pare_probs.shape == (B, num_classes)
    print("KERNEL_OK")
</pallas_src>

<mosaic_0001>
module attributes {stable_mosaic.version = 11 : i64} {
  func.func @_lenet_kernel(%arg0: i32, %arg1: i32, %arg2: memref<1x64x96xf32, #tpu.memory_space<vmem>>, %arg3: memref<1x5x96x256xbf16, #tpu.memory_space<vmem>>, %arg4: memref<1x1x128xf32, #tpu.memory_space<vmem>>, %arg5: memref<1x5x128x256xbf16, #tpu.memory_space<vmem>>, %arg6: memref<1x1x128xf32, #tpu.memory_space<vmem>>, %arg7: memref<1x5x128x128xbf16, #tpu.memory_space<vmem>>, %arg8: memref<1x1x128xf32, #tpu.memory_space<vmem>>, %arg9: memref<1x128x128xbf16, #tpu.memory_space<vmem>>, %arg10: memref<1x1x128xf32, #tpu.memory_space<vmem>>, %arg11: memref<1x128x128xbf16, #tpu.memory_space<vmem>>, %arg12: memref<1x1x128xf32, #tpu.memory_space<vmem>>, %arg13: memref<1x2x128xf32, #tpu.memory_space<vmem>>, %arg14: memref<64x128xf32, #tpu.memory_space<vmem>>, %arg15: memref<32x128xf32, #tpu.memory_space<vmem>>, %arg16: memref<32x128xf32, #tpu.memory_space<vmem>>, %arg17: memref<16x128xf32, #tpu.memory_space<vmem>>) attributes {dimension_semantics = [#tpu.dimension_semantics<parallel>, #tpu.dimension_semantics<arbitrary>], iteration_bounds = array<i64: 2, 1>, scalar_prefetch = 0 : i64, scratch_operands = 4 : i64, tpu.core_type = #tpu.core_type<tc>, window_params = [{transform_indices = @transform_0, window_bounds = array<i64: 1, 64, 96>}, {transform_indices = @transform_1, window_bounds = array<i64: 1, 5, 96, 256>}, {transform_indices = @transform_2, window_bounds = array<i64: 1, 1, 128>}, {transform_indices = @transform_3, window_bounds = array<i64: 1, 5, 128, 256>}, {transform_indices = @transform_4, window_bounds = array<i64: 1, 1, 128>}, {transform_indices = @transform_5, window_bounds = array<i64: 1, 5, 128, 128>}, {transform_indices = @transform_6, window_bounds = array<i64: 1, 1, 128>}, {transform_indices = @transform_7, window_bounds = array<i64: 1, 128, 128>}, {transform_indices = @transform_8, window_bounds = array<i64: 1, 1, 128>}, {transform_indices = @transform_9, window_bounds = array<i64: 1, 128, 128>}, {transform_indices = @transform_10, window_bounds = array<i64: 1, 1, 128>}, {transform_indices = @transform_11, window_bounds = array<i64: 1, 2, 128>}]} {
    %c0 = arith.constant 0 : index
    %c0_0 = arith.constant 0 : index
    %c0_1 = arith.constant 0 : index
    %0 = vector.load %arg4[%c0, %c0_0, %c0_1] : memref<1x1x128xf32, #tpu.memory_space<vmem>>, vector<1x1x128xf32>
    %1 = vector.shape_cast %0 : vector<1x1x128xf32> to vector<1x128xf32>
    %c0_2 = arith.constant 0 : index
    %c0_3 = arith.constant 0 : index
    %c0_4 = arith.constant 0 : index
    %2 = vector.load %arg2[%c0_2, %c0_3, %c0_4] : memref<1x64x96xf32, #tpu.memory_space<vmem>>, vector<1x60x96xf32>
    %3 = vector.shape_cast %2 : vector<1x60x96xf32> to vector<60x96xf32>
    %4 = arith.truncf %3 : vector<60x96xf32> to vector<60x96xbf16>
    %c0_5 = arith.constant 0 : index
    %c0_6 = arith.constant 0 : index
    %c0_7 = arith.constant 0 : index
    %c0_8 = arith.constant 0 : index
    %5 = vector.load %arg3[%c0_5, %c0_6, %c0_7, %c0_8] : memref<1x5x96x256xbf16, #tpu.memory_space<vmem>>, vector<1x1x96x256xbf16>
    %6 = vector.shape_cast %5 : vector<1x1x96x256xbf16> to vector<96x256xbf16>
    %cst = arith.constant dense<0.000000e+00> : vector<60x256xf32>
    %7 = tpu.matmul %4, %6, %cst {dimension_numbers = #tpu.dot_dimension_numbers<[1], [0], [0], [1], [0, 0, 1, 1], [], []>} : vector<60x96xbf16>, vector<96x256xbf16>, vector<60x256xf32> -> vector<60x256xf32>
    %c0_9 = arith.constant 0 : index
    %c1 = arith.constant 1 : index
    %c0_10 = arith.constant 0 : index
    %8 = vector.load %arg2[%c0_9, %c1, %c0_10] : memref<1x64x96xf32, #tpu.memory_space<vmem>>, vector<1x60x96xf32>
    %9 = vector.shape_cast %8 : vector<1x60x96xf32> to vector<60x96xf32>
    %10 = arith.truncf %9 : vector<60x96xf32> to vector<60x96xbf16>
    %c0_11 = arith.constant 0 : index
    %c1_12 = arith.constant 1 : index
    %c0_13 = arith.constant 0 : index
    %c0_14 = arith.constant 0 : index
    %11 = vector.load %arg3[%c0_11, %c1_12, %c0_13, %c0_14] : memref<1x5x96x256xbf16, #tpu.memory_space<vmem>>, vector<1x1x96x256xbf16>
    %12 = vector.shape_cast %11 : vector<1x1x96x256xbf16> to vector<96x256xbf16>
    %cst_15 = arith.constant dense<0.000000e+00> : vector<60x256xf32>
    %13 = tpu.matmul %10, %12, %cst_15 {dimension_numbers = #tpu.dot_dimension_numbers<[1], [0], [0], [1], [0, 0, 1, 1], [], []>} : vector<60x96xbf16>, vector<96x256xbf16>, vector<60x256xf32> -> vector<60x256xf32>
    %14 = arith.addf %7, %13 : vector<60x256xf32>
    %c0_16 = arith.constant 0 : index
    %c2 = arith.constant 2 : index
    %c0_17 = arith.constant 0 : index
    %15 = vector.load %arg2[%c0_16, %c2, %c0_17] : memref<1x64x96xf32, #tpu.memory_space<vmem>>, vector<1x60x96xf32>
    %16 = vector.shape_cast %15 : vector<1x60x96xf32> to vector<60x96xf32>
    %17 = arith.truncf %16 : vector<60x96xf32> to vector<60x96xbf16>
    %c0_18 = arith.constant 0 : index
    %c2_19 = arith.constant 2 : index
    %c0_20 = arith.constant 0 : index
    %c0_21 = arith.constant 0 : index
    %18 = vector.load %arg3[%c0_18, %c2_19, %c0_20, %c0_21] : memref<1x5x96x256xbf16, #tpu.memory_space<vmem>>, vector<1x1x96x256xbf16>
    %19 = vector.shape_cast %18 : vector<1x1x96x256xbf16> to vector<96x256xbf16>
    %cst_22 = arith.constant dense<0.000000e+00> : vector<60x256xf32>
    %20 = tpu.matmul %17, %19, %cst_22 {dimension_numbers = #tpu.dot_dimension_numbers<[1], [0], [0], [1], [0, 0, 1, 1], [], []>} : vector<60x96xbf16>, vector<96x256xbf16>, vector<60x256xf32> -> vector<60x256xf32>
    %21 = arith.addf %14, %20 : vector<60x256xf32>
    %c0_23 = arith.constant 0 : index
    %c3 = arith.constant 3 : index
    %c0_24 = arith.constant 0 : index
    %22 = vector.load %arg2[%c0_23, %c3, %c0_24] : memref<1x64x96xf32, #tpu.memory_space<vmem>>, vector<1x60x96xf32>
    %23 = vector.shape_cast %22 : vector<1x60x96xf32> to vector<60x96xf32>
    %24 = arith.truncf %23 : vector<60x96xf32> to vector<60x96xbf16>
    %c0_25 = arith.constant 0 : index
    %c3_26 = arith.constant 3 : index
    %c0_27 = arith.constant 0 : index
    %c0_28 = arith.constant 0 : index
    %25 = vector.load %arg3[%c0_25, %c3_26, %c0_27, %c0_28] : memref<1x5x96x256xbf16, #tpu.memory_space<vmem>>, vector<1x1x96x256xbf16>
    %26 = vector.shape_cast %25 : vector<1x1x96x256xbf16> to vector<96x256xbf16>
    %cst_29 = arith.constant dense<0.000000e+00> : vector<60x256xf32>
    %27 = tpu.matmul %24, %26, %cst_29 {dimension_numbers = #tpu.dot_dimension_numbers<[1], [0], [0], [1], [0, 0, 1, 1], [], []>} : vector<60x96xbf16>, vector<96x256xbf16>, vector<60x256xf32> -> vector<60x256xf32>
    %28 = arith.addf %21, %27 : vector<60x256xf32>
    %c0_30 = arith.constant 0 : index
    %c4 = arith.constant 4 : index
    %c0_31 = arith.constant 0 : index
    %29 = vector.load %arg2[%c0_30, %c4, %c0_31] : memref<1x64x96xf32, #tpu.memory_space<vmem>>, vector<1x60x96xf32>
    %30 = vector.shape_cast %29 : vector<1x60x96xf32> to vector<60x96xf32>
    %31 = arith.truncf %30 : vector<60x96xf32> to vector<60x96xbf16>
    %c0_32 = arith.constant 0 : index
    %c4_33 = arith.constant 4 : index
    %c0_34 = arith.constant 0 : index
    %c0_35 = arith.constant 0 : index
    %32 = vector.load %arg3[%c0_32, %c4_33, %c0_34, %c0_35] : memref<1x5x96x256xbf16, #tpu.memory_space<vmem>>, vector<1x1x96x256xbf16>
    %33 = vector.shape_cast %32 : vector<1x1x96x256xbf16> to vector<96x256xbf16>
    %cst_36 = arith.constant dense<0.000000e+00> : vector<60x256xf32>
    %34 = tpu.matmul %31, %33, %cst_36 {dimension_numbers = #tpu.dot_dimension_numbers<[1], [0], [0], [1], [0, 0, 1, 1], [], []>} : vector<60x96xbf16>, vector<96x256xbf16>, vector<60x256xf32> -> vector<60x256xf32>
    %35 = arith.addf %28, %34 : vector<60x256xf32>
    %36 = vector.extract_strided_slice %35 {offsets = [0, 0], sizes = [60, 128], strides = [1, 1]} : vector<60x256xf32> to vector<60x128xf32>
    %37 = vector.extract_strided_slice %35 {offsets = [0, 128], sizes = [60, 128], strides = [1, 1]} : vector<60x256xf32> to vector<60x128xf32>
    %38 = arith.maximumf %36, %37 : vector<60x128xf32>
    %39 = vector.broadcast %1 : vector<1x128xf32> to vector<60x128xf32>
    %40 = arith.addf %38, %39 : vector<60x128xf32>
    %cst_37 = arith.constant 0.000000e+00 : f32
    %41 = vector.broadcast %cst_37 : f32 to vector<60x128xf32>
    %42 = arith.maximumf %40, %41 : vector<60x128xf32>
    %c0_38 = arith.constant 0 : index
    %c0_39 = arith.constant 0 : index
    %43 = vector.load %arg14[%c0_38, %c0_39] : memref<64x128xf32, #tpu.memory_space<vmem>>, vector<60x128xf32>
    tpu.vector_store %arg14[%c0_38, %c0_39], %42 {strides = array<i32>} : memref<64x128xf32, #tpu.memory_space<vmem>>, vector<60x128xf32>,
    %cst_40 = arith.constant 0.000000e+00 : f32
    %44 = vector.broadcast %cst_40 : f32 to vector<4x128xf32>
    %c60 = arith.constant 60 : index
    %c0_41 = arith.constant 0 : index
    %45 = vector.load %arg14[%c60, %c0_41] : memref<64x128xf32, #tpu.memory_space<vmem>>, vector<4x128xf32>
    tpu.vector_store %arg14[%c60, %c0_41], %44 {strides = array<i32>} : memref<64x128xf32, #tpu.memory_space<vmem>>, vector<4x128xf32>,
    %c0_42 = arith.constant 0 : index
    %c0_43 = arith.constant 0 : index
    %46 = tpu.strided_load %arg14[%c0_42, %c0_43] {strides = array<i32: 2, 1>} : memref<64x128xf32, #tpu.memory_space<vmem>>, vector<32x128xf32>
    %c1_44 = arith.constant 1 : index
    %c0_45 = arith.constant 0 : index
    %47 = tpu.strided_load %arg14[%c1_44, %c0_45] {strides = array<i32: 2, 1>} : memref<64x128xf32, #tpu.memory_space<vmem>>, vector<32x128xf32>
    %48 = arith.maximumf %46, %47 : vector<32x128xf32>
    %c0_46 = arith.constant 0 : index
    %c0_47 = arith.constant 0 : index
    %49 = vector.load %arg15[%c0_46, %c0_47] : memref<32x128xf32, #tpu.memory_space<vmem>>, vector<32x128xf32>
    tpu.vector_store %arg15[%c0_46, %c0_47], %48 {strides = array<i32>} : memref<32x128xf32, #tpu.memory_space<vmem>>, vector<32x128xf32>,
    %c0_48 = arith.constant 0 : index
    %c0_49 = arith.constant 0 : index
    %c0_50 = arith.constant 0 : index
    %50 = vector.load %arg6[%c0_48, %c0_49, %c0_50] : memref<1x1x128xf32, #tpu.memory_space<vmem>>, vector<1x1x128xf32>
    %51 = vector.shape_cast %50 : vector<1x1x128xf32> to vector<1x128xf32>
    %c0_51 = arith.constant 0 : index
    %c0_52 = arith.constant 0 : index
    %52 = vector.load %arg15[%c0_51, %c0_52] : memref<32x128xf32, #tpu.memory_space<vmem>>, vector<28x128xf32>
    %53 = arith.truncf %52 : vector<28x128xf32> to vector<28x128xbf16>
    %c0_53 = arith.constant 0 : index
    %c0_54 = arith.constant 0 : index
    %c0_55 = arith.constant 0 : index
    %c0_56 = arith.constant 0 : index
    %54 = vector.load %arg5[%c0_53, %c0_54, %c0_55, %c0_56] : memref<1x5x128x256xbf16, #tpu.memory_space<vmem>>, vector<1x1x128x256xbf16>
    %55 = vector.shape_cast %54 : vector<1x1x128x256xbf16> to vector<128x256xbf16>
    %cst_57 = arith.constant dense<0.000000e+00> : vector<28x256xf32>
    %56 = tpu.matmul %53, %55, %cst_57 {dimension_numbers = #tpu.dot_dimension_numbers<[1], [0], [0], [1], [0, 0, 1, 1], [], []>} : vector<28x128xbf16>, vector<128x256xbf16>, vector<28x256xf32> -> vector<28x256xf32>
    %c1_58 = arith.constant 1 : index
    %c0_59 = arith.constant 0 : index
    %57 = vector.load %arg15[%c1_58, %c0_59] : memref<32x128xf32, #tpu.memory_space<vmem>>, vector<28x128xf32>
    %58 = arith.truncf %57 : vector<28x128xf32> to vector<28x128xbf16>
    %c0_60 = arith.constant 0 : index
    %c1_61 = arith.constant 1 : index
    %c0_62 = arith.constant 0 : index
    %c0_63 = arith.constant 0 : index
    %59 = vector.load %arg5[%c0_60, %c1_61, %c0_62, %c0_63] : memref<1x5x128x256xbf16, #tpu.memory_space<vmem>>, vector<1x1x128x256xbf16>
    %60 = vector.shape_cast %59 : vector<1x1x128x256xbf16> to vector<128x256xbf16>
    %cst_64 = arith.constant dense<0.000000e+00> : vector<28x256xf32>
    %61 = tpu.matmul %58, %60, %cst_64 {dimension_numbers = #tpu.dot_dimension_numbers<[1], [0], [0], [1], [0, 0, 1, 1], [], []>} : vector<28x128xbf16>, vector<128x256xbf16>, vector<28x256xf32> -> vector<28x256xf32>
    %62 = arith.addf %56, %61 : vector<28x256xf32>
    %c2_65 = arith.constant 2 : index
    %c0_66 = arith.constant 0 : index
    %63 = vector.load %arg15[%c2_65, %c0_66] : memref<32x128xf32, #tpu.memory_space<vmem>>, vector<28x128xf32>
    %64 = arith.truncf %63 : vector<28x128xf32> to vector<28x128xbf16>
    %c0_67 = arith.constant 0 : index
    %c2_68 = arith.constant 2 : index
    %c0_69 = arith.constant 0 : index
    %c0_70 = arith.constant 0 : index
    %65 = vector.load %arg5[%c0_67, %c2_68, %c0_69, %c0_70] : memref<1x5x128x256xbf16, #tpu.memory_space<vmem>>, vector<1x1x128x256xbf16>
    %66 = vector.shape_cast %65 : vector<1x1x128x256xbf16> to vector<128x256xbf16>
    %cst_71 = arith.constant dense<0.000000e+00> : vector<28x256xf32>
    %67 = tpu.matmul %64, %66, %cst_71 {dimension_numbers = #tpu.dot_dimension_numbers<[1], [0], [0], [1], [0, 0, 1, 1], [], []>} : vector<28x128xbf16>, vector<128x256xbf16>, vector<28x256xf32> -> vector<28x256xf32>
    %68 = arith.addf %62, %67 : vector<28x256xf32>
    %c3_72 = arith.constant 3 : index
    %c0_73 = arith.constant 0 : index
    %69 = vector.load %arg15[%c3_72, %c0_73] : memref<32x128xf32, #tpu.memory_space<vmem>>, vector<28x128xf32>
    %70 = arith.truncf %69 : vector<28x128xf32> to vector<28x128xbf16>
    %c0_74 = arith.constant 0 : index
    %c3_75 = arith.constant 3 : index
    %c0_76 = arith.constant 0 : index
    %c0_77 = arith.constant 0 : index
    %71 = vector.load %arg5[%c0_74, %c3_75, %c0_76, %c0_77] : memref<1x5x128x256xbf16, #tpu.memory_space<vmem>>, vector<1x1x128x256xbf16>
    %72 = vector.shape_cast %71 : vector<1x1x128x256xbf16> to vector<128x256xbf16>
    %cst_78 = arith.constant dense<0.000000e+00> : vector<28x256xf32>
    %73 = tpu.matmul %70, %72, %cst_78 {dimension_numbers = #tpu.dot_dimension_numbers<[1], [0], [0], [1], [0, 0, 1, 1], [], []>} : vector<28x128xbf16>, vector<128x256xbf16>, vector<28x256xf32> -> vector<28x256xf32>
    %74 = arith.addf %68, %73 : vector<28x256xf32>
    %c4_79 = arith.constant 4 : index
    %c0_80 = arith.constant 0 : index
    %75 = vector.load %arg15[%c4_79, %c0_80] : memref<32x128xf32, #tpu.memory_space<vmem>>, vector<28x128xf32>
    %76 = arith.truncf %75 : vector<28x128xf32> to vector<28x128xbf16>
    %c0_81 = arith.constant 0 : index
    %c4_82 = arith.constant 4 : index
    %c0_83 = arith.constant 0 : index
    %c0_84 = arith.constant 0 : index
    %77 = vector.load %arg5[%c0_81, %c4_82, %c0_83, %c0_84] : memref<1x5x128x256xbf16, #tpu.memory_space<vmem>>, vector<1x1x128x256xbf16>
    %78 = vector.shape_cast %77 : vector<1x1x128x256xbf16> to vector<128x256xbf16>
    %cst_85 = arith.constant dense<0.000000e+00> : vector<28x256xf32>
    %79 = tpu.matmul %76, %78, %cst_85 {dimension_numbers = #tpu.dot_dimension_numbers<[1], [0], [0], [1], [0, 0, 1, 1], [], []>} : vector<28x128xbf16>, vector<128x256xbf16>, vector<28x256xf32> -> vector<28x256xf32>
    %80 = arith.addf %74, %79 : vector<28x256xf32>
    %81 = vector.extract_strided_slice %80 {offsets = [0, 0], sizes = [28, 128], strides = [1, 1]} : vector<28x256xf32> to vector<28x128xf32>
    %82 = vector.extract_strided_slice %80 {offsets = [0, 128], sizes = [28, 128], strides = [1, 1]} : vector<28x256xf32> to vector<28x128xf32>
    %83 = arith.maximumf %81, %82 : vector<28x128xf32>
    %84 = vector.broadcast %51 : vector<1x128xf32> to vector<28x128xf32>
    %85 = arith.addf %83, %84 : vector<28x128xf32>
    %cst_86 = arith.constant 0.000000e+00 : f32
    %86 = vector.broadcast %cst_86 : f32 to vector<28x128xf32>
    %87 = arith.maximumf %85, %86 : vector<28x128xf32>
    %c0_87 = arith.constant 0 : index
    %c0_88 = arith.constant 0 : index
    %88 = vector.load %arg16[%c0_87, %c0_88] : memref<32x128xf32, #tpu.memory_space<vmem>>, vector<28x128xf32>
    tpu.vector_store %arg16[%c0_87, %c0_88], %87 {strides = array<i32>} : memref<32x128xf32, #tpu.memory_space<vmem>>, vector<28x128xf32>,
    %cst_89 = arith.constant 0.000000e+00 : f32
    %89 = vector.broadcast %cst_89 : f32 to vector<4x128xf32>
    %c28 = arith.constant 28 : index
    %c0_90 = arith.constant 0 : index
    %90 = vector.load %arg16[%c28, %c0_90] : memref<32x128xf32, #tpu.memory_space<vmem>>, vector<4x128xf32>
    tpu.vector_store %arg16[%c28, %c0_90], %89 {strides = array<i32>} : memref<32x128xf32, #tpu.memory_space<vmem>>, vector<4x128xf32>,
    %c0_91 = arith.constant 0 : index
    %c0_92 = arith.constant 0 : index
    %91 = tpu.strided_load %arg16[%c0_91, %c0_92] {strides = array<i32: 2, 1>} : memref<32x128xf32, #tpu.memory_space<vmem>>, vector<16x128xf32>
    %c1_93 = arith.constant 1 : index
    %c0_94 = arith.constant 0 : index
    %92 = tpu.strided_load %arg16[%c1_93, %c0_94] {strides = array<i32: 2, 1>} : memref<32x128xf32, #tpu.memory_space<vmem>>, vector<16x128xf32>
    %93 = arith.maximumf %91, %92 : vector<16x128xf32>
    %c0_95 = arith.constant 0 : index
    %c0_96 = arith.constant 0 : index
    %94 = vector.load %arg17[%c0_95, %c0_96] : memref<16x128xf32, #tpu.memory_space<vmem>>, vector<16x128xf32>
    tpu.vector_store %arg17[%c0_95, %c0_96], %93 {strides = array<i32>} : memref<16x128xf32, #tpu.memory_space<vmem>>, vector<16x128xf32>,
    %c0_97 = arith.constant 0 : index
    %c0_98 = arith.constant 0 : index
    %95 = tpu.strided_load %arg17[%c0_97, %c0_98] {strides = array<i32: 8, 1>} : memref<16x128xf32, #tpu.memory_space<vmem>>, vector<2x128xf32>
    %96 = arith.truncf %95 : vector<2x128xf32> to vector<2x128xbf16>
    %c0_99 = arith.constant 0 : index
    %c0_100 = arith.constant 0 : index
    %c0_101 = arith.constant 0 : index
    %c0_102 = arith.constant 0 : index
    %97 = vector.load %arg7[%c0_99, %c0_100, %c0_101, %c0_102] : memref<1x5x128x128xbf16, #tpu.memory_space<vmem>>, vector<1x1x128x128xbf16>
    %98 = vector.shape_cast %97 : vector<1x1x128x128xbf16> to vector<128x128xbf16>
    %cst_103 = arith.constant dense<0.000000e+00> : vector<2x128xf32>
    %99 = tpu.matmul %96, %98, %cst_103 {dimension_numbers = #tpu.dot_dimension_numbers<[1], [0], [0], [1], [0, 0, 1, 1], [], []>} : vector<2x128xbf16>, vector<128x128xbf16>, vector<2x128xf32> -> vector<2x128xf32>
    %c1_104 = arith.constant 1 : index
    %c0_105 = arith.constant 0 : index
    %100 = tpu.strided_load %arg17[%c1_104, %c0_105] {strides = array<i32: 8, 1>} : memref<16x128xf32, #tpu.memory_space<vmem>>, vector<2x128xf32>
    %101 = arith.truncf %100 : vector<2x128xf32> to vector<2x128xbf16>
    %c0_106 = arith.constant 0 : index
    %c1_107 = arith.constant 1 : index
    %c0_108 = arith.constant 0 : index
    %c0_109 = arith.constant 0 : index
    %102 = vector.load %arg7[%c0_106, %c1_107, %c0_108, %c0_109] : memref<1x5x128x128xbf16, #tpu.memory_space<vmem>>, vector<1x1x128x128xbf16>
    %103 = vector.shape_cast %102 : vector<1x1x128x128xbf16> to vector<128x128xbf16>
    %cst_110 = arith.constant dense<0.000000e+00> : vector<2x128xf32>
    %104 = tpu.matmul %101, %103, %cst_110 {dimension_numbers = #tpu.dot_dimension_numbers<[1], [0], [0], [1], [0, 0, 1, 1], [], []>} : vector<2x128xbf16>, vector<128x128xbf16>, vector<2x128xf32> -> vector<2x128xf32>
    %105 = arith.addf %99, %104 : vector<2x128xf32>
    %c2_111 = arith.constant 2 : index
    %c0_112 = arith.constant 0 : index
    %106 = tpu.strided_load %arg17[%c2_111, %c0_112] {strides = array<i32: 8, 1>} : memref<16x128xf32, #tpu.memory_space<vmem>>, vector<2x128xf32>
    %107 = arith.truncf %106 : vector<2x128xf32> to vector<2x128xbf16>
    %c0_113 = arith.constant 0 : index
    %c2_114 = arith.constant 2 : index
    %c0_115 = arith.constant 0 : index
    %c0_116 = arith.constant 0 : index
    %108 = vector.load %arg7[%c0_113, %c2_114, %c0_115, %c0_116] : memref<1x5x128x128xbf16, #tpu.memory_space<vmem>>, vector<1x1x128x128xbf16>
    %109 = vector.shape_cast %108 : vector<1x1x128x128xbf16> to vector<128x128xbf16>
    %cst_117 = arith.constant dense<0.000000e+00> : vector<2x128xf32>
    %110 = tpu.matmul %107, %109, %cst_117 {dimension_numbers = #tpu.dot_dimension_numbers<[1], [0], [0], [1], [0, 0, 1, 1], [], []>} : vector<2x128xbf16>, vector<128x128xbf16>, vector<2x128xf32> -> vector<2x128xf32>
    %111 = arith.addf %105, %110 : vector<2x128xf32>
    %c3_118 = arith.constant 3 : index
    %c0_119 = arith.constant 0 : index
    %112 = tpu.strided_load %arg17[%c3_118, %c0_119] {strides = array<i32: 8, 1>} : memref<16x128xf32, #tpu.memory_space<vmem>>, vector<2x128xf32>
    %113 = arith.truncf %112 : vector<2x128xf32> to vector<2x128xbf16>
    %c0_120 = arith.constant 0 : index
    %c3_121 = arith.constant 3 : index
    %c0_122 = arith.constant 0 : index
    %c0_123 = arith.constant 0 : index
    %114 = vector.load %arg7[%c0_120, %c3_121, %c0_122, %c0_123] : memref<1x5x128x128xbf16, #tpu.memory_space<vmem>>, vector<1x1x128x128xbf16>
    %115 = vector.shape_cast %114 : vector<1x1x128x128xbf16> to vector<128x128xbf16>
    %cst_124 = arith.constant dense<0.000000e+00> : vector<2x128xf32>
    %116 = tpu.matmul %113, %115, %cst_124 {dimension_numbers = #tpu.dot_dimension_numbers<[1], [0], [0], [1], [0, 0, 1, 1], [], []>} : vector<2x128xbf16>, vector<128x128xbf16>, vector<2x128xf32> -> vector<2x128xf32>
    %117 = arith.addf %111, %116 : vector<2x128xf32>
    %c4_125 = arith.constant 4 : index
    %c0_126 = arith.constant 0 : index
    %118 = tpu.strided_load %arg17[%c4_125, %c0_126] {strides = array<i32: 8, 1>} : memref<16x128xf32, #tpu.memory_space<vmem>>, vector<2x128xf32>
    %119 = arith.truncf %118 : vector<2x128xf32> to vector<2x128xbf16>
    %c0_127 = arith.constant 0 : index
    %c4_128 = arith.constant 4 : index
    %c0_129 = arith.constant 0 : index
    %c0_130 = arith.constant 0 : index
    %120 = vector.load %arg7[%c0_127, %c4_128, %c0_129, %c0_130] : memref<1x5x128x128xbf16, #tpu.memory_space<vmem>>, vector<1x1x128x128xbf16>
    %121 = vector.shape_cast %120 : vector<1x1x128x128xbf16> to vector<128x128xbf16>
    %cst_131 = arith.constant dense<0.000000e+00> : vector<2x128xf32>
    %122 = tpu.matmul %119, %121, %cst_131 {dimension_numbers = #tpu.dot_dimension_numbers<[1], [0], [0], [1], [0, 0, 1, 1], [], []>} : vector<2x128xbf16>, vector<128x128xbf16>, vector<2x128xf32> -> vector<2x128xf32>
    %123 = arith.addf %117, %122 : vector<2x128xf32>
    %c0_132 = arith.constant 0 : index
    %c0_133 = arith.constant 0 : index
    %c0_134 = arith.constant 0 : index
    %124 = vector.load %arg8[%c0_132, %c0_133, %c0_134] : memref<1x1x128xf32, #tpu.memory_space<vmem>>, vector<1x1x128xf32>
    %125 = vector.shape_cast %124 : vector<1x1x128xf32> to vector<1x128xf32>
    %126 = vector.broadcast %125 : vector<1x128xf32> to vector<2x128xf32>
    %127 = arith.addf %123, %126 : vector<2x128xf32>
    %cst_135 = arith.constant 0.000000e+00 : f32
    %128 = vector.broadcast %cst_135 : f32 to vector<2x128xf32>
    %129 = arith.maximumf %127, %128 : vector<2x128xf32>
    %130 = arith.truncf %129 : vector<2x128xf32> to vector<2x128xbf16>
    %c0_136 = arith.constant 0 : index
    %c0_137 = arith.constant 0 : index
    %c0_138 = arith.constant 0 : index
    %131 = vector.load %arg9[%c0_136, %c0_137, %c0_138] : memref<1x128x128xbf16, #tpu.memory_space<vmem>>, vector<1x128x128xbf16>
    %132 = vector.shape_cast %131 : vector<1x128x128xbf16> to vector<128x128xbf16>
    %cst_139 = arith.constant dense<0.000000e+00> : vector<2x128xf32>
    %133 = tpu.matmul %130, %132, %cst_139 {dimension_numbers = #tpu.dot_dimension_numbers<[1], [0], [0], [1], [0, 0, 1, 1], [], []>} : vector<2x128xbf16>, vector<128x128xbf16>, vector<2x128xf32> -> vector<2x128xf32>
    %c0_140 = arith.constant 0 : index
    %c0_141 = arith.constant 0 : index
    %c0_142 = arith.constant 0 : index
    %134 = vector.load %arg10[%c0_140, %c0_141, %c0_142] : memref<1x1x128xf32, #tpu.memory_space<vmem>>, vector<1x1x128xf32>
    %135 = vector.shape_cast %134 : vector<1x1x128xf32> to vector<1x128xf32>
    %136 = vector.broadcast %135 : vector<1x128xf32> to vector<2x128xf32>
    %137 = arith.addf %133, %136 : vector<2x128xf32>
    %cst_143 = arith.constant 0.000000e+00 : f32
    %138 = vector.broadcast %cst_143 : f32 to vector<2x128xf32>
    %139 = arith.maximumf %137, %138 : vector<2x128xf32>
    %140 = arith.truncf %139 : vector<2x128xf32> to vector<2x128xbf16>
    %c0_144 = arith.constant 0 : index
    %c0_145 = arith.constant 0 : index
    %c0_146 = arith.constant 0 : index
    %141 = vector.load %arg11[%c0_144, %c0_145, %c0_146] : memref<1x128x128xbf16, #tpu.memory_space<vmem>>, vector<1x128x128xbf16>
    %142 = vector.shape_cast %141 : vector<1x128x128xbf16> to vector<128x128xbf16>
    %cst_147 = arith.constant dense<0.000000e+00> : vector<2x128xf32>
    %143 = tpu.matmul %140, %142, %cst_147 {dimension_numbers = #tpu.dot_dimension_numbers<[1], [0], [0], [1], [0, 0, 1, 1], [], []>} : vector<2x128xbf16>, vector<128x128xbf16>, vector<2x128xf32> -> vector<2x128xf32>
    %c0_148 = arith.constant 0 : index
    %c0_149 = arith.constant 0 : index
    %c0_150 = arith.constant 0 : index
    %144 = vector.load %arg12[%c0_148, %c0_149, %c0_150] : memref<1x1x128xf32, #tpu.memory_space<vmem>>, vector<1x1x128xf32>
    %145 = vector.shape_cast %144 : vector<1x1x128xf32> to vector<1x128xf32>
    %146 = vector.broadcast %145 : vector<1x128xf32> to vector<2x128xf32>
    %147 = arith.addf %143, %146 : vector<2x128xf32>
    %c0_151 = arith.constant 0 : index
    %c0_152 = arith.constant 0 : index
    %c0_153 = arith.constant 0 : index
    %148 = vector.load %arg13[%c0_151, %c0_152, %c0_153] : memref<1x2x128xf32, #tpu.memory_space<vmem>>, vector<1x2x128xf32>
    %149 = vector.shape_cast %148 : vector<1x2x128xf32> to vector<2x128xf32>
    %150 = vector.shape_cast %147 : vector<2x128xf32> to vector<1x2x128xf32>
    tpu.vector_store %arg13[%c0_151, %c0_152, %c0_153], %150 {strides = array<i32>} : memref<1x2x128xf32, #tpu.memory_space<vmem>>, vector<1x2x128xf32>,
    return
  }
  func.func @transform_0(%arg0: i32, %arg1: i32) -> (i32, i32, i32) {
    %c0_i32 = arith.constant 0 : i32
    %c0_i32_0 = arith.constant 0 : i32
    return %arg0, %arg1, %c0_i32 : i32, i32, i32
  }
  func.func @transform_1(%arg0: i32, %arg1: i32) -> (i32, i32, i32, i32) {
    %c0_i32 = arith.constant 0 : i32
    %c0_i32_0 = arith.constant 0 : i32
    %c0_i32_1 = arith.constant 0 : i32
    %c0_i32_2 = arith.constant 0 : i32
    return %arg0, %c0_i32, %c0_i32_0, %c0_i32_1 : i32, i32, i32, i32
  }
  func.func @transform_2(%arg0: i32, %arg1: i32) -> (i32, i32, i32) {
    %c0_i32 = arith.constant 0 : i32
    %c0_i32_0 = arith.constant 0 : i32
    %c0_i32_1 = arith.constant 0 : i32
    return %arg0, %c0_i32, %c0_i32_0 : i32, i32, i32
  }
  func.func @transform_3(%arg0: i32, %arg1: i32) -> (i32, i32, i32, i32) {
    %c0_i32 = arith.constant 0 : i32
    %c0_i32_0 = arith.constant 0 : i32
    %c0_i32_1 = arith.constant 0 : i32
    %c0_i32_2 = arith.constant 0 : i32
    return %arg0, %c0_i32, %c0_i32_0, %c0_i32_1 : i32, i32, i32, i32
  }
  func.func @transform_4(%arg0: i32, %arg1: i32) -> (i32, i32, i32) {
    %c0_i32 = arith.constant 0 : i32
    %c0_i32_0 = arith.constant 0 : i32
    %c0_i32_1 = arith.constant 0 : i32
    return %arg0, %c0_i32, %c0_i32_0 : i32, i32, i32
  }
  func.func @transform_5(%arg0: i32, %arg1: i32) -> (i32, i32, i32, i32) {
    %c0_i32 = arith.constant 0 : i32
    %c0_i32_0 = arith.constant 0 : i32
    %c0_i32_1 = arith.constant 0 : i32
    %c0_i32_2 = arith.constant 0 : i32
    return %arg0, %c0_i32, %c0_i32_0, %c0_i32_1 : i32, i32, i32, i32
  }
  func.func @transform_6(%arg0: i32, %arg1: i32) -> (i32, i32, i32) {
    %c0_i32 = arith.constant 0 : i32
    %c0_i32_0 = arith.constant 0 : i32
    %c0_i32_1 = arith.constant 0 : i32
    return %arg0, %c0_i32, %c0_i32_0 : i32, i32, i32
  }
  func.func @transform_7(%arg0: i32, %arg1: i32) -> (i32, i32, i32) {
    %c0_i32 = arith.constant 0 : i32
    %c0_i32_0 = arith.constant 0 : i32
    %c0_i32_1 = arith.constant 0 : i32
    return %arg0, %c0_i32, %c0_i32_0 : i32, i32, i32
  }
  func.func @transform_8(%arg0: i32, %arg1: i32) -> (i32, i32, i32) {
    %c0_i32 = arith.constant 0 : i32
    %c0_i32_0 = arith.constant 0 : i32
    %c0_i32_1 = arith.constant 0 : i32
    return %arg0, %c0_i32, %c0_i32_0 : i32, i32, i32
  }
  func.func @transform_9(%arg0: i32, %arg1: i32) -> (i32, i32, i32) {
    %c0_i32 = arith.constant 0 : i32
    %c0_i32_0 = arith.constant 0 : i32
    %c0_i32_1 = arith.constant 0 : i32
    return %arg0, %c0_i32, %c0_i32_0 : i32, i32, i32
  }
  func.func @transform_10(%arg0: i32, %arg1: i32) -> (i32, i32, i32) {
    %c0_i32 = arith.constant 0 : i32
    %c0_i32_0 = arith.constant 0 : i32
    %c0_i32_1 = arith.constant 0 : i32
    return %arg0, %c0_i32, %c0_i32_0 : i32, i32, i32
  }
  func.func @transform_11(%arg0: i32, %arg1: i32) -> (i32, i32, i32) {
    %c0_i32 = arith.constant 0 : i32
    %c0_i32_0 = arith.constant 0 : i32
    return %arg0, %arg1, %c0_i32 : i32, i32, i32
  }
}

</mosaic_0001>

<llo_original>
// kernel: doublenet_forward.1
$region0: #{doublenet_forward.1}
  #allocation0 [shape = 'u32[]', space=smem, size = 0x4, offset = 0x4, fixed_abs, tag = 'smem constant byte address 0x4 - core index']
  #allocation1 [shape = 'u32[144,128]{1,0:T(1,128)}', space=vmem, size = 0x12000, scoped, tag = 'internal scratch']
  #allocation2 [shape = 'f32[64,128]{1,0:T(8,128)}', space=vmem, size = 0x8000, scoped, tag = 'scratch operand']
  #allocation3 [shape = 'f32[32,128]{1,0:T(8,128)}', space=vmem, size = 0x4000, scoped, tag = 'scratch operand']
  #allocation4 [shape = 'f32[32,128]{1,0:T(8,128)}', space=vmem, size = 0x4000, scoped, tag = 'scratch operand']
  #allocation5 [shape = 'f32[16,128]{1,0:T(8,128)}', space=vmem, size = 0x2000, scoped, tag = 'scratch operand']
  %s0 = inlined_call_operand.vmem [shape: f32[2,64,96], index: 0, kind: input, shape index: {}]
  %s1 = inlined_call_operand.hbm [shape: bf16[2,5,96,256], index: 1, kind: input, shape index: {}]
  %s2 = inlined_call_operand.vmem [shape: f32[2,1,128], index: 2, kind: input, shape index: {}]
  %s3 = inlined_call_operand.vmem [shape: bf16[2,5,128,256], index: 3, kind: input, shape index: {}]
  %s4 = inlined_call_operand.vmem [shape: f32[2,1,128], index: 4, kind: input, shape index: {}]
  %s5 = inlined_call_operand.vmem [shape: bf16[2,5,128,128], index: 5, kind: input, shape index: {}]
  %s6 = inlined_call_operand.vmem [shape: f32[2,1,128], index: 6, kind: input, shape index: {}]
  %s7 = inlined_call_operand.hbm [shape: bf16[2,128,128], index: 7, kind: input, shape index: {}]
  %s8 = inlined_call_operand.vmem [shape: f32[2,1,128], index: 8, kind: input, shape index: {}]
  %s9 = inlined_call_operand.hbm [shape: bf16[2,128,128], index: 9, kind: input, shape index: {}]
  %s10 = inlined_call_operand.vmem [shape: f32[2,1,128], index: 10, kind: input, shape index: {}]
  %s11 = inlined_call_operand.vmem [shape: f32[2,2,128], index: 11, kind: output, shape index: {}]
  %s12 = sld [smem:[#allocation0]]
  $region89: #{doublenet_forward.1} parent=0
    _
  %s14 = ssub.s32 1, %s12
  %s15 = scalar_select 0, %s14, %s12
  $region1: #{doublenet_forward.1} parent=0
    #allocation6 [shape = 'u8[491520]{0}', space=vmem, size = 0x78000, scoped, tag = 'input window, operand 1']
    #allocation7 [shape = 's32[2]{0}', space=sflag, size = 0x8, scoped, tag = 'scoped memory for doublenet_forward.1']
    #allocation8 [shape = 'u8[65536]{0}', space=vmem, size = 0x10000, scoped, tag = 'input window, operand 7']
    #allocation9 [shape = 's32[2]{0}', space=sflag, size = 0x8, scoped, tag = 'scoped memory for doublenet_forward.1']
    #allocation10 [shape = 'u8[65536]{0}', space=vmem, size = 0x10000, scoped, tag = 'input window, operand 9']
    %16 = vsyncpa [#allocation7], 0
    %s17 = scalar_lea.sflag [#allocation7], 1
    %18 = vsyncpa %s17, 0
    %19 = vsyncpa [#allocation9], 0
    %s20 = scalar_lea.sflag [#allocation9], 1
    %21 = vsyncpa %s20, 0
    loop: start=0, step=1, limit=4
    $region2: #{doublenet_forward.1} parent=1 // loop_pre_header
      _
    $region3: #{doublenet_forward.1} parent=1 // loop_header
      %s23 = sphi 0, %s27
      %p24 = scmp.ge.s32.totalorder %s23, 4
      %s30 = sphi 0, %s42
      %s31 = sphi 0, %s38
      %s32 = sphi 0, %s30
      %s33 = sphi 0, %s31
      %s34 = sphi 0, %s32
      %s35 = sphi 0, %s33
      %s47 = sphi 0, %s49
      %s50 = sphi 0, %s47
      %s51 = sphi 0, %s50
      %s67 = sphi 0, %s51
      %s73 = sphi 0, %s75
      %s76 = sphi 0, %s73
      %s77 = sphi 0, %s76
      %s93 = sphi 0, %s77
      %s99 = sphi 0, %s101
      %s102 = sphi 0, %s99
      %s103 = sphi 0, %s102
      %s119 = sphi 0, %s103
      %s125 = sphi 0, %s127
      %s128 = sphi 0, %s125
      %s129 = sphi 0, %s128
      %s145 = sphi 0, %s129
      %s151 = sphi 0, %s153
      %s154 = sphi 0, %s151
      %s155 = sphi 0, %s154
      %s171 = sphi 0, %s155
      %s177 = sphi 0, %s179
      %s180 = sphi 0, %s177
      %s181 = sphi 0, %s180
      %s197 = sphi 0, %s181
      %s203 = sphi 0, %s205
      %s206 = sphi 0, %s203
      %s207 = sphi 0, %s206
      %s223 = sphi 0, %s207
      %s229 = sphi 0, %s231
      %s232 = sphi 0, %s229
      %s233 = sphi 0, %s232
      %s249 = sphi 0, %s233
      %s255 = sphi 0, %s257
      %s258 = sphi 0, %s255
      %s259 = sphi 0, %s258
      %s275 = sphi 0, %s259
      %s281 = sphi 0, %s283
      %s284 = sphi 0, %s281
      %s285 = sphi 0, %s284
      %s301 = sphi 0, %s285
      %s307 = sphi 0, %s309
      %s310 = sphi 0, %s307
      %s311 = sphi 0, %s310
      %s327 = sphi 0, %s311
      %s335 = sphi 0, %s337
      %s338 = sphi 0, %s335
      %s339 = sphi 0, %s338
      %s355 = sphi 0, %s339
    $region4: #{doublenet_forward.1} parent=1 // loop_header_branch
      %26 = sbr.rel (%p24) target = $region8
    $region5: #{doublenet_forward.1} parent=1 // loop_body
      %s28 = ssub.s32 %s23, 1
      %s29 = ssub.s32 %s23, 2
      %s36 = sadd.s32 1, %s31
      %p37 = scmp.ge.s32.totalorder %s36, 1
      %s38 = scalar_select %p37, 0, %s36
      %s39 = sadd.s32 1, %s30
      %s40 = scalar_select %p37, %s39, %s30
      %p41 = scmp.ge.s32.totalorder %s40, 2
      %s42 = scalar_select %p41, 0, %s40
      %s43 = ssub.s32 %s30, %s42
      %s44 = ssub.s32 %s31, %s38
      %s45 = sor.u32 %s43, %s44
      %p46 = scmp.eq.s32.totalorder %s45, 0
      %s48 = sadd.s32 %s47, 1
      %s49 = scalar_select %p46, %s47, %s48
      %p52 = pneg %p46
      %p53 = scmp.eq.s32.totalorder %s23, 1
      %p54 = por %p52, %p53
      %p55 = scmp.ne.s32.totalorder %s47, %s50
      %p56 = scmp.eq.s32.totalorder %s23, 0
      %p57 = por %p55, %p56
      %p58 = scmp.ne.s32.totalorder %s47, %s50
      %p59 = scmp.eq.s32.totalorder %s28, 1
      %p60 = por %p58, %p59
      %p61 = scmp.ne.s32.totalorder %s50, %s51
      %p62 = scmp.eq.s32.totalorder %s28, 0
      %p63 = por %p61, %p62
      %p64 = scmp.ne.s32.totalorder %s50, %s51
      %p65 = scmp.eq.s32.totalorder %s29, 1
      %p66 = por %p64, %p65
      %p68 = scmp.ne.s32.totalorder %s51, %s67
      %p69 = scmp.eq.s32.totalorder %s29, 0
      %p70 = por %p68, %p69
      %s71 = ssub.s32 %s30, %s42
      %p72 = scmp.eq.s32.totalorder %s71, 0
      %s74 = sadd.s32 %s73, 1
      %s75 = scalar_select %p72, %s73, %s74
      %p78 = pneg %p72
      %p79 = scmp.eq.s32.totalorder %s23, 1
      %p80 = por %p78, %p79
      %p81 = scmp.ne.s32.totalorder %s73, %s76
      %p82 = scmp.eq.s32.totalorder %s23, 0
      %p83 = por %p81, %p82
      %p84 = scmp.ne.s32.totalorder %s73, %s76
      %p85 = scmp.eq.s32.totalorder %s28, 1
      %p86 = por %p84, %p85
      %p87 = scmp.ne.s32.totalorder %s76, %s77
      %p88 = scmp.eq.s32.totalorder %s28, 0
      %p89 = por %p87, %p88
      %p90 = scmp.ne.s32.totalorder %s76, %s77
      %p91 = scmp.eq.s32.totalorder %s29, 1
      %p92 = por %p90, %p91
      %p94 = scmp.ne.s32.totalorder %s77, %s93
      %p95 = scmp.eq.s32.totalorder %s29, 0
      %p96 = por %p94, %p95
      %s97 = ssub.s32 %s30, %s42
      %p98 = scmp.eq.s32.totalorder %s97, 0
      %s100 = sadd.s32 %s99, 1
      %s101 = scalar_select %p98, %s99, %s100
      %p104 = pneg %p98
      %p105 = scmp.eq.s32.totalorder %s23, 1
      %p106 = por %p104, %p105
      %p107 = scmp.ne.s32.totalorder %s99, %s102
      %p108 = scmp.eq.s32.totalorder %s23, 0
      %p109 = por %p107, %p108
      %p110 = scmp.ne.s32.totalorder %s99, %s102
      %p111 = scmp.eq.s32.totalorder %s28, 1
      %p112 = por %p110, %p111
      %p113 = scmp.ne.s32.totalorder %s102, %s103
      %p114 = scmp.eq.s32.totalorder %s28, 0
      %p115 = por %p113, %p114
      %p116 = scmp.ne.s32.totalorder %s102, %s103
      %p117 = scmp.eq.s32.totalorder %s29, 1
      %p118 = por %p116, %p117
      %p120 = scmp.ne.s32.totalorder %s103, %s119
      %p121 = scmp.eq.s32.totalorder %s29, 0
      %p122 = por %p120, %p121
      %s123 = ssub.s32 %s30, %s42
      %p124 = scmp.eq.s32.totalorder %s123, 0
      %s126 = sadd.s32 %s125, 1
      %s127 = scalar_select %p124, %s125, %s126
      %p130 = pneg %p124
      %p131 = scmp.eq.s32.totalorder %s23, 1
      %p132 = por %p130, %p131
      %p133 = scmp.ne.s32.totalorder %s125, %s128
      %p134 = scmp.eq.s32.totalorder %s23, 0
      %p135 = por %p133, %p134
      %p136 = scmp.ne.s32.totalorder %s125, %s128
      %p137 = scmp.eq.s32.totalorder %s28, 1
      %p138 = por %p136, %p137
      %p139 = scmp.ne.s32.totalorder %s128, %s129
      %p140 = scmp.eq.s32.totalorder %s28, 0
      %p141 = por %p139, %p140
      %p142 = scmp.ne.s32.totalorder %s128, %s129
      %p143 = scmp.eq.s32.totalorder %s29, 1
      %p144 = por %p142, %p143
      %p146 = scmp.ne.s32.totalorder %s129, %s145
      %p147 = scmp.eq.s32.totalorder %s29, 0
      %p148 = por %p146, %p147
      %s149 = ssub.s32 %s30, %s42
      %p150 = scmp.eq.s32.totalorder %s149, 0
      %s152 = sadd.s32 %s151, 1
      %s153 = scalar_select %p150, %s151, %s152
      %p156 = pneg %p150
      %p157 = scmp.eq.s32.totalorder %s23, 1
      %p158 = por %p156, %p157
      %p159 = scmp.ne.s32.totalorder %s151, %s154
      %p160 = scmp.eq.s32.totalorder %s23, 0
      %p161 = por %p159, %p160
      %p162 = scmp.ne.s32.totalorder %s151, %s154
      %p163 = scmp.eq.s32.totalorder %s28, 1
      %p164 = por %p162, %p163
      %p165 = scmp.ne.s32.totalorder %s154, %s155
      %p166 = scmp.eq.s32.totalorder %s28, 0
      %p167 = por %p165, %p166
      %p168 = scmp.ne.s32.totalorder %s154, %s155
      %p169 = scmp.eq.s32.totalorder %s29, 1
      %p170 = por %p168, %p169
      %p172 = scmp.ne.s32.totalorder %s155, %s171
      %p173 = scmp.eq.s32.totalorder %s29, 0
      %p174 = por %p172, %p173
      %s175 = ssub.s32 %s30, %s42
      %p176 = scmp.eq.s32.totalorder %s175, 0
      %s178 = sadd.s32 %s177, 1
      %s179 = scalar_select %p176, %s177, %s178
      %p182 = pneg %p176
      %p183 = scmp.eq.s32.totalorder %s23, 1
      %p184 = por %p182, %p183
      %p185 = scmp.ne.s32.totalorder %s177, %s180
      %p186 = scmp.eq.s32.totalorder %s23, 0
      %p187 = por %p185, %p186
      %p188 = scmp.ne.s32.totalorder %s177, %s180
      %p189 = scmp.eq.s32.totalorder %s28, 1
      %p190 = por %p188, %p189
      %p191 = scmp.ne.s32.totalorder %s180, %s181
      %p192 = scmp.eq.s32.totalorder %s28, 0
      %p193 = por %p191, %p192
      %p194 = scmp.ne.s32.totalorder %s180, %s181
      %p195 = scmp.eq.s32.totalorder %s29, 1
      %p196 = por %p194, %p195
      %p198 = scmp.ne.s32.totalorder %s181, %s197
      %p199 = scmp.eq.s32.totalorder %s29, 0
      %p200 = por %p198, %p199
      %s201 = ssub.s32 %s30, %s42
      %p202 = scmp.eq.s32.totalorder %s201, 0
      %s204 = sadd.s32 %s203, 1
      %s205 = scalar_select %p202, %s203, %s204
      %p208 = pneg %p202
      %p209 = scmp.eq.s32.totalorder %s23, 1
      %p210 = por %p208, %p209
      %p211 = scmp.ne.s32.totalorder %s203, %s206
      %p212 = scmp.eq.s32.totalorder %s23, 0
      %p213 = por %p211, %p212
      %p214 = scmp.ne.s32.totalorder %s203, %s206
      %p215 = scmp.eq.s32.totalorder %s28, 1
      %p216 = por %p214, %p215
      %p217 = scmp.ne.s32.totalorder %s206, %s207
      %p218 = scmp.eq.s32.totalorder %s28, 0
      %p219 = por %p217, %p218
      %p220 = scmp.ne.s32.totalorder %s206, %s207
      %p221 = scmp.eq.s32.totalorder %s29, 1
      %p222 = por %p220, %p221
      %p224 = scmp.ne.s32.totalorder %s207, %s223
      %p225 = scmp.eq.s32.totalorder %s29, 0
      %p226 = por %p224, %p225
      %s227 = ssub.s32 %s30, %s42
      %p228 = scmp.eq.s32.totalorder %s227, 0
      %s230 = sadd.s32 %s229, 1
      %s231 = scalar_select %p228, %s229, %s230
      %p234 = pneg %p228
      %p235 = scmp.eq.s32.totalorder %s23, 1
      %p236 = por %p234, %p235
      %p237 = scmp.ne.s32.totalorder %s229, %s232
      %p238 = scmp.eq.s32.totalorder %s23, 0
      %p239 = por %p237, %p238
      %p240 = scmp.ne.s32.totalorder %s229, %s232
      %p241 = scmp.eq.s32.totalorder %s28, 1
      %p242 = por %p240, %p241
      %p243 = scmp.ne.s32.totalorder %s232, %s233
      %p244 = scmp.eq.s32.totalorder %s28, 0
      %p245 = por %p243, %p244
      %p246 = scmp.ne.s32.totalorder %s232, %s233
      %p247 = scmp.eq.s32.totalorder %s29, 1
      %p248 = por %p246, %p247
      %p250 = scmp.ne.s32.totalorder %s233, %s249
      %p251 = scmp.eq.s32.totalorder %s29, 0
      %p252 = por %p250, %p251
      %s253 = ssub.s32 %s30, %s42
      %p254 = scmp.eq.s32.totalorder %s253, 0
      %s256 = sadd.s32 %s255, 1
      %s257 = scalar_select %p254, %s255, %s256
      %p260 = pneg %p254
      %p261 = scmp.eq.s32.totalorder %s23, 1
      %p262 = por %p260, %p261
      %p263 = scmp.ne.s32.totalorder %s255, %s258
      %p264 = scmp.eq.s32.totalorder %s23, 0
      %p265 = por %p263, %p264
      %p266 = scmp.ne.s32.totalorder %s255, %s258
      %p267 = scmp.eq.s32.totalorder %s28, 1
      %p268 = por %p266, %p267
      %p269 = scmp.ne.s32.totalorder %s258, %s259
      %p270 = scmp.eq.s32.totalorder %s28, 0
      %p271 = por %p269, %p270
      %p272 = scmp.ne.s32.totalorder %s258, %s259
      %p273 = scmp.eq.s32.totalorder %s29, 1
      %p274 = por %p272, %p273
      %p276 = scmp.ne.s32.totalorder %s259, %s275
      %p277 = scmp.eq.s32.totalorder %s29, 0
      %p278 = por %p276, %p277
      %s279 = ssub.s32 %s30, %s42
      %p280 = scmp.eq.s32.totalorder %s279, 0
      %s282 = sadd.s32 %s281, 1
      %s283 = scalar_select %p280, %s281, %s282
      %p286 = pneg %p280
      %p287 = scmp.eq.s32.totalorder %s23, 1
      %p288 = por %p286, %p287
      %p289 = scmp.ne.s32.totalorder %s281, %s284
      %p290 = scmp.eq.s32.totalorder %s23, 0
      %p291 = por %p289, %p290
      %p292 = scmp.ne.s32.totalorder %s281, %s284
      %p293 = scmp.eq.s32.totalorder %s28, 1
      %p294 = por %p292, %p293
      %p295 = scmp.ne.s32.totalorder %s284, %s285
      %p296 = scmp.eq.s32.totalorder %s28, 0
      %p297 = por %p295, %p296
      %p298 = scmp.ne.s32.totalorder %s284, %s285
      %p299 = scmp.eq.s32.totalorder %s29, 1
      %p300 = por %p298, %p299
      %p302 = scmp.ne.s32.totalorder %s285, %s301
      %p303 = scmp.eq.s32.totalorder %s29, 0
      %p304 = por %p302, %p303
      %s305 = ssub.s32 %s30, %s42
      %p306 = scmp.eq.s32.totalorder %s305, 0
      %s308 = sadd.s32 %s307, 1
      %s309 = scalar_select %p306, %s307, %s308
      %p312 = pneg %p306
      %p313 = scmp.eq.s32.totalorder %s23, 1
      %p314 = por %p312, %p313
      %p315 = scmp.ne.s32.totalorder %s307, %s310
      %p316 = scmp.eq.s32.totalorder %s23, 0
      %p317 = por %p315, %p316
      %p318 = scmp.ne.s32.totalorder %s307, %s310
      %p319 = scmp.eq.s32.totalorder %s28, 1
      %p320 = por %p318, %p319
      %p321 = scmp.ne.s32.totalorder %s310, %s311
      %p322 = scmp.eq.s32.totalorder %s28, 0
      %p323 = por %p321, %p322
      %p324 = scmp.ne.s32.totalorder %s310, %s311
      %p325 = scmp.eq.s32.totalorder %s29, 1
      %p326 = por %p324, %p325
      %p328 = scmp.ne.s32.totalorder %s311, %s327
      %p329 = scmp.eq.s32.totalorder %s29, 0
      %p330 = por %p328, %p329
      %s331 = ssub.s32 %s30, %s42
      %s332 = ssub.s32 %s31, %s38
      %s333 = sor.u32 %s331, %s332
      %p334 = scmp.eq.s32.totalorder %s333, 0
      %s336 = sadd.s32 %s335, 1
      %s337 = scalar_select %p334, %s335, %s336
      %p340 = pneg %p334
      %p341 = scmp.eq.s32.totalorder %s23, 1
      %p342 = por %p340, %p341
      %p343 = scmp.ne.s32.totalorder %s335, %s338
      %p344 = scmp.eq.s32.totalorder %s23, 0
      %p345 = por %p343, %p344
      %p346 = scmp.ne.s32.totalorder %s335, %s338
      %p347 = scmp.eq.s32.totalorder %s28, 1
      %p348 = por %p346, %p347
      %p349 = scmp.ne.s32.totalorder %s338, %s339
      %p350 = scmp.eq.s32.totalorder %s28, 0
      %p351 = por %p349, %p350
      %p352 = scmp.ne.s32.totalorder %s338, %s339
      %p353 = scmp.eq.s32.totalorder %s29, 1
      %p354 = por %p352, %p353
      %p356 = scmp.ne.s32.totalorder %s339, %s355
      %p357 = scmp.eq.s32.totalorder %s29, 0
      %p358 = por %p356, %p357
      %p359 = scmp.le.s32.totalorder 1, %s23
      %p360 = scmp.lt.s32.totalorder %s23, 3
      %p361 = pnand %p359, %p360
      %p362 = pneg %p361
      // Predicated region
      $region9: #{doublenet_forward.1} parent=5 // pred_check
        _
      $region10: #{doublenet_forward.1} parent=5 // pred_check_branch
        %364 = sbr.rel (%p361) target = $region12
      $region11: #{doublenet_forward.1} parent=5 // pred_region
        %s365 = ssub.s32 %s23, 1
      $region12: #{doublenet_forward.1} parent=5 // pred_fallthru
        _
      %p366 = scmp.lt.s32.totalorder %s23, 2
      // Predicated region
      $region13: #{doublenet_forward.1} parent=5 // pred_check
        %p367 = pneg %p366
      $region14: #{doublenet_forward.1} parent=5 // pred_check_branch
        %369 = sbr.rel (%p367) target = $region16
      $region15: #{doublenet_forward.1} parent=5 // pred_region
        // Predicated region
        $region17: #{doublenet_forward.1} parent=15 // pred_check
          %p370 = pneg %p57
        $region18: #{doublenet_forward.1} parent=15 // pred_check_branch
          %372 = sbr.rel (%p370) target = $region20
        $region19: #{doublenet_forward.1} parent=15 // pred_region
          %s373 = smul.u32 8, %s31
          %p374 = scmp.lt.s32.totalorder %s30, 1
          %s375 = scalar_select %p374, %s30, 1
          %p376 = scmp.lt.s32.totalorder %s373, 7
          %s377 = scalar_select %p376, %s373, 7
          %s378 = smul.addr %s375, 8
          %s379 = sadd.s32 %s377, %s378
          %s380 = smul.addr %s379, 8
          %s381 = scalar_lea.vmem %s0, %s380
          %s382 = smul.u32 8, %s31
        $region20: #{doublenet_forward.1} parent=15 // pred_fallthru
          _
        // Predicated region
        $region21: #{doublenet_forward.1} parent=15 // pred_check
          %p383 = pneg %p83
        $region22: #{doublenet_forward.1} parent=15 // pred_check_branch
          %385 = sbr.rel (%p383) target = $region24
        $region23: #{doublenet_forward.1} parent=15 // pred_region
          %s386 = sand.u32 %s73, 1
          %s387 = scalar_lea.sflag [#allocation7], %s386
          %s388 = sand.u32 %s73, 1
          %s389 = smul.addr %s388, 480
          %s390 = scalar_lea.vmem [#allocation6], %s389
          %s392 = ssub.s32 7680, 7680
          %393 = vsyncadd %s387, %s392
          %s394 = smul.addr %s30, 120
          %s395 = smul.addr %s394, 64
          %s396 = scalar_lea.hbm %s1, %s395
          %s397 = sshll.u32 %s390, 4
          %s398 = int_to_ptr.vmem [resolvable:$true] %s397
          %403 = dma.hbm_to_vmem [thread:$0]  %s396, 7680, %s398, %s387, 128, 128, 8
        $region24: #{doublenet_forward.1} parent=15 // pred_fallthru
          _
        // Predicated region
        $region25: #{doublenet_forward.1} parent=15 // pred_check
          %p404 = pneg %p109
        $region26: #{doublenet_forward.1} parent=15 // pred_check_branch
          %406 = sbr.rel (%p404) target = $region28
        $region27: #{doublenet_forward.1} parent=15 // pred_region
          %p407 = scmp.lt.s32.totalorder %s30, 1
          %s408 = scalar_select %p407, %s30, 1
          %s409 = scalar_lea.vmem %s2, %s408
        $region28: #{doublenet_forward.1} parent=15 // pred_fallthru
          _
        // Predicated region
        $region29: #{doublenet_forward.1} parent=15 // pred_check
          %p410 = pneg %p135
        $region30: #{doublenet_forward.1} parent=15 // pred_check_branch
          %412 = sbr.rel (%p410) target = $region32
        $region31: #{doublenet_forward.1} parent=15 // pred_region
          %p413 = scmp.lt.s32.totalorder %s30, 1
          %s414 = scalar_select %p413, %s30, 1
          %s415 = smul.addr %s414, 160
          %s416 = smul.addr %s415, 4
          %s417 = scalar_lea.vmem %s3, %s416
        $region32: #{doublenet_forward.1} parent=15 // pred_fallthru
          _
        // Predicated region
        $region33: #{doublenet_forward.1} parent=15 // pred_check
          %p418 = pneg %p161
        $region34: #{doublenet_forward.1} parent=15 // pred_check_branch
          %420 = sbr.rel (%p418) target = $region36
        $region35: #{doublenet_forward.1} parent=15 // pred_region
          %p421 = scmp.lt.s32.totalorder %s30, 1
          %s422 = scalar_select %p421, %s30, 1
          %s423 = scalar_lea.vmem %s4, %s422
        $region36: #{doublenet_forward.1} parent=15 // pred_fallthru
          _
        // Predicated region
        $region37: #{doublenet_forward.1} parent=15 // pred_check
          %p424 = pneg %p187
        $region38: #{doublenet_forward.1} parent=15 // pred_check_branch
          %426 = sbr.rel (%p424) target = $region40
        $region39: #{doublenet_forward.1} parent=15 // pred_region
          %p427 = scmp.lt.s32.totalorder %s30, 1
          %s428 = scalar_select %p427, %s30, 1
          %s429 = smul.addr %s428, 80
          %s430 = smul.addr %s429, 4
          %s431 = scalar_lea.vmem %s5, %s430
        $region40: #{doublenet_forward.1} parent=15 // pred_fallthru
          _
        // Predicated region
        $region41: #{doublenet_forward.1} parent=15 // pred_check
          %p432 = pneg %p213
        $region42: #{doublenet_forward.1} parent=15 // pred_check_branch
          %434 = sbr.rel (%p432) target = $region44
        $region43: #{doublenet_forward.1} parent=15 // pred_region
          %p435 = scmp.lt.s32.totalorder %s30, 1
          %s436 = scalar_select %p435, %s30, 1
          %s437 = scalar_lea.vmem %s6, %s436
        $region44: #{doublenet_forward.1} parent=15 // pred_fallthru
          _
        // Predicated region
        $region45: #{doublenet_forward.1} parent=15 // pred_check
          %p438 = pneg %p239
        $region46: #{doublenet_forward.1} parent=15 // pred_check_branch
          %440 = sbr.rel (%p438) target = $region48
        $region47: #{doublenet_forward.1} parent=15 // pred_region
          %s441 = sand.u32 %s23, 1
          %s442 = scalar_lea.sflag [#allocation9], %s441
          %s443 = sand.u32 %s229, 1
          %s444 = smul.addr %s443, 64
          %s445 = scalar_lea.vmem [#allocation8], %s444
          %s447 = ssub.s32 1024, 1024
          %448 = vsyncadd %s442, %s447
          %s449 = smul.addr %s30, 16
          %s450 = smul.addr %s449, 64
          %s451 = scalar_lea.hbm %s7, %s450
          %s452 = sshll.u32 %s445, 4
          %s453 = int_to_ptr.vmem [resolvable:$true] %s452
          %458 = dma.hbm_to_vmem [thread:$0]  %s451, 1024, %s453, %s442, 64, 64, 4
        $region48: #{doublenet_forward.1} parent=15 // pred_fallthru
          _
        // Predicated region
        $region49: #{doublenet_forward.1} parent=15 // pred_check
          %p459 = pneg %p265
        $region50: #{doublenet_forward.1} parent=15 // pred_check_branch
          %461 = sbr.rel (%p459) target = $region52
        $region51: #{doublenet_forward.1} parent=15 // pred_region
          %p462 = scmp.lt.s32.totalorder %s30, 1
          %s463 = scalar_select %p462, %s30, 1
          %s464 = scalar_lea.vmem %s8, %s463
        $region52: #{doublenet_forward.1} parent=15 // pred_fallthru
          _
        // Predicated region
        $region53: #{doublenet_forward.1} parent=15 // pred_check
          %p465 = pneg %p291
        $region54: #{doublenet_forward.1} parent=15 // pred_check_branch
          %467 = sbr.rel (%p465) target = $region56
        $region55: #{doublenet_forward.1} parent=15 // pred_region
          %s468 = sand.u32 %s23, 1
          %s469 = scalar_lea.sflag [#allocation9], %s468
          %s470 = sand.u32 %s281, 1
          %s471 = smul.addr %s470, 64
          %s472 = scalar_lea.vmem [#allocation10], %s471
          %s474 = ssub.s32 1024, 1024
          %475 = vsyncadd %s469, %s474
          %s476 = smul.addr %s30, 16
          %s477 = smul.addr %s476, 64
          %s478 = scalar_lea.hbm %s9, %s477
          %s479 = sshll.u32 %s472, 4
          %s480 = int_to_ptr.vmem [resolvable:$true] %s479
          %485 = dma.hbm_to_vmem [thread:$0]  %s478, 1024, %s480, %s469, 64, 64, 4
        $region56: #{doublenet_forward.1} parent=15 // pred_fallthru
          _
        // Predicated region
        $region57: #{doublenet_forward.1} parent=15 // pred_check
          %p486 = pneg %p317
        $region58: #{doublenet_forward.1} parent=15 // pred_check_branch
          %488 = sbr.rel (%p486) target = $region60
        $region59: #{doublenet_forward.1} parent=15 // pred_region
          %p489 = scmp.lt.s32.totalorder %s30, 1
          %s490 = scalar_select %p489, %s30, 1
          %s491 = scalar_lea.vmem %s10, %s490
        $region60: #{doublenet_forward.1} parent=15 // pred_fallthru
          _
      $region16: #{doublenet_forward.1} parent=5 // pred_fallthru
        _
      %p492 = scmp.le.s32.totalorder 1, %s23
      %p493 = scmp.lt.s32.totalorder %s23, 3
      %p494 = pnand %p492, %p493
      %p495 = pneg %p494
      // Predicated region
      $region61: #{doublenet_forward.1} parent=5 // pred_check
        _
      $region62: #{doublenet_forward.1} parent=5 // pred_check_branch
        %497 = sbr.rel (%p494) target = $region64
      $region63: #{doublenet_forward.1} parent=5 // pred_region
        %s498 = ssub.s32 %s23, 1
        %s499 = sand.u32 %s76, 1
        %s500 = scalar_lea.sflag [#allocation7], %s499
        %s501 = sand.u32 %s76, 1
        %s502 = smul.addr %s501, 480
        %s503 = scalar_lea.vmem [#allocation6], %s502
        // Predicated region
        $region65: #{doublenet_forward.1} parent=63 // pred_check
          %p504 = pneg %p89
        $region66: #{doublenet_forward.1} parent=63 // pred_check_branch
          %506 = sbr.rel (%p504) target = $region68
        $region67: #{doublenet_forward.1} parent=63 // pred_region
          %507 = dma.done %s500, 7680
        $region68: #{doublenet_forward.1} parent=63 // pred_fallthru
          _
        %s508 = sand.u32 %s28, 1
        %s509 = scalar_lea.sflag [#allocation9], %s508
        %s510 = sand.u32 %s232, 1
        %s511 = smul.addr %s510, 64
        %s512 = scalar_lea.vmem [#allocation8], %s511
        // Predicated region
        $region69: #{doublenet_forward.1} parent=63 // pred_check
          %p513 = pneg %p245
        $region70: #{doublenet_forward.1} parent=63 // pred_check_branch
          %515 = sbr.rel (%p513) target = $region72
        $region71: #{doublenet_forward.1} parent=63 // pred_region
          %516 = dma.done %s509, 1024
        $region72: #{doublenet_forward.1} parent=63 // pred_fallthru
          _
        %s517 = sand.u32 %s28, 1
        %s518 = scalar_lea.sflag [#allocation9], %s517
        %s519 = sand.u32 %s284, 1
        %s520 = smul.addr %s519, 64
        %s521 = scalar_lea.vmem [#allocation10], %s520
        // Predicated region
        $region73: #{doublenet_forward.1} parent=63 // pred_check
          %p522 = pneg %p297
        $region74: #{doublenet_forward.1} parent=63 // pred_check_branch
          %524 = sbr.rel (%p522) target = $region76
        $region75: #{doublenet_forward.1} parent=63 // pred_region
          %525 = dma.done %s518, 1024
        $region76: #{doublenet_forward.1} parent=63 // pred_fallthru
          _
        %s526 = smul.u32 8, %s33
        %p527 = scmp.lt.s32.totalorder %s32, 1
        %s528 = scalar_select %p527, %s32, 1
        %p529 = scmp.lt.s32.totalorder %s526, 7
        %s530 = scalar_select %p529, %s526, 7
        %s531 = smul.addr %s528, 8
        %s532 = sadd.s32 %s530, %s531
        %s533 = smul.addr %s532, 8
        %s534 = scalar_lea.vmem %s0, %s533
        %p535 = pneg %p63
        %p536 = pneg %p60
        %s537 = sand.u32 %s76, 1
        %s538 = scalar_lea.sflag [#allocation7], %s537
        %s539 = sand.u32 %s76, 1
        %s540 = smul.addr %s539, 480
        %s541 = scalar_lea.vmem [#allocation6], %s540
        %p542 = pneg %p89
        %p543 = pneg %p86
        %p544 = scmp.lt.s32.totalorder %s32, 1
        %s545 = scalar_select %p544, %s32, 1
        %s546 = scalar_lea.vmem %s2, %s545
        %p547 = pneg %p115
        %p548 = pneg %p112
        %p549 = scmp.lt.s32.totalorder %s32, 1
        %s550 = scalar_select %p549, %s32, 1
        %s551 = smul.addr %s550, 160
        %s552 = smul.addr %s551, 4
        %s553 = scalar_lea.vmem %s3, %s552
        %p554 = pneg %p141
        %p555 = pneg %p138
        %p556 = scmp.lt.s32.totalorder %s32, 1
        %s557 = scalar_select %p556, %s32, 1
        %s558 = scalar_lea.vmem %s4, %s557
        %p559 = pneg %p167
        %p560 = pneg %p164
        %p561 = scmp.lt.s32.totalorder %s32, 1
        %s562 = scalar_select %p561, %s32, 1
        %s563 = smul.addr %s562, 80
        %s564 = smul.addr %s563, 4
        %s565 = scalar_lea.vmem %s5, %s564
        %p566 = pneg %p193
        %p567 = pneg %p190
        %p568 = scmp.lt.s32.totalorder %s32, 1
        %s569 = scalar_select %p568, %s32, 1
        %s570 = scalar_lea.vmem %s6, %s569
        %p571 = pneg %p219
        %p572 = pneg %p216
        %s573 = sand.u32 %s28, 1
        %s574 = scalar_lea.sflag [#allocation9], %s573
        %s575 = sand.u32 %s232, 1
        %s576 = smul.addr %s575, 64
        %s577 = scalar_lea.vmem [#allocation8], %s576
        %p578 = pneg %p245
        %p579 = pneg %p242
        %p580 = scmp.lt.s32.totalorder %s32, 1
        %s581 = scalar_select %p580, %s32, 1
        %s582 = scalar_lea.vmem %s8, %s581
        %p583 = pneg %p271
        %p584 = pneg %p268
        %s585 = sand.u32 %s28, 1
        %s586 = scalar_lea.sflag [#allocation9], %s585
        %s587 = sand.u32 %s284, 1
        %s588 = smul.addr %s587, 64
        %s589 = scalar_lea.vmem [#allocation10], %s588
        %p590 = pneg %p297
        %p591 = pneg %p294
        %p592 = scmp.lt.s32.totalorder %s32, 1
        %s593 = scalar_select %p592, %s32, 1
        %s594 = scalar_lea.vmem %s10, %s593
        %p595 = pneg %p323
        %p596 = pneg %p320
        %p597 = pneg %p351
        %p598 = pneg %p348
        %p599 = scmp.lt.s32.totalorder %s32, 1
        %s600 = scalar_select %p599, %s32, 1
        %p601 = scmp.lt.s32.totalorder %s33, 0
        %s602 = scalar_select %p601, %s33, 0
        %s603 = sadd.s32 %s602, %s600
        %s604 = smul.addr %s603, 2
        %s605 = scalar_lea.vmem %s11, %s604
        %s606 = smul.u32 8, %s33
        %p607 = scmp.lt.s32.totalorder %s32, 1
        %s608 = scalar_select %p607, %s32, 1
        %p609 = scmp.lt.s32.totalorder %s606, 7
        %s610 = scalar_select %p609, %s606, 7
        %s611 = smul.addr %s608, 8
        %s612 = sadd.s32 %s610, %s611
        %s613 = smul.addr %s612, 8
        %s614 = scalar_lea.vmem %s0, %s613
        %s615 = smul.u32 8, %s33
        %p616 = scmp.lt.s32.totalorder %s32, 1
        %s617 = scalar_select %p616, %s32, 1
        %s618 = scalar_lea.vmem %s2, %s617
        %p619 = scmp.lt.s32.totalorder %s32, 1
        %s620 = scalar_select %p619, %s32, 1
        %s621 = smul.addr %s620, 160
        %s622 = smul.addr %s621, 4
        %s623 = scalar_lea.vmem %s3, %s622
        %p624 = scmp.lt.s32.totalorder %s32, 1
        %s625 = scalar_select %p624, %s32, 1
        %s626 = scalar_lea.vmem %s4, %s625
        %p627 = scmp.lt.s32.totalorder %s32, 1
        %s628 = scalar_select %p627, %s32, 1
        %s629 = smul.addr %s628, 80
        %s630 = smul.addr %s629, 4
        %s631 = scalar_lea.vmem %s5, %s630
        %p632 = scmp.lt.s32.totalorder %s32, 1
        %s633 = scalar_select %p632, %s32, 1
        %s634 = scalar_lea.vmem %s6, %s633
        %p635 = scmp.lt.s32.totalorder %s32, 1
        %s636 = scalar_select %p635, %s32, 1
        %s637 = scalar_lea.vmem %s8, %s636
        %p638 = scmp.lt.s32.totalorder %s32, 1
        %s639 = scalar_select %p638, %s32, 1
        %s640 = scalar_lea.vmem %s10, %s639
        %p641 = scmp.lt.s32.totalorder %s32, 1
        %s642 = scalar_select %p641, %s32, 1
        %p643 = scmp.lt.s32.totalorder %s33, 0
        %s644 = scalar_select %p643, %s33, 0
        %s645 = sadd.s32 %s644, %s642
        %s646 = smul.addr %s645, 2
        %s647 = scalar_lea.vmem %s11, %s646
        %v649 = vld [vmem:[%s618] sm:$0x1]
        %v650 = vld [vmem:[%s614] sm:$0xff]
        %v651 = vld [vmem:[%s614 + $0x8] sm:$0xff]
        %v652 = vld [vmem:[%s614 + $0x10] sm:$0xff]
        %v653 = vld [vmem:[%s614 + $0x18] sm:$0xff]
        %v654 = vld [vmem:[%s614 + $0x20] sm:$0xff]
        %v655 = vld [vmem:[%s614 + $0x28] sm:$0xff]
        %v656 = vld [vmem:[%s614 + $0x30] sm:$0xff]
        %v657 = vld [vmem:[%s614 + $0x38] sm:$0xf]
        %v658 = vpack.c.bf16 %v651, %v650
        %v659 = vpack.c.bf16 %v653, %v652
        %v660 = vpack.c.bf16 %v655, %v654
        %v661 = vpack.c.bf16 %v657, %v656
        %v662 = vld [vmem:[%s503] sm:$0xff]
        %v663 = vld [vmem:[%s503 + $0x8] sm:$0xff]
        %v664 = vld [vmem:[%s503 + $0x10] sm:$0xff]
        %v665 = vld [vmem:[%s503 + $0x18] sm:$0xff]
        %v666 = vld [vmem:[%s503 + $0x20] sm:$0xff]
        %v667 = vld [vmem:[%s503 + $0x28] sm:$0xff]
        %v668 = vld [vmem:[%s503 + $0x30] sm:$0xff]
        %v669 = vld [vmem:[%s503 + $0x38] sm:$0xff]
        %v670 = vld [vmem:[%s503 + $0x40] sm:$0xff]
        %v671 = vld [vmem:[%s503 + $0x48] sm:$0xff]
        %v672 = vld [vmem:[%s503 + $0x50] sm:$0xff]
        %v673 = vld [vmem:[%s503 + $0x58] sm:$0xff]
        %v674 = vld [vmem:[%s614 + $0x1] sm:$0xff]
        %v675 = vld [vmem:[%s614 + $0x9] sm:$0xff]
        %v676 = vld [vmem:[%s614 + $0x11] sm:$0xff]
        %v677 = vld [vmem:[%s614 + $0x19] sm:$0xff]
        %v678 = vld [vmem:[%s614 + $0x21] sm:$0xff]
        %v679 = vld [vmem:[%s614 + $0x29] sm:$0xff]
        %v680 = vld [vmem:[%s614 + $0x31] sm:$0xff]
        %v681 = vld [vmem:[%s614 + $0x39] sm:$0xf]
        %v682 = vpack.c.bf16 %v675, %v674
        %v683 = vpack.c.bf16 %v677, %v676
        %v684 = vpack.c.bf16 %v679, %v678
        %v685 = vpack.c.bf16 %v681, %v680
        %s686 = scalar_lea.vmem %s503, 96 [#allocation6]
        %v687 = vld [vmem:[%s686] sm:$0xff]
        %v688 = vld [vmem:[%s686 + $0x8] sm:$0xff]
        %v689 = vld [vmem:[%s686 + $0x10] sm:$0xff]
        %v690 = vld [vmem:[%s686 + $0x18] sm:$0xff]
        %v691 = vld [vmem:[%s686 + $0x20] sm:$0xff]
        %v692 = vld [vmem:[%s686 + $0x28] sm:$0xff]
        %v693 = vld [vmem:[%s686 + $0x30] sm:$0xff]
        %v694 = vld [vmem:[%s686 + $0x38] sm:$0xff]
        %v695 = vld [vmem:[%s686 + $0x40] sm:$0xff]
        %v696 = vld [vmem:[%s686 + $0x48] sm:$0xff]
        %v697 = vld [vmem:[%s686 + $0x50] sm:$0xff]
        %v698 = vld [vmem:[%s686 + $0x58] sm:$0xff]
        %v711 = vunpack.c.l.b16 %v687
        %v712 = vunpack.c.h.b16 %v687
        %v713 = vunpack.c.l.b16 %v688
        %v714 = vunpack.c.h.b16 %v688
        %v715 = vunpack.c.l.b16 %v689
        %v716 = vunpack.c.h.b16 %v689
        %v717 = vunpack.c.l.b16 %v690
        %v718 = vunpack.c.h.b16 %v690
        %v719 = vunpack.c.l.b16 %v691
        %v720 = vunpack.c.h.b16 %v691
        %v721 = vunpack.c.l.b16 %v692
        %v722 = vunpack.c.h.b16 %v692
        %v723 = vunpack.c.l.b16 %v693
        %v724 = vunpack.c.h.b16 %v693
        %v725 = vunpack.c.l.b16 %v694
        %v726 = vunpack.c.h.b16 %v694
        %v727 = vunpack.c.l.b16 %v695
        %v728 = vunpack.c.h.b16 %v695
        %v729 = vunpack.c.l.b16 %v696
        %v730 = vunpack.c.h.b16 %v696
        %v731 = vunpack.c.l.b16 %v697
        %v732 = vunpack.c.h.b16 %v697
        %v733 = vunpack.c.l.b16 %v698
        %v734 = vunpack.c.h.b16 %v698
        %v735 = vpack.c.b16 %v713, %v711
        %v736 = vpack.c.b16 %v714, %v712
        %v737 = vpack.c.b16 %v717, %v715
        %v738 = vpack.c.b16 %v718, %v716
        %v739 = vpack.c.b16 %v721, %v719
        %v740 = vpack.c.b16 %v722, %v720
        %v741 = vpack.c.b16 %v725, %v723
        %v742 = vpack.c.b16 %v726, %v724
        %v743 = vpack.c.b16 %v729, %v727
        %v744 = vpack.c.b16 %v730, %v728
        %v745 = vpack.c.b16 %v733, %v731
        %v746 = vpack.c.b16 %v734, %v732
        %vm759 = vcmask 785408
        %v761 = vsel %vm759, %v682, 0
        %v764 = vsel %vm759, %v683, 0
        %v767 = vsel %vm759, %v684, 0
        %v770 = vsel %vm759, %v685, 0
        %772 = vmatprep.subr.bf16.mxu0 0
        %773 = vmatpush1.bf16.msra.mxu0 0
        %774 = vmatprep.subr.bf16.mxu0 0
        %775 = vmatpush1.bf16.msra.mxu0 0
        %776 = vmatprep.subr.bf16.mxu0 %v746
        %777 = vmatpush1.bf16.msra.mxu0 %v745
        %778 = vmatprep.subr.bf16.mxu0 %v744
        %779 = vmatpush1.bf16.msra.mxu0 %v743
        %780 = vmatprep.subr.bf16.mxu0 %v742
        %781 = vmatpush1.bf16.msra.mxu0 %v741
        %782 = vmatprep.subr.bf16.mxu0 %v740
        %783 = vmatpush1.bf16.msra.mxu0 %v739
        %784 = vmatprep.subr.bf16.mxu0 %v738
        %785 = vmatpush1.bf16.msra.mxu0 %v737
        %786 = vmatprep.subr.bf16.mxu0 %v736
        %787 = vmatpush1.bf16.msra.mxu0 %v735
        %788 = vmatprep.subr.bf16.mxu0 0
        %789 = vmatpush2.bf16.msra.mxu0 0
        %790 = vmatprep.subr.bf16.mxu0 0
        %791 = vmatpush2.bf16.msra.mxu0 0
        %792 = vmatprep.subr.bf16.mxu0 0
        %793 = vmatpush2.bf16.msra.mxu0 0
        %794 = vmatprep.subr.bf16.mxu0 0
        %795 = vmatpush2.bf16.msra.mxu0 0
        %796 = vmatprep.subr.bf16.mxu0 0
        %797 = vmatpush2.bf16.msra.mxu0 0
        %798 = vmatprep.subr.bf16.mxu0 0
        %799 = vmatpush2.bf16.msra.mxu0 0
        %800 = vmatprep.subr.bf16.mxu0 0
        %801 = vmatpush2.bf16.msra.mxu0 0
        %802 = vmatprep.subr.bf16.mxu0 0
        %803 = vmatpush2.bf16.msra.mxu0 0
        %804 = vmatprep.mubr.bf16.mxu0 0
        %805 = vmatmul.mubr.bf16.gmra.mxu0 %v761
        %v806 = vpop.f32.mrf.mxu0
        %v807 = vadd.f32 0.0, %v806
        %v808 = vpop.f32.mrf.mxu0
        %v809 = vadd.f32 0.0, %v808
        %v810 = vpop.f32.mrf.mxu0
        %v811 = vadd.f32 0.0, %v810
        %v812 = vpop.f32.mrf.mxu0
        %v813 = vadd.f32 0.0, %v812
        %814 = vmatprep.mubr.bf16.mxu0 0
        %815 = vmatmul.mubr.bf16.gmra.mxu0 %v764
        %v816 = vpop.f32.mrf.mxu0
        %v817 = vadd.f32 0.0, %v816
        %v818 = vpop.f32.mrf.mxu0
        %v819 = vadd.f32 0.0, %v818
        %v820 = vpop.f32.mrf.mxu0
        %v821 = vadd.f32 0.0, %v820
        %v822 = vpop.f32.mrf.mxu0
        %v823 = vadd.f32 0.0, %v822
        %824 = vmatprep.mubr.bf16.mxu0 0
        %825 = vmatmul.mubr.bf16.gmra.mxu0 %v767
        %v826 = vpop.f32.mrf.mxu0
        %v827 = vadd.f32 0.0, %v826
        %v828 = vpop.f32.mrf.mxu0
        %v829 = vadd.f32 0.0, %v828
        %v830 = vpop.f32.mrf.mxu0
        %v831 = vadd.f32 0.0, %v830
        %v832 = vpop.f32.mrf.mxu0
        %v833 = vadd.f32 0.0, %v832
        %834 = vmatprep.mubr.bf16.mxu0 0
        %835 = vmatmul.mubr.bf16.gmra.mxu0 %v770
        %v836 = vpop.f32.mrf.mxu0
        %v837 = vadd.f32 0.0, %v836
        %v838 = vpop.f32.mrf.mxu0
        %v839 = vadd.f32 0.0, %v838
        %v840 = vpop.f32.mrf.mxu0
        %v841 = vadd.f32 0.0, %v840
        %v842 = vpop.f32.mrf.mxu0
        %v843 = vadd.f32 0.0, %v842
        %844 = vdwg.mxu0
        %v857 = vunpack.c.l.b16 %v662
        %v858 = vunpack.c.h.b16 %v662
        %v859 = vunpack.c.l.b16 %v663
        %v860 = vunpack.c.h.b16 %v663
        %v861 = vunpack.c.l.b16 %v664
        %v862 = vunpack.c.h.b16 %v664
        %v863 = vunpack.c.l.b16 %v665
        %v864 = vunpack.c.h.b16 %v665
        %v865 = vunpack.c.l.b16 %v666
        %v866 = vunpack.c.h.b16 %v666
        %v867 = vunpack.c.l.b16 %v667
        %v868 = vunpack.c.h.b16 %v667
        %v869 = vunpack.c.l.b16 %v668
        %v870 = vunpack.c.h.b16 %v668
        %v871 = vunpack.c.l.b16 %v669
        %v872 = vunpack.c.h.b16 %v669
        %v873 = vunpack.c.l.b16 %v670
        %v874 = vunpack.c.h.b16 %v670
        %v875 = vunpack.c.l.b16 %v671
        %v876 = vunpack.c.h.b16 %v671
        %v877 = vunpack.c.l.b16 %v672
        %v878 = vunpack.c.h.b16 %v672
        %v879 = vunpack.c.l.b16 %v673
        %v880 = vunpack.c.h.b16 %v673
        %v881 = vpack.c.b16 %v859, %v857
        %v882 = vpack.c.b16 %v860, %v858
        %v883 = vpack.c.b16 %v863, %v861
        %v884 = vpack.c.b16 %v864, %v862
        %v885 = vpack.c.b16 %v867, %v865
        %v886 = vpack.c.b16 %v868, %v866
        %v887 = vpack.c.b16 %v871, %v869
        %v888 = vpack.c.b16 %v872, %v870
        %v889 = vpack.c.b16 %v875, %v873
        %v890 = vpack.c.b16 %v876, %v874
        %v891 = vpack.c.b16 %v879, %v877
        %v892 = vpack.c.b16 %v880, %v878
        %v906 = vsel %vm759, %v658, 0
        %v909 = vsel %vm759, %v659, 0
        %v912 = vsel %vm759, %v660, 0
        %v915 = vsel %vm759, %v661, 0
        %917 = vmatprep.subr.bf16.mxu0 0
        %918 = vmatpush1.bf16.msra.mxu0 0
        %919 = vmatprep.subr.bf16.mxu0 0
        %920 = vmatpush1.bf16.msra.mxu0 0
        %921 = vmatprep.subr.bf16.mxu0 %v892
        %922 = vmatpush1.bf16.msra.mxu0 %v891
        %923 = vmatprep.subr.bf16.mxu0 %v890
        %924 = vmatpush1.bf16.msra.mxu0 %v889
        %925 = vmatprep.subr.bf16.mxu0 %v888
        %926 = vmatpush1.bf16.msra.mxu0 %v887
        %927 = vmatprep.subr.bf16.mxu0 %v886
        %928 = vmatpush1.bf16.msra.mxu0 %v885
        %929 = vmatprep.subr.bf16.mxu0 %v884
        %930 = vmatpush1.bf16.msra.mxu0 %v883
        %931 = vmatprep.subr.bf16.mxu0 %v882
        %932 = vmatpush1.bf16.msra.mxu0 %v881
        %933 = vmatprep.subr.bf16.mxu0 0
        %934 = vmatpush2.bf16.msra.mxu0 0
        %935 = vmatprep.subr.bf16.mxu0 0
        %936 = vmatpush2.bf16.msra.mxu0 0
        %937 = vmatprep.subr.bf16.mxu0 0
        %938 = vmatpush2.bf16.msra.mxu0 0
        %939 = vmatprep.subr.bf16.mxu0 0
        %940 = vmatpush2.bf16.msra.mxu0 0
        %941 = vmatprep.subr.bf16.mxu0 0
        %942 = vmatpush2.bf16.msra.mxu0 0
        %943 = vmatprep.subr.bf16.mxu0 0
        %944 = vmatpush2.bf16.msra.mxu0 0
        %945 = vmatprep.subr.bf16.mxu0 0
        %946 = vmatpush2.bf16.msra.mxu0 0
        %947 = vmatprep.subr.bf16.mxu0 0
        %948 = vmatpush2.bf16.msra.mxu0 0
        %949 = vmatprep.mubr.bf16.mxu0 0
        %950 = vmatmul.mubr.bf16.gmra.mxu0 %v906
        %v951 = vpop.f32.mrf.mxu0
        %v952 = vadd.f32 %v807, %v951
        %v953 = vpop.f32.mrf.mxu0
        %v954 = vadd.f32 %v809, %v953
        %v955 = vpop.f32.mrf.mxu0
        %v956 = vadd.f32 %v811, %v955
        %v957 = vpop.f32.mrf.mxu0
        %v958 = vadd.f32 %v813, %v957
        %959 = vmatprep.mubr.bf16.mxu0 0
        %960 = vmatmul.mubr.bf16.gmra.mxu0 %v909
        %v961 = vpop.f32.mrf.mxu0
        %v962 = vadd.f32 %v817, %v961
        %v963 = vpop.f32.mrf.mxu0
        %v964 = vadd.f32 %v819, %v963
        %v965 = vpop.f32.mrf.mxu0
        %v966 = vadd.f32 %v821, %v965
        %v967 = vpop.f32.mrf.mxu0
        %v968 = vadd.f32 %v823, %v967
        %969 = vmatprep.mubr.bf16.mxu0 0
        %970 = vmatmul.mubr.bf16.gmra.mxu0 %v912
        %v971 = vpop.f32.mrf.mxu0
        %v972 = vadd.f32 %v827, %v971
        %v973 = vpop.f32.mrf.mxu0
        %v974 = vadd.f32 %v829, %v973
        %v975 = vpop.f32.mrf.mxu0
        %v976 = vadd.f32 %v831, %v975
        %v977 = vpop.f32.mrf.mxu0
        %v978 = vadd.f32 %v833, %v977
        %979 = vmatprep.mubr.bf16.mxu0 0
        %980 = vmatmul.mubr.bf16.gmra.mxu0 %v915
        %v981 = vpop.f32.mrf.mxu0
        %v982 = vadd.f32 %v837, %v981
        %v983 = vpop.f32.mrf.mxu0
        %v984 = vadd.f32 %v839, %v983
        %v985 = vpop.f32.mrf.mxu0
        %v986 = vadd.f32 %v841, %v985
        %v987 = vpop.f32.mrf.mxu0
        %v988 = vadd.f32 %v843, %v987
        %989 = vdwg.mxu0
        %v990 = vld [vmem:[%s614 + $0x2] sm:$0xff]
        %v991 = vld [vmem:[%s614 + $0xa] sm:$0xff]
        %v992 = vld [vmem:[%s614 + $0x12] sm:$0xff]
        %v993 = vld [vmem:[%s614 + $0x1a] sm:$0xff]
        %v994 = vld [vmem:[%s614 + $0x22] sm:$0xff]
        %v995 = vld [vmem:[%s614 + $0x2a] sm:$0xff]
        %v996 = vld [vmem:[%s614 + $0x32] sm:$0xff]
        %v997 = vld [vmem:[%s614 + $0x3a] sm:$0xf]
        %v998 = vpack.c.bf16 %v991, %v990
        %v999 = vpack.c.bf16 %v993, %v992
        %v1000 = vpack.c.bf16 %v995, %v994
        %v1001 = vpack.c.bf16 %v997, %v996
        %s1002 = scalar_lea.vmem %s503, 192 [#allocation6]
        %v1003 = vld [vmem:[%s1002] sm:$0xff]
        %v1004 = vld [vmem:[%s1002 + $0x8] sm:$0xff]
        %v1005 = vld [vmem:[%s1002 + $0x10] sm:$0xff]
        %v1006 = vld [vmem:[%s1002 + $0x18] sm:$0xff]
        %v1007 = vld [vmem:[%s1002 + $0x20] sm:$0xff]
        %v1008 = vld [vmem:[%s1002 + $0x28] sm:$0xff]
        %v1009 = vld [vmem:[%s1002 + $0x30] sm:$0xff]
        %v1010 = vld [vmem:[%s1002 + $0x38] sm:$0xff]
        %v1011 = vld [vmem:[%s1002 + $0x40] sm:$0xff]
        %v1012 = vld [vmem:[%s1002 + $0x48] sm:$0xff]
        %v1013 = vld [vmem:[%s1002 + $0x50] sm:$0xff]
        %v1014 = vld [vmem:[%s1002 + $0x58] sm:$0xff]
        %v1027 = vunpack.c.l.b16 %v1003
        %v1028 = vunpack.c.h.b16 %v1003
        %v1029 = vunpack.c.l.b16 %v1004
        %v1030 = vunpack.c.h.b16 %v1004
        %v1031 = vunpack.c.l.b16 %v1005
        %v1032 = vunpack.c.h.b16 %v1005
        %v1033 = vunpack.c.l.b16 %v1006
        %v1034 = vunpack.c.h.b16 %v1006
        %v1035 = vunpack.c.l.b16 %v1007
        %v1036 = vunpack.c.h.b16 %v1007
        %v1037 = vunpack.c.l.b16 %v1008
        %v1038 = vunpack.c.h.b16 %v1008
        %v1039 = vunpack.c.l.b16 %v1009
        %v1040 = vunpack.c.h.b16 %v1009
        %v1041 = vunpack.c.l.b16 %v1010
        %v1042 = vunpack.c.h.b16 %v1010
        %v1043 = vunpack.c.l.b16 %v1011
        %v1044 = vunpack.c.h.b16 %v1011
        %v1045 = vunpack.c.l.b16 %v1012
        %v1046 = vunpack.c.h.b16 %v1012
        %v1047 = vunpack.c.l.b16 %v1013
        %v1048 = vunpack.c.h.b16 %v1013
        %v1049 = vunpack.c.l.b16 %v1014
        %v1050 = vunpack.c.h.b16 %v1014
        %v1051 = vpack.c.b16 %v1029, %v1027
        %v1052 = vpack.c.b16 %v1030, %v1028
        %v1053 = vpack.c.b16 %v1033, %v1031
        %v1054 = vpack.c.b16 %v1034, %v1032
        %v1055 = vpack.c.b16 %v1037, %v1035
        %v1056 = vpack.c.b16 %v1038, %v1036
        %v1057 = vpack.c.b16 %v1041, %v1039
        %v1058 = vpack.c.b16 %v1042, %v1040
        %v1059 = vpack.c.b16 %v1045, %v1043
        %v1060 = vpack.c.b16 %v1046, %v1044
        %v1061 = vpack.c.b16 %v1049, %v1047
        %v1062 = vpack.c.b16 %v1050, %v1048
        %v1076 = vsel %vm759, %v998, 0
        %v1079 = vsel %vm759, %v999, 0
        %v1082 = vsel %vm759, %v1000, 0
        %v1085 = vsel %vm759, %v1001, 0
        %1087 = vmatprep.subr.bf16.mxu0 0
        %1088 = vmatpush1.bf16.msra.mxu0 0
        %1089 = vmatprep.subr.bf16.mxu0 0
        %1090 = vmatpush1.bf16.msra.mxu0 0
        %1091 = vmatprep.subr.bf16.mxu0 %v1062
        %1092 = vmatpush1.bf16.msra.mxu0 %v1061
        %1093 = vmatprep.subr.bf16.mxu0 %v1060
        %1094 = vmatpush1.bf16.msra.mxu0 %v1059
        %1095 = vmatprep.subr.bf16.mxu0 %v1058
        %1096 = vmatpush1.bf16.msra.mxu0 %v1057
        %1097 = vmatprep.subr.bf16.mxu0 %v1056
        %1098 = vmatpush1.bf16.msra.mxu0 %v1055
        %1099 = vmatprep.subr.bf16.mxu0 %v1054
        %1100 = vmatpush1.bf16.msra.mxu0 %v1053
        %1101 = vmatprep.subr.bf16.mxu0 %v1052
        %1102 = vmatpush1.bf16.msra.mxu0 %v1051
        %1103 = vmatprep.subr.bf16.mxu0 0
        %1104 = vmatpush2.bf16.msra.mxu0 0
        %1105 = vmatprep.subr.bf16.mxu0 0
        %1106 = vmatpush2.bf16.msra.mxu0 0
        %1107 = vmatprep.subr.bf16.mxu0 0
        %1108 = vmatpush2.bf16.msra.mxu0 0
        %1109 = vmatprep.subr.bf16.mxu0 0
        %1110 = vmatpush2.bf16.msra.mxu0 0
        %1111 = vmatprep.subr.bf16.mxu0 0
        %1112 = vmatpush2.bf16.msra.mxu0 0
        %1113 = vmatprep.subr.bf16.mxu0 0
        %1114 = vmatpush2.bf16.msra.mxu0 0
        %1115 = vmatprep.subr.bf16.mxu0 0
        %1116 = vmatpush2.bf16.msra.mxu0 0
        %1117 = vmatprep.subr.bf16.mxu0 0
        %1118 = vmatpush2.bf16.msra.mxu0 0
        %1119 = vmatprep.mubr.bf16.mxu0 0
        %1120 = vmatmul.mubr.bf16.gmra.mxu0 %v1076
        %v1121 = vpop.f32.mrf.mxu0
        %v1122 = vadd.f32 0.0, %v1121
        %v1123 = vpop.f32.mrf.mxu0
        %v1124 = vadd.f32 0.0, %v1123
        %v1125 = vpop.f32.mrf.mxu0
        %v1126 = vadd.f32 0.0, %v1125
        %v1127 = vpop.f32.mrf.mxu0
        %v1128 = vadd.f32 0.0, %v1127
        %1129 = vmatprep.mubr.bf16.mxu0 0
        %1130 = vmatmul.mubr.bf16.gmra.mxu0 %v1079
        %v1131 = vpop.f32.mrf.mxu0
        %v1132 = vadd.f32 0.0, %v1131
        %v1133 = vpop.f32.mrf.mxu0
        %v1134 = vadd.f32 0.0, %v1133
        %v1135 = vpop.f32.mrf.mxu0
        %v1136 = vadd.f32 0.0, %v1135
        %v1137 = vpop.f32.mrf.mxu0
        %v1138 = vadd.f32 0.0, %v1137
        %1139 = vmatprep.mubr.bf16.mxu0 0
        %1140 = vmatmul.mubr.bf16.gmra.mxu0 %v1082
        %v1141 = vpop.f32.mrf.mxu0
        %v1142 = vadd.f32 0.0, %v1141
        %v1143 = vpop.f32.mrf.mxu0
        %v1144 = vadd.f32 0.0, %v1143
        %v1145 = vpop.f32.mrf.mxu0
        %v1146 = vadd.f32 0.0, %v1145
        %v1147 = vpop.f32.mrf.mxu0
        %v1148 = vadd.f32 0.0, %v1147
        %1149 = vmatprep.mubr.bf16.mxu0 0
        %1150 = vmatmul.mubr.bf16.gmra.mxu0 %v1085
        %v1151 = vpop.f32.mrf.mxu0
        %v1152 = vadd.f32 0.0, %v1151
        %v1153 = vpop.f32.mrf.mxu0
        %v1154 = vadd.f32 0.0, %v1153
        %v1155 = vpop.f32.mrf.mxu0
        %v1156 = vadd.f32 0.0, %v1155
        %v1157 = vpop.f32.mrf.mxu0
        %v1158 = vadd.f32 0.0, %v1157
        %1159 = vdwg.mxu0
        %v1160 = vadd.f32 %v952, %v1122
        %v1161 = vadd.f32 %v954, %v1124
        %v1162 = vadd.f32 %v956, %v1126
        %v1163 = vadd.f32 %v958, %v1128
        %v1164 = vadd.f32 %v962, %v1132
        %v1165 = vadd.f32 %v964, %v1134
        %v1166 = vadd.f32 %v966, %v1136
        %v1167 = vadd.f32 %v968, %v1138
        %v1168 = vadd.f32 %v972, %v1142
        %v1169 = vadd.f32 %v974, %v1144
        %v1170 = vadd.f32 %v976, %v1146
        %v1171 = vadd.f32 %v978, %v1148
        %v1172 = vadd.f32 %v982, %v1152
        %v1173 = vadd.f32 %v984, %v1154
        %v1174 = vadd.f32 %v986, %v1156
        %v1175 = vadd.f32 %v988, %v1158
        %v1176 = vld [vmem:[%s614 + $0x3] sm:$0xff]
        %v1177 = vld [vmem:[%s614 + $0xb] sm:$0xff]
        %v1178 = vld [vmem:[%s614 + $0x13] sm:$0xff]
        %v1179 = vld [vmem:[%s614 + $0x1b] sm:$0xff]
        %v1180 = vld [vmem:[%s614 + $0x23] sm:$0xff]
        %v1181 = vld [vmem:[%s614 + $0x2b] sm:$0xff]
        %v1182 = vld [vmem:[%s614 + $0x33] sm:$0xff]
        %v1183 = vld [vmem:[%s614 + $0x3b] sm:$0xf]
        %v1184 = vpack.c.bf16 %v1177, %v1176
        %v1185 = vpack.c.bf16 %v1179, %v1178
        %v1186 = vpack.c.bf16 %v1181, %v1180
        %v1187 = vpack.c.bf16 %v1183, %v1182
        %s1188 = scalar_lea.vmem %s503, 288 [#allocation6]
        %v1189 = vld [vmem:[%s1188] sm:$0xff]
        %v1190 = vld [vmem:[%s1188 + $0x8] sm:$0xff]
        %v1191 = vld [vmem:[%s1188 + $0x10] sm:$0xff]
        %v1192 = vld [vmem:[%s1188 + $0x18] sm:$0xff]
        %v1193 = vld [vmem:[%s1188 + $0x20] sm:$0xff]
        %v1194 = vld [vmem:[%s1188 + $0x28] sm:$0xff]
        %v1195 = vld [vmem:[%s1188 + $0x30] sm:$0xff]
        %v1196 = vld [vmem:[%s1188 + $0x38] sm:$0xff]
        %v1197 = vld [vmem:[%s1188 + $0x40] sm:$0xff]
        %v1198 = vld [vmem:[%s1188 + $0x48] sm:$0xff]
        %v1199 = vld [vmem:[%s1188 + $0x50] sm:$0xff]
        %v1200 = vld [vmem:[%s1188 + $0x58] sm:$0xff]
        %v1213 = vunpack.c.l.b16 %v1189
        %v1214 = vunpack.c.h.b16 %v1189
        %v1215 = vunpack.c.l.b16 %v1190
        %v1216 = vunpack.c.h.b16 %v1190
        %v1217 = vunpack.c.l.b16 %v1191
        %v1218 = vunpack.c.h.b16 %v1191
        %v1219 = vunpack.c.l.b16 %v1192
        %v1220 = vunpack.c.h.b16 %v1192
        %v1221 = vunpack.c.l.b16 %v1193
        %v1222 = vunpack.c.h.b16 %v1193
        %v1223 = vunpack.c.l.b16 %v1194
        %v1224 = vunpack.c.h.b16 %v1194
        %v1225 = vunpack.c.l.b16 %v1195
        %v1226 = vunpack.c.h.b16 %v1195
        %v1227 = vunpack.c.l.b16 %v1196
        %v1228 = vunpack.c.h.b16 %v1196
        %v1229 = vunpack.c.l.b16 %v1197
        %v1230 = vunpack.c.h.b16 %v1197
        %v1231 = vunpack.c.l.b16 %v1198
        %v1232 = vunpack.c.h.b16 %v1198
        %v1233 = vunpack.c.l.b16 %v1199
        %v1234 = vunpack.c.h.b16 %v1199
        %v1235 = vunpack.c.l.b16 %v1200
        %v1236 = vunpack.c.h.b16 %v1200
        %v1237 = vpack.c.b16 %v1215, %v1213
        %v1238 = vpack.c.b16 %v1216, %v1214
        %v1239 = vpack.c.b16 %v1219, %v1217
        %v1240 = vpack.c.b16 %v1220, %v1218
        %v1241 = vpack.c.b16 %v1223, %v1221
        %v1242 = vpack.c.b16 %v1224, %v1222
        %v1243 = vpack.c.b16 %v1227, %v1225
        %v1244 = vpack.c.b16 %v1228, %v1226
        %v1245 = vpack.c.b16 %v1231, %v1229
        %v1246 = vpack.c.b16 %v1232, %v1230
        %v1247 = vpack.c.b16 %v1235, %v1233
        %v1248 = vpack.c.b16 %v1236, %v1234
        %v1262 = vsel %vm759, %v1184, 0
        %v1265 = vsel %vm759, %v1185, 0
        %v1268 = vsel %vm759, %v1186, 0
        %v1271 = vsel %vm759, %v1187, 0
        %1273 = vmatprep.subr.bf16.mxu0 0
        %1274 = vmatpush1.bf16.msra.mxu0 0
        %1275 = vmatprep.subr.bf16.mxu0 0
        %1276 = vmatpush1.bf16.msra.mxu0 0
        %1277 = vmatprep.subr.bf16.mxu0 %v1248
        %1278 = vmatpush1.bf16.msra.mxu0 %v1247
        %1279 = vmatprep.subr.bf16.mxu0 %v1246
        %1280 = vmatpush1.bf16.msra.mxu0 %v1245
        %1281 = vmatprep.subr.bf16.mxu0 %v1244
        %1282 = vmatpush1.bf16.msra.mxu0 %v1243
        %1283 = vmatprep.subr.bf16.mxu0 %v1242
        %1284 = vmatpush1.bf16.msra.mxu0 %v1241
        %1285 = vmatprep.subr.bf16.mxu0 %v1240
        %1286 = vmatpush1.bf16.msra.mxu0 %v1239
        %1287 = vmatprep.subr.bf16.mxu0 %v1238
        %1288 = vmatpush1.bf16.msra.mxu0 %v1237
        %1289 = vmatprep.subr.bf16.mxu0 0
        %1290 = vmatpush2.bf16.msra.mxu0 0
        %1291 = vmatprep.subr.bf16.mxu0 0
        %1292 = vmatpush2.bf16.msra.mxu0 0
        %1293 = vmatprep.subr.bf16.mxu0 0
        %1294 = vmatpush2.bf16.msra.mxu0 0
        %1295 = vmatprep.subr.bf16.mxu0 0
        %1296 = vmatpush2.bf16.msra.mxu0 0
        %1297 = vmatprep.subr.bf16.mxu0 0
        %1298 = vmatpush2.bf16.msra.mxu0 0
        %1299 = vmatprep.subr.bf16.mxu0 0
        %1300 = vmatpush2.bf16.msra.mxu0 0
        %1301 = vmatprep.subr.bf16.mxu0 0
        %1302 = vmatpush2.bf16.msra.mxu0 0
        %1303 = vmatprep.subr.bf16.mxu0 0
        %1304 = vmatpush2.bf16.msra.mxu0 0
        %1305 = vmatprep.mubr.bf16.mxu0 0
        %1306 = vmatmul.mubr.bf16.gmra.mxu0 %v1262
        %v1307 = vpop.f32.mrf.mxu0
        %v1308 = vadd.f32 0.0, %v1307
        %v1309 = vpop.f32.mrf.mxu0
        %v1310 = vadd.f32 0.0, %v1309
        %v1311 = vpop.f32.mrf.mxu0
        %v1312 = vadd.f32 0.0, %v1311
        %v1313 = vpop.f32.mrf.mxu0
        %v1314 = vadd.f32 0.0, %v1313
        %1315 = vmatprep.mubr.bf16.mxu0 0
        %1316 = vmatmul.mubr.bf16.gmra.mxu0 %v1265
        %v1317 = vpop.f32.mrf.mxu0
        %v1318 = vadd.f32 0.0, %v1317
        %v1319 = vpop.f32.mrf.mxu0
        %v1320 = vadd.f32 0.0, %v1319
        %v1321 = vpop.f32.mrf.mxu0
        %v1322 = vadd.f32 0.0, %v1321
        %v1323 = vpop.f32.mrf.mxu0
        %v1324 = vadd.f32 0.0, %v1323
        %1325 = vmatprep.mubr.bf16.mxu0 0
        %1326 = vmatmul.mubr.bf16.gmra.mxu0 %v1268
        %v1327 = vpop.f32.mrf.mxu0
        %v1328 = vadd.f32 0.0, %v1327
        %v1329 = vpop.f32.mrf.mxu0
        %v1330 = vadd.f32 0.0, %v1329
        %v1331 = vpop.f32.mrf.mxu0
        %v1332 = vadd.f32 0.0, %v1331
        %v1333 = vpop.f32.mrf.mxu0
        %v1334 = vadd.f32 0.0, %v1333
        %1335 = vmatprep.mubr.bf16.mxu0 0
        %1336 = vmatmul.mubr.bf16.gmra.mxu0 %v1271
        %v1337 = vpop.f32.mrf.mxu0
        %v1338 = vadd.f32 0.0, %v1337
        %v1339 = vpop.f32.mrf.mxu0
        %v1340 = vadd.f32 0.0, %v1339
        %v1341 = vpop.f32.mrf.mxu0
        %v1342 = vadd.f32 0.0, %v1341
        %v1343 = vpop.f32.mrf.mxu0
        %v1344 = vadd.f32 0.0, %v1343
        %1345 = vdwg.mxu0
        %v1346 = vadd.f32 %v1160, %v1308
        %v1347 = vadd.f32 %v1161, %v1310
        %v1348 = vadd.f32 %v1162, %v1312
        %v1349 = vadd.f32 %v1163, %v1314
        %v1350 = vadd.f32 %v1164, %v1318
        %v1351 = vadd.f32 %v1165, %v1320
        %v1352 = vadd.f32 %v1166, %v1322
        %v1353 = vadd.f32 %v1167, %v1324
        %v1354 = vadd.f32 %v1168, %v1328
        %v1355 = vadd.f32 %v1169, %v1330
        %v1356 = vadd.f32 %v1170, %v1332
        %v1357 = vadd.f32 %v1171, %v1334
        %v1358 = vadd.f32 %v1172, %v1338
        %v1359 = vadd.f32 %v1173, %v1340
        %v1360 = vadd.f32 %v1174, %v1342
        %v1361 = vadd.f32 %v1175, %v1344
        %v1362 = vld [vmem:[%s614 + $0x4] sm:$0xff]
        %v1363 = vld [vmem:[%s614 + $0xc] sm:$0xff]
        %v1364 = vld [vmem:[%s614 + $0x14] sm:$0xff]
        %v1365 = vld [vmem:[%s614 + $0x1c] sm:$0xff]
        %v1366 = vld [vmem:[%s614 + $0x24] sm:$0xff]
        %v1367 = vld [vmem:[%s614 + $0x2c] sm:$0xff]
        %v1368 = vld [vmem:[%s614 + $0x34] sm:$0xff]
        %v1369 = vld [vmem:[%s614 + $0x3c] sm:$0xf]
        %v1370 = vpack.c.bf16 %v1363, %v1362
        %v1371 = vpack.c.bf16 %v1365, %v1364
        %v1372 = vpack.c.bf16 %v1367, %v1366
        %v1373 = vpack.c.bf16 %v1369, %v1368
        %s1374 = scalar_lea.vmem %s503, 384 [#allocation6]
        %v1375 = vld [vmem:[%s1374] sm:$0xff]
        %v1376 = vld [vmem:[%s1374 + $0x8] sm:$0xff]
        %v1377 = vld [vmem:[%s1374 + $0x10] sm:$0xff]
        %v1378 = vld [vmem:[%s1374 + $0x18] sm:$0xff]
        %v1379 = vld [vmem:[%s1374 + $0x20] sm:$0xff]
        %v1380 = vld [vmem:[%s1374 + $0x28] sm:$0xff]
        %v1381 = vld [vmem:[%s1374 + $0x30] sm:$0xff]
        %v1382 = vld [vmem:[%s1374 + $0x38] sm:$0xff]
        %v1383 = vld [vmem:[%s1374 + $0x40] sm:$0xff]
        %v1384 = vld [vmem:[%s1374 + $0x48] sm:$0xff]
        %v1385 = vld [vmem:[%s1374 + $0x50] sm:$0xff]
        %v1386 = vld [vmem:[%s1374 + $0x58] sm:$0xff]
        %v1399 = vunpack.c.l.b16 %v1375
        %v1400 = vunpack.c.h.b16 %v1375
        %v1401 = vunpack.c.l.b16 %v1376
        %v1402 = vunpack.c.h.b16 %v1376
        %v1403 = vunpack.c.l.b16 %v1377
        %v1404 = vunpack.c.h.b16 %v1377
        %v1405 = vunpack.c.l.b16 %v1378
        %v1406 = vunpack.c.h.b16 %v1378
        %v1407 = vunpack.c.l.b16 %v1379
        %v1408 = vunpack.c.h.b16 %v1379
        %v1409 = vunpack.c.l.b16 %v1380
        %v1410 = vunpack.c.h.b16 %v1380
        %v1411 = vunpack.c.l.b16 %v1381
        %v1412 = vunpack.c.h.b16 %v1381
        %v1413 = vunpack.c.l.b16 %v1382
        %v1414 = vunpack.c.h.b16 %v1382
        %v1415 = vunpack.c.l.b16 %v1383
        %v1416 = vunpack.c.h.b16 %v1383
        %v1417 = vunpack.c.l.b16 %v1384
        %v1418 = vunpack.c.h.b16 %v1384
        %v1419 = vunpack.c.l.b16 %v1385
        %v1420 = vunpack.c.h.b16 %v1385
        %v1421 = vunpack.c.l.b16 %v1386
        %v1422 = vunpack.c.h.b16 %v1386
        %v1423 = vpack.c.b16 %v1401, %v1399
        %v1424 = vpack.c.b16 %v1402, %v1400
        %v1425 = vpack.c.b16 %v1405, %v1403
        %v1426 = vpack.c.b16 %v1406, %v1404
        %v1427 = vpack.c.b16 %v1409, %v1407
        %v1428 = vpack.c.b16 %v1410, %v1408
        %v1429 = vpack.c.b16 %v1413, %v1411
        %v1430 = vpack.c.b16 %v1414, %v1412
        %v1431 = vpack.c.b16 %v1417, %v1415
        %v1432 = vpack.c.b16 %v1418, %v1416
        %v1433 = vpack.c.b16 %v1421, %v1419
        %v1434 = vpack.c.b16 %v1422, %v1420
        %v1448 = vsel %vm759, %v1370, 0
        %v1451 = vsel %vm759, %v1371, 0
        %v1454 = vsel %vm759, %v1372, 0
        %v1457 = vsel %vm759, %v1373, 0
        %1459 = vmatprep.subr.bf16.mxu0 0
        %1460 = vmatpush1.bf16.msra.mxu0 0
        %1461 = vmatprep.subr.bf16.mxu0 0
        %1462 = vmatpush1.bf16.msra.mxu0 0
        %1463 = vmatprep.subr.bf16.mxu0 %v1434
        %1464 = vmatpush1.bf16.msra.mxu0 %v1433
        %1465 = vmatprep.subr.bf16.mxu0 %v1432
        %1466 = vmatpush1.bf16.msra.mxu0 %v1431
        %1467 = vmatprep.subr.bf16.mxu0 %v1430
        %1468 = vmatpush1.bf16.msra.mxu0 %v1429
        %1469 = vmatprep.subr.bf16.mxu0 %v1428
        %1470 = vmatpush1.bf16.msra.mxu0 %v1427
        %1471 = vmatprep.subr.bf16.mxu0 %v1426
        %1472 = vmatpush1.bf16.msra.mxu0 %v1425
        %1473 = vmatprep.subr.bf16.mxu0 %v1424
        %1474 = vmatpush1.bf16.msra.mxu0 %v1423
        %1475 = vmatprep.subr.bf16.mxu0 0
        %1476 = vmatpush2.bf16.msra.mxu0 0
        %1477 = vmatprep.subr.bf16.mxu0 0
        %1478 = vmatpush2.bf16.msra.mxu0 0
        %1479 = vmatprep.subr.bf16.mxu0 0
        %1480 = vmatpush2.bf16.msra.mxu0 0
        %1481 = vmatprep.subr.bf16.mxu0 0
        %1482 = vmatpush2.bf16.msra.mxu0 0
        %1483 = vmatprep.subr.bf16.mxu0 0
        %1484 = vmatpush2.bf16.msra.mxu0 0
        %1485 = vmatprep.subr.bf16.mxu0 0
        %1486 = vmatpush2.bf16.msra.mxu0 0
        %1487 = vmatprep.subr.bf16.mxu0 0
        %1488 = vmatpush2.bf16.msra.mxu0 0
        %1489 = vmatprep.subr.bf16.mxu0 0
        %1490 = vmatpush2.bf16.msra.mxu0 0
        %1491 = vmatprep.mubr.bf16.mxu0 0
        %1492 = vmatmul.mubr.bf16.gmra.mxu0 %v1448
        %v1493 = vpop.f32.mrf.mxu0
        %v1494 = vadd.f32 0.0, %v1493
        %v1495 = vpop.f32.mrf.mxu0
        %v1496 = vadd.f32 0.0, %v1495
        %v1497 = vpop.f32.mrf.mxu0
        %v1498 = vadd.f32 0.0, %v1497
        %v1499 = vpop.f32.mrf.mxu0
        %v1500 = vadd.f32 0.0, %v1499
        %1501 = vmatprep.mubr.bf16.mxu0 0
        %1502 = vmatmul.mubr.bf16.gmra.mxu0 %v1451
        %v1503 = vpop.f32.mrf.mxu0
        %v1504 = vadd.f32 0.0, %v1503
        %v1505 = vpop.f32.mrf.mxu0
        %v1506 = vadd.f32 0.0, %v1505
        %v1507 = vpop.f32.mrf.mxu0
        %v1508 = vadd.f32 0.0, %v1507
        %v1509 = vpop.f32.mrf.mxu0
        %v1510 = vadd.f32 0.0, %v1509
        %1511 = vmatprep.mubr.bf16.mxu0 0
        %1512 = vmatmul.mubr.bf16.gmra.mxu0 %v1454
        %v1513 = vpop.f32.mrf.mxu0
        %v1514 = vadd.f32 0.0, %v1513
        %v1515 = vpop.f32.mrf.mxu0
        %v1516 = vadd.f32 0.0, %v1515
        %v1517 = vpop.f32.mrf.mxu0
        %v1518 = vadd.f32 0.0, %v1517
        %v1519 = vpop.f32.mrf.mxu0
        %v1520 = vadd.f32 0.0, %v1519
        %1521 = vmatprep.mubr.bf16.mxu0 0
        %1522 = vmatmul.mubr.bf16.gmra.mxu0 %v1457
        %v1523 = vpop.f32.mrf.mxu0
        %v1524 = vadd.f32 0.0, %v1523
        %v1525 = vpop.f32.mrf.mxu0
        %v1526 = vadd.f32 0.0, %v1525
        %v1527 = vpop.f32.mrf.mxu0
        %v1528 = vadd.f32 0.0, %v1527
        %v1529 = vpop.f32.mrf.mxu0
        %v1530 = vadd.f32 0.0, %v1529
        %1531 = vdwg.mxu0
        %v1532 = vadd.f32 %v1346, %v1494
        %v1533 = vadd.f32 %v1347, %v1496
        %v1534 = vadd.f32 %v1348, %v1498
        %v1535 = vadd.f32 %v1349, %v1500
        %v1536 = vadd.f32 %v1350, %v1504
        %v1537 = vadd.f32 %v1351, %v1506
        %v1538 = vadd.f32 %v1352, %v1508
        %v1539 = vadd.f32 %v1353, %v1510
        %v1540 = vadd.f32 %v1354, %v1514
        %v1541 = vadd.f32 %v1355, %v1516
        %v1542 = vadd.f32 %v1356, %v1518
        %v1543 = vadd.f32 %v1357, %v1520
        %v1544 = vadd.f32 %v1358, %v1524
        %v1545 = vadd.f32 %v1359, %v1526
        %v1546 = vadd.f32 %v1360, %v1528
        %v1547 = vadd.f32 %v1361, %v1530
        %v1548 = vmax.f32 %v1532, %v1533
        %v1549 = vmax.f32 %v1534, %v1535
        %v1550 = vmax.f32 %v1536, %v1537
        %v1551 = vmax.f32 %v1538, %v1539
        %v1552 = vmax.f32 %v1540, %v1541
        %v1553 = vmax.f32 %v1542, %v1543
        %v1554 = vmax.f32 %v1544, %v1545
        %v1555 = vmax.f32 %v1546, %v1547
        %v1557 = vlaneseq
        %v1558 = vshrl.u32 %v1557, 7
        %v1559 = vsub.s32 0, %v1558
        %v1560 = vrot.slane %v649, %v1559
        %v1562 = vadd.f32 %v1548, %v1560
        %v1563 = vadd.f32 %v1549, %v1560
        %v1564 = vadd.f32 %v1550, %v1560
        %v1565 = vadd.f32 %v1551, %v1560
        %v1566 = vadd.f32 %v1552, %v1560
        %v1567 = vadd.f32 %v1553, %v1560
        %v1568 = vadd.f32 %v1554, %v1560
        %v1569 = vadd.f32 %v1555, %v1560
        %v1570 = vmax.f32 %v1562, 0.0
        %v1571 = vmax.f32 %v1563, 0.0
        %v1572 = vmax.f32 %v1564, 0.0
        %v1573 = vmax.f32 %v1565, 0.0
        %v1574 = vmax.f32 %v1566, 0.0
        %v1575 = vmax.f32 %v1567, 0.0
        %v1576 = vmax.f32 %v1568, 0.0
        %v1577 = vmax.f32 %v1569, 0.0
        %1578 = vst [vmem:[#allocation2] sm:$0xff] %v1570
        %1579 = vst [vmem:[#allocation2 + $0x8] sm:$0xff] %v1571
        %1580 = vst [vmem:[#allocation2 + $0x10] sm:$0xff] %v1572
        %1581 = vst [vmem:[#allocation2 + $0x18] sm:$0xff] %v1573
        %1582 = vst [vmem:[#allocation2 + $0x20] sm:$0xff] %v1574
        %1583 = vst [vmem:[#allocation2 + $0x28] sm:$0xff] %v1575
        %1584 = vst [vmem:[#allocation2 + $0x30] sm:$0xff] %v1576
        %1585 = vst [vmem:[#allocation2 + $0x38] sm:$0xf] %v1577
        %1586 = vst [vmem:[#allocation2 + $0x3c] sm:$0xf] 0.0
        %v1587 = vld [vmem:[#allocation2] ss:$2 sm:$0xff]
        %s1588 = scalar_lea.vmem [#allocation2], 16
        %v1589 = vld [vmem:[%s1588] ss:$2 sm:$0xff]
        %s1590 = scalar_lea.vmem [#allocation2], 32
        %v1591 = vld [vmem:[%s1590] ss:$2 sm:$0xff]
        %s1592 = scalar_lea.vmem [#allocation2], 48
        %v1593 = vld [vmem:[%s1592] ss:$2 sm:$0xff]
        %s1594 = scalar_lea.vmem [#allocation2], 1
        %v1595 = vld [vmem:[%s1594] ss:$2 sm:$0xff]
        %s1596 = scalar_lea.vmem [#allocation2], 17
        %v1597 = vld [vmem:[%s1596] ss:$2 sm:$0xff]
        %s1598 = scalar_lea.vmem [#allocation2], 33
        %v1599 = vld [vmem:[%s1598] ss:$2 sm:$0xff]
        %s1600 = scalar_lea.vmem [#allocation2], 49
        %v1601 = vld [vmem:[%s1600] ss:$2 sm:$0xff]
        %v1602 = vmax.f32 %v1587, %v1595
        %v1603 = vmax.f32 %v1589, %v1597
        %v1604 = vmax.f32 %v1591, %v1599
        %v1605 = vmax.f32 %v1593, %v1601
        %1606 = vst [vmem:[#allocation3] sm:$0xff] %v1602
        %1607 = vst [vmem:[#allocation3 + $0x8] sm:$0xff] %v1603
        %1608 = vst [vmem:[#allocation3 + $0x10] sm:$0xff] %v1604
        %1609 = vst [vmem:[#allocation3 + $0x18] sm:$0xff] %v1605
        %v1610 = vld [vmem:[%s626] sm:$0x1]
        %v1611 = vld [vmem:[#allocation3] sm:$0xff]
        %v1612 = vld [vmem:[#allocation3 + $0x8] sm:$0xff]
        %v1613 = vld [vmem:[#allocation3 + $0x10] sm:$0xff]
        %v1614 = vld [vmem:[#allocation3 + $0x18] sm:$0xf]
        %v1615 = vpack.c.bf16 %v1612, %v1611
        %v1616 = vpack.c.bf16 %v1614, %v1613
        %v1617 = vld [vmem:[%s623] sm:$0xff]
        %v1618 = vld [vmem:[%s623 + $0x8] sm:$0xff]
        %v1619 = vld [vmem:[%s623 + $0x10] sm:$0xff]
        %v1620 = vld [vmem:[%s623 + $0x18] sm:$0xff]
        %v1621 = vld [vmem:[%s623 + $0x20] sm:$0xff]
        %v1622 = vld [vmem:[%s623 + $0x28] sm:$0xff]
        %v1623 = vld [vmem:[%s623 + $0x30] sm:$0xff]
        %v1624 = vld [vmem:[%s623 + $0x38] sm:$0xff]
        %v1625 = vld [vmem:[%s623 + $0x40] sm:$0xff]
        %v1626 = vld [vmem:[%s623 + $0x48] sm:$0xff]
        %v1627 = vld [vmem:[%s623 + $0x50] sm:$0xff]
        %v1628 = vld [vmem:[%s623 + $0x58] sm:$0xff]
        %v1629 = vld [vmem:[%s623 + $0x60] sm:$0xff]
        %v1630 = vld [vmem:[%s623 + $0x68] sm:$0xff]
        %v1631 = vld [vmem:[%s623 + $0x70] sm:$0xff]
        %v1632 = vld [vmem:[%s623 + $0x78] sm:$0xff]
        %v1633 = vld [vmem:[#allocation3 + $0x1] sm:$0xff]
        %v1634 = vld [vmem:[#allocation3 + $0x9] sm:$0xff]
        %v1635 = vld [vmem:[#allocation3 + $0x11] sm:$0xff]
        %v1636 = vld [vmem:[#allocation3 + $0x19] sm:$0xf]
        %v1637 = vpack.c.bf16 %v1634, %v1633
        %v1638 = vpack.c.bf16 %v1636, %v1635
        %s1639 = scalar_lea.vmem %s623, 128
        %v1640 = vld [vmem:[%s1639] sm:$0xff]
        %v1641 = vld [vmem:[%s1639 + $0x8] sm:$0xff]
        %v1642 = vld [vmem:[%s1639 + $0x10] sm:$0xff]
        %v1643 = vld [vmem:[%s1639 + $0x18] sm:$0xff]
        %v1644 = vld [vmem:[%s1639 + $0x20] sm:$0xff]
        %v1645 = vld [vmem:[%s1639 + $0x28] sm:$0xff]
        %v1646 = vld [vmem:[%s1639 + $0x30] sm:$0xff]
        %v1647 = vld [vmem:[%s1639 + $0x38] sm:$0xff]
        %v1648 = vld [vmem:[%s1639 + $0x40] sm:$0xff]
        %v1649 = vld [vmem:[%s1639 + $0x48] sm:$0xff]
        %v1650 = vld [vmem:[%s1639 + $0x50] sm:$0xff]
        %v1651 = vld [vmem:[%s1639 + $0x58] sm:$0xff]
        %v1652 = vld [vmem:[%s1639 + $0x60] sm:$0xff]
        %v1653 = vld [vmem:[%s1639 + $0x68] sm:$0xff]
        %v1654 = vld [vmem:[%s1639 + $0x70] sm:$0xff]
        %v1655 = vld [vmem:[%s1639 + $0x78] sm:$0xff]
        %v1672 = vunpack.c.l.b16 %v1640
        %v1673 = vunpack.c.h.b16 %v1640
        %v1674 = vunpack.c.l.b16 %v1641
        %v1675 = vunpack.c.h.b16 %v1641
        %v1676 = vunpack.c.l.b16 %v1642
        %v1677 = vunpack.c.h.b16 %v1642
        %v1678 = vunpack.c.l.b16 %v1643
        %v1679 = vunpack.c.h.b16 %v1643
        %v1680 = vunpack.c.l.b16 %v1644
        %v1681 = vunpack.c.h.b16 %v1644
        %v1682 = vunpack.c.l.b16 %v1645
        %v1683 = vunpack.c.h.b16 %v1645
        %v1684 = vunpack.c.l.b16 %v1646
        %v1685 = vunpack.c.h.b16 %v1646
        %v1686 = vunpack.c.l.b16 %v1647
        %v1687 = vunpack.c.h.b16 %v1647
        %v1688 = vunpack.c.l.b16 %v1648
        %v1689 = vunpack.c.h.b16 %v1648
        %v1690 = vunpack.c.l.b16 %v1649
        %v1691 = vunpack.c.h.b16 %v1649
        %v1692 = vunpack.c.l.b16 %v1650
        %v1693 = vunpack.c.h.b16 %v1650
        %v1694 = vunpack.c.l.b16 %v1651
        %v1695 = vunpack.c.h.b16 %v1651
        %v1696 = vunpack.c.l.b16 %v1652
        %v1697 = vunpack.c.h.b16 %v1652
        %v1698 = vunpack.c.l.b16 %v1653
        %v1699 = vunpack.c.h.b16 %v1653
        %v1700 = vunpack.c.l.b16 %v1654
        %v1701 = vunpack.c.h.b16 %v1654
        %v1702 = vunpack.c.l.b16 %v1655
        %v1703 = vunpack.c.h.b16 %v1655
        %v1704 = vpack.c.b16 %v1674, %v1672
        %v1705 = vpack.c.b16 %v1675, %v1673
        %v1706 = vpack.c.b16 %v1678, %v1676
        %v1707 = vpack.c.b16 %v1679, %v1677
        %v1708 = vpack.c.b16 %v1682, %v1680
        %v1709 = vpack.c.b16 %v1683, %v1681
        %v1710 = vpack.c.b16 %v1686, %v1684
        %v1711 = vpack.c.b16 %v1687, %v1685
        %v1712 = vpack.c.b16 %v1690, %v1688
        %v1713 = vpack.c.b16 %v1691, %v1689
        %v1714 = vpack.c.b16 %v1694, %v1692
        %v1715 = vpack.c.b16 %v1695, %v1693
        %v1716 = vpack.c.b16 %v1698, %v1696
        %v1717 = vpack.c.b16 %v1699, %v1697
        %v1718 = vpack.c.b16 %v1702, %v1700
        %v1719 = vpack.c.b16 %v1703, %v1701
        %1736 = vmatprep.subr.bf16.mxu0 %v1719
        %1737 = vmatpush1.bf16.msra.mxu0 %v1718
        %1738 = vmatprep.subr.bf16.mxu0 %v1717
        %1739 = vmatpush1.bf16.msra.mxu0 %v1716
        %1740 = vmatprep.subr.bf16.mxu0 %v1715
        %1741 = vmatpush1.bf16.msra.mxu0 %v1714
        %1742 = vmatprep.subr.bf16.mxu0 %v1713
        %1743 = vmatpush1.bf16.msra.mxu0 %v1712
        %1744 = vmatprep.subr.bf16.mxu0 %v1711
        %1745 = vmatpush1.bf16.msra.mxu0 %v1710
        %1746 = vmatprep.subr.bf16.mxu0 %v1709
        %1747 = vmatpush1.bf16.msra.mxu0 %v1708
        %1748 = vmatprep.subr.bf16.mxu0 %v1707
        %1749 = vmatpush1.bf16.msra.mxu0 %v1706
        %1750 = vmatprep.subr.bf16.mxu0 %v1705
        %1751 = vmatpush1.bf16.msra.mxu0 %v1704
        %1752 = vmatprep.subr.bf16.mxu0 0
        %1753 = vmatpush2.bf16.msra.mxu0 0
        %1754 = vmatprep.subr.bf16.mxu0 0
        %1755 = vmatpush2.bf16.msra.mxu0 0
        %1756 = vmatprep.subr.bf16.mxu0 0
        %1757 = vmatpush2.bf16.msra.mxu0 0
        %1758 = vmatprep.subr.bf16.mxu0 0
        %1759 = vmatpush2.bf16.msra.mxu0 0
        %1760 = vmatprep.subr.bf16.mxu0 0
        %1761 = vmatpush2.bf16.msra.mxu0 0
        %1762 = vmatprep.subr.bf16.mxu0 0
        %1763 = vmatpush2.bf16.msra.mxu0 0
        %1764 = vmatprep.subr.bf16.mxu0 0
        %1765 = vmatpush2.bf16.msra.mxu0 0
        %1766 = vmatprep.subr.bf16.mxu0 0
        %1767 = vmatpush2.bf16.msra.mxu0 0
        %1768 = vmatprep.mubr.bf16.mxu0 0
        %1769 = vmatmul.mubr.bf16.gmra.mxu0 %v1637
        %v1770 = vpop.f32.mrf.mxu0
        %v1771 = vadd.f32 0.0, %v1770
        %v1772 = vpop.f32.mrf.mxu0
        %v1773 = vadd.f32 0.0, %v1772
        %v1774 = vpop.f32.mrf.mxu0
        %v1775 = vadd.f32 0.0, %v1774
        %v1776 = vpop.f32.mrf.mxu0
        %v1777 = vadd.f32 0.0, %v1776
        %1778 = vmatprep.mubr.bf16.mxu0 0
        %1779 = vmatmul.mubr.bf16.gmra.mxu0 %v1638
        %v1780 = vpop.f32.mrf.mxu0
        %v1781 = vadd.f32 0.0, %v1780
        %v1782 = vpop.f32.mrf.mxu0
        %v1783 = vadd.f32 0.0, %v1782
        %v1784 = vpop.f32.mrf.mxu0
        %v1785 = vadd.f32 0.0, %v1784
        %v1786 = vpop.f32.mrf.mxu0
        %v1787 = vadd.f32 0.0, %v1786
        %1788 = vdwg.mxu0
        %v1805 = vunpack.c.l.b16 %v1617
        %v1806 = vunpack.c.h.b16 %v1617
        %v1807 = vunpack.c.l.b16 %v1618
        %v1808 = vunpack.c.h.b16 %v1618
        %v1809 = vunpack.c.l.b16 %v1619
        %v1810 = vunpack.c.h.b16 %v1619
        %v1811 = vunpack.c.l.b16 %v1620
        %v1812 = vunpack.c.h.b16 %v1620
        %v1813 = vunpack.c.l.b16 %v1621
        %v1814 = vunpack.c.h.b16 %v1621
        %v1815 = vunpack.c.l.b16 %v1622
        %v1816 = vunpack.c.h.b16 %v1622
        %v1817 = vunpack.c.l.b16 %v1623
        %v1818 = vunpack.c.h.b16 %v1623
        %v1819 = vunpack.c.l.b16 %v1624
        %v1820 = vunpack.c.h.b16 %v1624
        %v1821 = vunpack.c.l.b16 %v1625
        %v1822 = vunpack.c.h.b16 %v1625
        %v1823 = vunpack.c.l.b16 %v1626
        %v1824 = vunpack.c.h.b16 %v1626
        %v1825 = vunpack.c.l.b16 %v1627
        %v1826 = vunpack.c.h.b16 %v1627
        %v1827 = vunpack.c.l.b16 %v1628
        %v1828 = vunpack.c.h.b16 %v1628
        %v1829 = vunpack.c.l.b16 %v1629
        %v1830 = vunpack.c.h.b16 %v1629
        %v1831 = vunpack.c.l.b16 %v1630
        %v1832 = vunpack.c.h.b16 %v1630
        %v1833 = vunpack.c.l.b16 %v1631
        %v1834 = vunpack.c.h.b16 %v1631
        %v1835 = vunpack.c.l.b16 %v1632
        %v1836 = vunpack.c.h.b16 %v1632
        %v1837 = vpack.c.b16 %v1807, %v1805
        %v1838 = vpack.c.b16 %v1808, %v1806
        %v1839 = vpack.c.b16 %v1811, %v1809
        %v1840 = vpack.c.b16 %v1812, %v1810
        %v1841 = vpack.c.b16 %v1815, %v1813
        %v1842 = vpack.c.b16 %v1816, %v1814
        %v1843 = vpack.c.b16 %v1819, %v1817
        %v1844 = vpack.c.b16 %v1820, %v1818
        %v1845 = vpack.c.b16 %v1823, %v1821
        %v1846 = vpack.c.b16 %v1824, %v1822
        %v1847 = vpack.c.b16 %v1827, %v1825
        %v1848 = vpack.c.b16 %v1828, %v1826
        %v1849 = vpack.c.b16 %v1831, %v1829
        %v1850 = vpack.c.b16 %v1832, %v1830
        %v1851 = vpack.c.b16 %v1835, %v1833
        %v1852 = vpack.c.b16 %v1836, %v1834
        %1869 = vmatprep.subr.bf16.mxu0 %v1852
        %1870 = vmatpush1.bf16.msra.mxu0 %v1851
        %1871 = vmatprep.subr.bf16.mxu0 %v1850
        %1872 = vmatpush1.bf16.msra.mxu0 %v1849
        %1873 = vmatprep.subr.bf16.mxu0 %v1848
        %1874 = vmatpush1.bf16.msra.mxu0 %v1847
        %1875 = vmatprep.subr.bf16.mxu0 %v1846
        %1876 = vmatpush1.bf16.msra.mxu0 %v1845
        %1877 = vmatprep.subr.bf16.mxu0 %v1844
        %1878 = vmatpush1.bf16.msra.mxu0 %v1843
        %1879 = vmatprep.subr.bf16.mxu0 %v1842
        %1880 = vmatpush1.bf16.msra.mxu0 %v1841
        %1881 = vmatprep.subr.bf16.mxu0 %v1840
        %1882 = vmatpush1.bf16.msra.mxu0 %v1839
        %1883 = vmatprep.subr.bf16.mxu0 %v1838
        %1884 = vmatpush1.bf16.msra.mxu0 %v1837
        %1885 = vmatprep.subr.bf16.mxu0 0
        %1886 = vmatpush2.bf16.msra.mxu0 0
        %1887 = vmatprep.subr.bf16.mxu0 0
        %1888 = vmatpush2.bf16.msra.mxu0 0
        %1889 = vmatprep.subr.bf16.mxu0 0
        %1890 = vmatpush2.bf16.msra.mxu0 0
        %1891 = vmatprep.subr.bf16.mxu0 0
        %1892 = vmatpush2.bf16.msra.mxu0 0
        %1893 = vmatprep.subr.bf16.mxu0 0
        %1894 = vmatpush2.bf16.msra.mxu0 0
        %1895 = vmatprep.subr.bf16.mxu0 0
        %1896 = vmatpush2.bf16.msra.mxu0 0
        %1897 = vmatprep.subr.bf16.mxu0 0
        %1898 = vmatpush2.bf16.msra.mxu0 0
        %1899 = vmatprep.subr.bf16.mxu0 0
        %1900 = vmatpush2.bf16.msra.mxu0 0
        %1901 = vmatprep.mubr.bf16.mxu0 0
        %1902 = vmatmul.mubr.bf16.gmra.mxu0 %v1615
        %v1903 = vpop.f32.mrf.mxu0
        %v1904 = vadd.f32 %v1771, %v1903
        %v1905 = vpop.f32.mrf.mxu0
        %v1906 = vadd.f32 %v1773, %v1905
        %v1907 = vpop.f32.mrf.mxu0
        %v1908 = vadd.f32 %v1775, %v1907
        %v1909 = vpop.f32.mrf.mxu0
        %v1910 = vadd.f32 %v1777, %v1909
        %1911 = vmatprep.mubr.bf16.mxu0 0
        %1912 = vmatmul.mubr.bf16.gmra.mxu0 %v1616
        %v1913 = vpop.f32.mrf.mxu0
        %v1914 = vadd.f32 %v1781, %v1913
        %v1915 = vpop.f32.mrf.mxu0
        %v1916 = vadd.f32 %v1783, %v1915
        %v1917 = vpop.f32.mrf.mxu0
        %v1918 = vadd.f32 %v1785, %v1917
        %v1919 = vpop.f32.mrf.mxu0
        %v1920 = vadd.f32 %v1787, %v1919
        %1921 = vdwg.mxu0
        %v1922 = vld [vmem:[#allocation3 + $0x2] sm:$0xff]
        %v1923 = vld [vmem:[#allocation3 + $0xa] sm:$0xff]
        %v1924 = vld [vmem:[#allocation3 + $0x12] sm:$0xff]
        %v1925 = vld [vmem:[#allocation3 + $0x1a] sm:$0xf]
        %v1926 = vpack.c.bf16 %v1923, %v1922
        %v1927 = vpack.c.bf16 %v1925, %v1924
        %s1928 = scalar_lea.vmem %s623, 256
        %v1929 = vld [vmem:[%s1928] sm:$0xff]
        %v1930 = vld [vmem:[%s1928 + $0x8] sm:$0xff]
        %v1931 = vld [vmem:[%s1928 + $0x10] sm:$0xff]
        %v1932 = vld [vmem:[%s1928 + $0x18] sm:$0xff]
        %v1933 = vld [vmem:[%s1928 + $0x20] sm:$0xff]
        %v1934 = vld [vmem:[%s1928 + $0x28] sm:$0xff]
        %v1935 = vld [vmem:[%s1928 + $0x30] sm:$0xff]
        %v1936 = vld [vmem:[%s1928 + $0x38] sm:$0xff]
        %v1937 = vld [vmem:[%s1928 + $0x40] sm:$0xff]
        %v1938 = vld [vmem:[%s1928 + $0x48] sm:$0xff]
        %v1939 = vld [vmem:[%s1928 + $0x50] sm:$0xff]
        %v1940 = vld [vmem:[%s1928 + $0x58] sm:$0xff]
        %v1941 = vld [vmem:[%s1928 + $0x60] sm:$0xff]
        %v1942 = vld [vmem:[%s1928 + $0x68] sm:$0xff]
        %v1943 = vld [vmem:[%s1928 + $0x70] sm:$0xff]
        %v1944 = vld [vmem:[%s1928 + $0x78] sm:$0xff]
        %v1961 = vunpack.c.l.b16 %v1929
        %v1962 = vunpack.c.h.b16 %v1929
        %v1963 = vunpack.c.l.b16 %v1930
        %v1964 = vunpack.c.h.b16 %v1930
        %v1965 = vunpack.c.l.b16 %v1931
        %v1966 = vunpack.c.h.b16 %v1931
        %v1967 = vunpack.c.l.b16 %v1932
        %v1968 = vunpack.c.h.b16 %v1932
        %v1969 = vunpack.c.l.b16 %v1933
        %v1970 = vunpack.c.h.b16 %v1933
        %v1971 = vunpack.c.l.b16 %v1934
        %v1972 = vunpack.c.h.b16 %v1934
        %v1973 = vunpack.c.l.b16 %v1935
        %v1974 = vunpack.c.h.b16 %v1935
        %v1975 = vunpack.c.l.b16 %v1936
        %v1976 = vunpack.c.h.b16 %v1936
        %v1977 = vunpack.c.l.b16 %v1937
        %v1978 = vunpack.c.h.b16 %v1937
        %v1979 = vunpack.c.l.b16 %v1938
        %v1980 = vunpack.c.h.b16 %v1938
        %v1981 = vunpack.c.l.b16 %v1939
        %v1982 = vunpack.c.h.b16 %v1939
        %v1983 = vunpack.c.l.b16 %v1940
        %v1984 = vunpack.c.h.b16 %v1940
        %v1985 = vunpack.c.l.b16 %v1941
        %v1986 = vunpack.c.h.b16 %v1941
        %v1987 = vunpack.c.l.b16 %v1942
        %v1988 = vunpack.c.h.b16 %v1942
        %v1989 = vunpack.c.l.b16 %v1943
        %v1990 = vunpack.c.h.b16 %v1943
        %v1991 = vunpack.c.l.b16 %v1944
        %v1992 = vunpack.c.h.b16 %v1944
        %v1993 = vpack.c.b16 %v1963, %v1961
        %v1994 = vpack.c.b16 %v1964, %v1962
        %v1995 = vpack.c.b16 %v1967, %v1965
        %v1996 = vpack.c.b16 %v1968, %v1966
        %v1997 = vpack.c.b16 %v1971, %v1969
        %v1998 = vpack.c.b16 %v1972, %v1970
        %v1999 = vpack.c.b16 %v1975, %v1973
        %v2000 = vpack.c.b16 %v1976, %v1974
        %v2001 = vpack.c.b16 %v1979, %v1977
        %v2002 = vpack.c.b16 %v1980, %v1978
        %v2003 = vpack.c.b16 %v1983, %v1981
        %v2004 = vpack.c.b16 %v1984, %v1982
        %v2005 = vpack.c.b16 %v1987, %v1985
        %v2006 = vpack.c.b16 %v1988, %v1986
        %v2007 = vpack.c.b16 %v1991, %v1989
        %v2008 = vpack.c.b16 %v1992, %v1990
        %2025 = vmatprep.subr.bf16.mxu0 %v2008
        %2026 = vmatpush1.bf16.msra.mxu0 %v2007
        %2027 = vmatprep.subr.bf16.mxu0 %v2006
        %2028 = vmatpush1.bf16.msra.mxu0 %v2005
        %2029 = vmatprep.subr.bf16.mxu0 %v2004
        %2030 = vmatpush1.bf16.msra.mxu0 %v2003
        %2031 = vmatprep.subr.bf16.mxu0 %v2002
        %2032 = vmatpush1.bf16.msra.mxu0 %v2001
        %2033 = vmatprep.subr.bf16.mxu0 %v2000
        %2034 = vmatpush1.bf16.msra.mxu0 %v1999
        %2035 = vmatprep.subr.bf16.mxu0 %v1998
        %2036 = vmatpush1.bf16.msra.mxu0 %v1997
        %2037 = vmatprep.subr.bf16.mxu0 %v1996
        %2038 = vmatpush1.bf16.msra.mxu0 %v1995
        %2039 = vmatprep.subr.bf16.mxu0 %v1994
        %2040 = vmatpush1.bf16.msra.mxu0 %v1993
        %2041 = vmatprep.subr.bf16.mxu0 0
        %2042 = vmatpush2.bf16.msra.mxu0 0
        %2043 = vmatprep.subr.bf16.mxu0 0
        %2044 = vmatpush2.bf16.msra.mxu0 0
        %2045 = vmatprep.subr.bf16.mxu0 0
        %2046 = vmatpush2.bf16.msra.mxu0 0
        %2047 = vmatprep.subr.bf16.mxu0 0
        %2048 = vmatpush2.bf16.msra.mxu0 0
        %2049 = vmatprep.subr.bf16.mxu0 0
        %2050 = vmatpush2.bf16.msra.mxu0 0
        %2051 = vmatprep.subr.bf16.mxu0 0
        %2052 = vmatpush2.bf16.msra.mxu0 0
        %2053 = vmatprep.subr.bf16.mxu0 0
        %2054 = vmatpush2.bf16.msra.mxu0 0
        %2055 = vmatprep.subr.bf16.mxu0 0
        %2056 = vmatpush2.bf16.msra.mxu0 0
        %2057 = vmatprep.mubr.bf16.mxu0 0
        %2058 = vmatmul.mubr.bf16.gmra.mxu0 %v1926
        %v2059 = vpop.f32.mrf.mxu0
        %v2060 = vadd.f32 0.0, %v2059
        %v2061 = vpop.f32.mrf.mxu0
        %v2062 = vadd.f32 0.0, %v2061
        %v2063 = vpop.f32.mrf.mxu0
        %v2064 = vadd.f32 0.0, %v2063
        %v2065 = vpop.f32.mrf.mxu0
        %v2066 = vadd.f32 0.0, %v2065
        %2067 = vmatprep.mubr.bf16.mxu0 0
        %2068 = vmatmul.mubr.bf16.gmra.mxu0 %v1927
        %v2069 = vpop.f32.mrf.mxu0
        %v2070 = vadd.f32 0.0, %v2069
        %v2071 = vpop.f32.mrf.mxu0
        %v2072 = vadd.f32 0.0, %v2071
        %v2073 = vpop.f32.mrf.mxu0
        %v2074 = vadd.f32 0.0, %v2073
        %v2075 = vpop.f32.mrf.mxu0
        %v2076 = vadd.f32 0.0, %v2075
        %2077 = vdwg.mxu0
        %v2078 = vadd.f32 %v1904, %v2060
        %v2079 = vadd.f32 %v1906, %v2062
        %v2080 = vadd.f32 %v1908, %v2064
        %v2081 = vadd.f32 %v1910, %v2066
        %v2082 = vadd.f32 %v1914, %v2070
        %v2083 = vadd.f32 %v1916, %v2072
        %v2084 = vadd.f32 %v1918, %v2074
        %v2085 = vadd.f32 %v1920, %v2076
        %v2086 = vld [vmem:[#allocation3 + $0x3] sm:$0xff]
        %v2087 = vld [vmem:[#allocation3 + $0xb] sm:$0xff]
        %v2088 = vld [vmem:[#allocation3 + $0x13] sm:$0xff]
        %v2089 = vld [vmem:[#allocation3 + $0x1b] sm:$0xf]
        %v2090 = vpack.c.bf16 %v2087, %v2086
        %v2091 = vpack.c.bf16 %v2089, %v2088
        %s2092 = scalar_lea.vmem %s623, 384
        %v2093 = vld [vmem:[%s2092] sm:$0xff]
        %v2094 = vld [vmem:[%s2092 + $0x8] sm:$0xff]
        %v2095 = vld [vmem:[%s2092 + $0x10] sm:$0xff]
        %v2096 = vld [vmem:[%s2092 + $0x18] sm:$0xff]
        %v2097 = vld [vmem:[%s2092 + $0x20] sm:$0xff]
        %v2098 = vld [vmem:[%s2092 + $0x28] sm:$0xff]
        %v2099 = vld [vmem:[%s2092 + $0x30] sm:$0xff]
        %v2100 = vld [vmem:[%s2092 + $0x38] sm:$0xff]
        %v2101 = vld [vmem:[%s2092 + $0x40] sm:$0xff]
        %v2102 = vld [vmem:[%s2092 + $0x48] sm:$0xff]
        %v2103 = vld [vmem:[%s2092 + $0x50] sm:$0xff]
        %v2104 = vld [vmem:[%s2092 + $0x58] sm:$0xff]
        %v2105 = vld [vmem:[%s2092 + $0x60] sm:$0xff]
        %v2106 = vld [vmem:[%s2092 + $0x68] sm:$0xff]
        %v2107 = vld [vmem:[%s2092 + $0x70] sm:$0xff]
        %v2108 = vld [vmem:[%s2092 + $0x78] sm:$0xff]
        %v2125 = vunpack.c.l.b16 %v2093
        %v2126 = vunpack.c.h.b16 %v2093
        %v2127 = vunpack.c.l.b16 %v2094
        %v2128 = vunpack.c.h.b16 %v2094
        %v2129 = vunpack.c.l.b16 %v2095
        %v2130 = vunpack.c.h.b16 %v2095
        %v2131 = vunpack.c.l.b16 %v2096
        %v2132 = vunpack.c.h.b16 %v2096
        %v2133 = vunpack.c.l.b16 %v2097
        %v2134 = vunpack.c.h.b16 %v2097
        %v2135 = vunpack.c.l.b16 %v2098
        %v2136 = vunpack.c.h.b16 %v2098
        %v2137 = vunpack.c.l.b16 %v2099
        %v2138 = vunpack.c.h.b16 %v2099
        %v2139 = vunpack.c.l.b16 %v2100
        %v2140 = vunpack.c.h.b16 %v2100
        %v2141 = vunpack.c.l.b16 %v2101
        %v2142 = vunpack.c.h.b16 %v2101
        %v2143 = vunpack.c.l.b16 %v2102
        %v2144 = vunpack.c.h.b16 %v2102
        %v2145 = vunpack.c.l.b16 %v2103
        %v2146 = vunpack.c.h.b16 %v2103
        %v2147 = vunpack.c.l.b16 %v2104
        %v2148 = vunpack.c.h.b16 %v2104
        %v2149 = vunpack.c.l.b16 %v2105
        %v2150 = vunpack.c.h.b16 %v2105
        %v2151 = vunpack.c.l.b16 %v2106
        %v2152 = vunpack.c.h.b16 %v2106
        %v2153 = vunpack.c.l.b16 %v2107
        %v2154 = vunpack.c.h.b16 %v2107
        %v2155 = vunpack.c.l.b16 %v2108
        %v2156 = vunpack.c.h.b16 %v2108
        %v2157 = vpack.c.b16 %v2127, %v2125
        %v2158 = vpack.c.b16 %v2128, %v2126
        %v2159 = vpack.c.b16 %v2131, %v2129
        %v2160 = vpack.c.b16 %v2132, %v2130
        %v2161 = vpack.c.b16 %v2135, %v2133
        %v2162 = vpack.c.b16 %v2136, %v2134
        %v2163 = vpack.c.b16 %v2139, %v2137
        %v2164 = vpack.c.b16 %v2140, %v2138
        %v2165 = vpack.c.b16 %v2143, %v2141
        %v2166 = vpack.c.b16 %v2144, %v2142
        %v2167 = vpack.c.b16 %v2147, %v2145
        %v2168 = vpack.c.b16 %v2148, %v2146
        %v2169 = vpack.c.b16 %v2151, %v2149
        %v2170 = vpack.c.b16 %v2152, %v2150
        %v2171 = vpack.c.b16 %v2155, %v2153
        %v2172 = vpack.c.b16 %v2156, %v2154
        %2189 = vmatprep.subr.bf16.mxu0 %v2172
        %2190 = vmatpush1.bf16.msra.mxu0 %v2171
        %2191 = vmatprep.subr.bf16.mxu0 %v2170
        %2192 = vmatpush1.bf16.msra.mxu0 %v2169
        %2193 = vmatprep.subr.bf16.mxu0 %v2168
        %2194 = vmatpush1.bf16.msra.mxu0 %v2167
        %2195 = vmatprep.subr.bf16.mxu0 %v2166
        %2196 = vmatpush1.bf16.msra.mxu0 %v2165
        %2197 = vmatprep.subr.bf16.mxu0 %v2164
        %2198 = vmatpush1.bf16.msra.mxu0 %v2163
        %2199 = vmatprep.subr.bf16.mxu0 %v2162
        %2200 = vmatpush1.bf16.msra.mxu0 %v2161
        %2201 = vmatprep.subr.bf16.mxu0 %v2160
        %2202 = vmatpush1.bf16.msra.mxu0 %v2159
        %2203 = vmatprep.subr.bf16.mxu0 %v2158
        %2204 = vmatpush1.bf16.msra.mxu0 %v2157
        %2205 = vmatprep.subr.bf16.mxu0 0
        %2206 = vmatpush2.bf16.msra.mxu0 0
        %2207 = vmatprep.subr.bf16.mxu0 0
        %2208 = vmatpush2.bf16.msra.mxu0 0
        %2209 = vmatprep.subr.bf16.mxu0 0
        %2210 = vmatpush2.bf16.msra.mxu0 0
        %2211 = vmatprep.subr.bf16.mxu0 0
        %2212 = vmatpush2.bf16.msra.mxu0 0
        %2213 = vmatprep.subr.bf16.mxu0 0
        %2214 = vmatpush2.bf16.msra.mxu0 0
        %2215 = vmatprep.subr.bf16.mxu0 0
        %2216 = vmatpush2.bf16.msra.mxu0 0
        %2217 = vmatprep.subr.bf16.mxu0 0
        %2218 = vmatpush2.bf16.msra.mxu0 0
        %2219 = vmatprep.subr.bf16.mxu0 0
        %2220 = vmatpush2.bf16.msra.mxu0 0
        %2221 = vmatprep.mubr.bf16.mxu0 0
        %2222 = vmatmul.mubr.bf16.gmra.mxu0 %v2090
        %v2223 = vpop.f32.mrf.mxu0
        %v2224 = vadd.f32 0.0, %v2223
        %v2225 = vpop.f32.mrf.mxu0
        %v2226 = vadd.f32 0.0, %v2225
        %v2227 = vpop.f32.mrf.mxu0
        %v2228 = vadd.f32 0.0, %v2227
        %v2229 = vpop.f32.mrf.mxu0
        %v2230 = vadd.f32 0.0, %v2229
        %2231 = vmatprep.mubr.bf16.mxu0 0
        %2232 = vmatmul.mubr.bf16.gmra.mxu0 %v2091
        %v2233 = vpop.f32.mrf.mxu0
        %v2234 = vadd.f32 0.0, %v2233
        %v2235 = vpop.f32.mrf.mxu0
        %v2236 = vadd.f32 0.0, %v2235
        %v2237 = vpop.f32.mrf.mxu0
        %v2238 = vadd.f32 0.0, %v2237
        %v2239 = vpop.f32.mrf.mxu0
        %v2240 = vadd.f32 0.0, %v2239
        %2241 = vdwg.mxu0
        %v2242 = vadd.f32 %v2078, %v2224
        %v2243 = vadd.f32 %v2079, %v2226
        %v2244 = vadd.f32 %v2080, %v2228
        %v2245 = vadd.f32 %v2081, %v2230
        %v2246 = vadd.f32 %v2082, %v2234
        %v2247 = vadd.f32 %v2083, %v2236
        %v2248 = vadd.f32 %v2084, %v2238
        %v2249 = vadd.f32 %v2085, %v2240
        %v2250 = vld [vmem:[#allocation3 + $0x4] sm:$0xff]
        %v2251 = vld [vmem:[#allocation3 + $0xc] sm:$0xff]
        %v2252 = vld [vmem:[#allocation3 + $0x14] sm:$0xff]
        %v2253 = vld [vmem:[#allocation3 + $0x1c] sm:$0xf]
        %v2254 = vpack.c.bf16 %v2251, %v2250
        %v2255 = vpack.c.bf16 %v2253, %v2252
        %s2256 = scalar_lea.vmem %s623, 512
        %v2257 = vld [vmem:[%s2256] sm:$0xff]
        %v2258 = vld [vmem:[%s2256 + $0x8] sm:$0xff]
        %v2259 = vld [vmem:[%s2256 + $0x10] sm:$0xff]
        %v2260 = vld [vmem:[%s2256 + $0x18] sm:$0xff]
        %v2261 = vld [vmem:[%s2256 + $0x20] sm:$0xff]
        %v2262 = vld [vmem:[%s2256 + $0x28] sm:$0xff]
        %v2263 = vld [vmem:[%s2256 + $0x30] sm:$0xff]
        %v2264 = vld [vmem:[%s2256 + $0x38] sm:$0xff]
        %v2265 = vld [vmem:[%s2256 + $0x40] sm:$0xff]
        %v2266 = vld [vmem:[%s2256 + $0x48] sm:$0xff]
        %v2267 = vld [vmem:[%s2256 + $0x50] sm:$0xff]
        %v2268 = vld [vmem:[%s2256 + $0x58] sm:$0xff]
        %v2269 = vld [vmem:[%s2256 + $0x60] sm:$0xff]
        %v2270 = vld [vmem:[%s2256 + $0x68] sm:$0xff]
        %v2271 = vld [vmem:[%s2256 + $0x70] sm:$0xff]
        %v2272 = vld [vmem:[%s2256 + $0x78] sm:$0xff]
        %v2289 = vunpack.c.l.b16 %v2257
        %v2290 = vunpack.c.h.b16 %v2257
        %v2291 = vunpack.c.l.b16 %v2258
        %v2292 = vunpack.c.h.b16 %v2258
        %v2293 = vunpack.c.l.b16 %v2259
        %v2294 = vunpack.c.h.b16 %v2259
        %v2295 = vunpack.c.l.b16 %v2260
        %v2296 = vunpack.c.h.b16 %v2260
        %v2297 = vunpack.c.l.b16 %v2261
        %v2298 = vunpack.c.h.b16 %v2261
        %v2299 = vunpack.c.l.b16 %v2262
        %v2300 = vunpack.c.h.b16 %v2262
        %v2301 = vunpack.c.l.b16 %v2263
        %v2302 = vunpack.c.h.b16 %v2263
        %v2303 = vunpack.c.l.b16 %v2264
        %v2304 = vunpack.c.h.b16 %v2264
        %v2305 = vunpack.c.l.b16 %v2265
        %v2306 = vunpack.c.h.b16 %v2265
        %v2307 = vunpack.c.l.b16 %v2266
        %v2308 = vunpack.c.h.b16 %v2266
        %v2309 = vunpack.c.l.b16 %v2267
        %v2310 = vunpack.c.h.b16 %v2267
        %v2311 = vunpack.c.l.b16 %v2268
        %v2312 = vunpack.c.h.b16 %v2268
        %v2313 = vunpack.c.l.b16 %v2269
        %v2314 = vunpack.c.h.b16 %v2269
        %v2315 = vunpack.c.l.b16 %v2270
        %v2316 = vunpack.c.h.b16 %v2270
        %v2317 = vunpack.c.l.b16 %v2271
        %v2318 = vunpack.c.h.b16 %v2271
        %v2319 = vunpack.c.l.b16 %v2272
        %v2320 = vunpack.c.h.b16 %v2272
        %v2321 = vpack.c.b16 %v2291, %v2289
        %v2322 = vpack.c.b16 %v2292, %v2290
        %v2323 = vpack.c.b16 %v2295, %v2293
        %v2324 = vpack.c.b16 %v2296, %v2294
        %v2325 = vpack.c.b16 %v2299, %v2297
        %v2326 = vpack.c.b16 %v2300, %v2298
        %v2327 = vpack.c.b16 %v2303, %v2301
        %v2328 = vpack.c.b16 %v2304, %v2302
        %v2329 = vpack.c.b16 %v2307, %v2305
        %v2330 = vpack.c.b16 %v2308, %v2306
        %v2331 = vpack.c.b16 %v2311, %v2309
        %v2332 = vpack.c.b16 %v2312, %v2310
        %v2333 = vpack.c.b16 %v2315, %v2313
        %v2334 = vpack.c.b16 %v2316, %v2314
        %v2335 = vpack.c.b16 %v2319, %v2317
        %v2336 = vpack.c.b16 %v2320, %v2318
        %2353 = vmatprep.subr.bf16.mxu0 %v2336
        %2354 = vmatpush1.bf16.msra.mxu0 %v2335
        %2355 = vmatprep.subr.bf16.mxu0 %v2334
        %2356 = vmatpush1.bf16.msra.mxu0 %v2333
        %2357 = vmatprep.subr.bf16.mxu0 %v2332
        %2358 = vmatpush1.bf16.msra.mxu0 %v2331
        %2359 = vmatprep.subr.bf16.mxu0 %v2330
        %2360 = vmatpush1.bf16.msra.mxu0 %v2329
        %2361 = vmatprep.subr.bf16.mxu0 %v2328
        %2362 = vmatpush1.bf16.msra.mxu0 %v2327
        %2363 = vmatprep.subr.bf16.mxu0 %v2326
        %2364 = vmatpush1.bf16.msra.mxu0 %v2325
        %2365 = vmatprep.subr.bf16.mxu0 %v2324
        %2366 = vmatpush1.bf16.msra.mxu0 %v2323
        %2367 = vmatprep.subr.bf16.mxu0 %v2322
        %2368 = vmatpush1.bf16.msra.mxu0 %v2321
        %2369 = vmatprep.subr.bf16.mxu0 0
        %2370 = vmatpush2.bf16.msra.mxu0 0
        %2371 = vmatprep.subr.bf16.mxu0 0
        %2372 = vmatpush2.bf16.msra.mxu0 0
        %2373 = vmatprep.subr.bf16.mxu0 0
        %2374 = vmatpush2.bf16.msra.mxu0 0
        %2375 = vmatprep.subr.bf16.mxu0 0
        %2376 = vmatpush2.bf16.msra.mxu0 0
        %2377 = vmatprep.subr.bf16.mxu0 0
        %2378 = vmatpush2.bf16.msra.mxu0 0
        %2379 = vmatprep.subr.bf16.mxu0 0
        %2380 = vmatpush2.bf16.msra.mxu0 0
        %2381 = vmatprep.subr.bf16.mxu0 0
        %2382 = vmatpush2.bf16.msra.mxu0 0
        %2383 = vmatprep.subr.bf16.mxu0 0
        %2384 = vmatpush2.bf16.msra.mxu0 0
        %2385 = vmatprep.mubr.bf16.mxu0 0
        %2386 = vmatmul.mubr.bf16.gmra.mxu0 %v2254
        %v2387 = vpop.f32.mrf.mxu0
        %v2388 = vadd.f32 0.0, %v2387
        %v2389 = vpop.f32.mrf.mxu0
        %v2390 = vadd.f32 0.0, %v2389
        %v2391 = vpop.f32.mrf.mxu0
        %v2392 = vadd.f32 0.0, %v2391
        %v2393 = vpop.f32.mrf.mxu0
        %v2394 = vadd.f32 0.0, %v2393
        %2395 = vmatprep.mubr.bf16.mxu0 0
        %2396 = vmatmul.mubr.bf16.gmra.mxu0 %v2255
        %v2397 = vpop.f32.mrf.mxu0
        %v2398 = vadd.f32 0.0, %v2397
        %v2399 = vpop.f32.mrf.mxu0
        %v2400 = vadd.f32 0.0, %v2399
        %v2401 = vpop.f32.mrf.mxu0
        %v2402 = vadd.f32 0.0, %v2401
        %v2403 = vpop.f32.mrf.mxu0
        %v2404 = vadd.f32 0.0, %v2403
        %2405 = vdwg.mxu0
        %v2406 = vadd.f32 %v2242, %v2388
        %v2407 = vadd.f32 %v2243, %v2390
        %v2408 = vadd.f32 %v2244, %v2392
        %v2409 = vadd.f32 %v2245, %v2394
        %v2410 = vadd.f32 %v2246, %v2398
        %v2411 = vadd.f32 %v2247, %v2400
        %v2412 = vadd.f32 %v2248, %v2402
        %v2413 = vadd.f32 %v2249, %v2404
        %v2414 = vmax.f32 %v2406, %v2407
        %v2415 = vmax.f32 %v2408, %v2409
        %v2416 = vmax.f32 %v2410, %v2411
        %v2417 = vmax.f32 %v2412, %v2413
        %v2419 = vlaneseq
        %v2420 = vshrl.u32 %v2419, 7
        %v2421 = vsub.s32 0, %v2420
        %v2422 = vrot.slane %v1610, %v2421
        %v2424 = vadd.f32 %v2414, %v2422
        %v2425 = vadd.f32 %v2415, %v2422
        %v2426 = vadd.f32 %v2416, %v2422
        %v2427 = vadd.f32 %v2417, %v2422
        %v2428 = vmax.f32 %v2424, 0.0
        %v2429 = vmax.f32 %v2425, 0.0
        %v2430 = vmax.f32 %v2426, 0.0
        %v2431 = vmax.f32 %v2427, 0.0
        %2432 = vst [vmem:[#allocation4] sm:$0xff] %v2428
        %2433 = vst [vmem:[#allocation4 + $0x8] sm:$0xff] %v2429
        %2434 = vst [vmem:[#allocation4 + $0x10] sm:$0xff] %v2430
        %2435 = vst [vmem:[#allocation4 + $0x18] sm:$0xf] %v2431
        %2436 = vst [vmem:[#allocation4 + $0x1c] sm:$0xf] 0.0
        %v2437 = vld [vmem:[#allocation4] ss:$2 sm:$0xff]
        %s2438 = scalar_lea.vmem [#allocation4], 16
        %v2439 = vld [vmem:[%s2438] ss:$2 sm:$0xff]
        %s2440 = scalar_lea.vmem [#allocation4], 1
        %v2441 = vld [vmem:[%s2440] ss:$2 sm:$0xff]
        %s2442 = scalar_lea.vmem [#allocation4], 17
        %v2443 = vld [vmem:[%s2442] ss:$2 sm:$0xff]
        %v2444 = vmax.f32 %v2437, %v2441
        %v2445 = vmax.f32 %v2439, %v2443
        %2446 = vst [vmem:[#allocation5] sm:$0xff] %v2444
        %2447 = vst [vmem:[#allocation5 + $0x8] sm:$0xff] %v2445
        %v2448 = vld [vmem:[#allocation5] ss:$8 sm:$0x3]
        %v2449 = vpack.c.bf16 %v2448, %v2448
        %v2450 = vld [vmem:[%s631] sm:$0xf]
        %v2451 = vld [vmem:[%s631 + $0x4] sm:$0xf]
        %v2452 = vld [vmem:[%s631 + $0x8] sm:$0xf]
        %v2453 = vld [vmem:[%s631 + $0xc] sm:$0xf]
        %v2454 = vld [vmem:[%s631 + $0x10] sm:$0xf]
        %v2455 = vld [vmem:[%s631 + $0x14] sm:$0xf]
        %v2456 = vld [vmem:[%s631 + $0x18] sm:$0xf]
        %v2457 = vld [vmem:[%s631 + $0x1c] sm:$0xf]
        %v2458 = vld [vmem:[%s631 + $0x20] sm:$0xf]
        %v2459 = vld [vmem:[%s631 + $0x24] sm:$0xf]
        %v2460 = vld [vmem:[%s631 + $0x28] sm:$0xf]
        %v2461 = vld [vmem:[%s631 + $0x2c] sm:$0xf]
        %v2462 = vld [vmem:[%s631 + $0x30] sm:$0xf]
        %v2463 = vld [vmem:[%s631 + $0x34] sm:$0xf]
        %v2464 = vld [vmem:[%s631 + $0x38] sm:$0xf]
        %v2465 = vld [vmem:[%s631 + $0x3c] sm:$0xf]
        %s2466 = scalar_lea.vmem [#allocation5], 1
        %v2467 = vld [vmem:[%s2466] ss:$8 sm:$0x3]
        %v2468 = vpack.c.bf16 %v2467, %v2467
        %s2469 = scalar_lea.vmem %s631, 64
        %v2470 = vld [vmem:[%s2469] sm:$0xf]
        %v2471 = vld [vmem:[%s2469 + $0x4] sm:$0xf]
        %v2472 = vld [vmem:[%s2469 + $0x8] sm:$0xf]
        %v2473 = vld [vmem:[%s2469 + $0xc] sm:$0xf]
        %v2474 = vld [vmem:[%s2469 + $0x10] sm:$0xf]
        %v2475 = vld [vmem:[%s2469 + $0x14] sm:$0xf]
        %v2476 = vld [vmem:[%s2469 + $0x18] sm:$0xf]
        %v2477 = vld [vmem:[%s2469 + $0x1c] sm:$0xf]
        %v2478 = vld [vmem:[%s2469 + $0x20] sm:$0xf]
        %v2479 = vld [vmem:[%s2469 + $0x24] sm:$0xf]
        %v2480 = vld [vmem:[%s2469 + $0x28] sm:$0xf]
        %v2481 = vld [vmem:[%s2469 + $0x2c] sm:$0xf]
        %v2482 = vld [vmem:[%s2469 + $0x30] sm:$0xf]
        %v2483 = vld [vmem:[%s2469 + $0x34] sm:$0xf]
        %v2484 = vld [vmem:[%s2469 + $0x38] sm:$0xf]
        %v2485 = vld [vmem:[%s2469 + $0x3c] sm:$0xf]
        %v2502 = vunpack.c.l.b16 %v2470
        %v2503 = vunpack.c.l.b16 %v2471
        %v2504 = vunpack.c.l.b16 %v2472
        %v2505 = vunpack.c.l.b16 %v2473
        %v2506 = vunpack.c.l.b16 %v2474
        %v2507 = vunpack.c.l.b16 %v2475
        %v2508 = vunpack.c.l.b16 %v2476
        %v2509 = vunpack.c.l.b16 %v2477
        %v2510 = vunpack.c.l.b16 %v2478
        %v2511 = vunpack.c.l.b16 %v2479
        %v2512 = vunpack.c.l.b16 %v2480
        %v2513 = vunpack.c.l.b16 %v2481
        %v2514 = vunpack.c.l.b16 %v2482
        %v2515 = vunpack.c.l.b16 %v2483
        %v2516 = vunpack.c.l.b16 %v2484
        %v2517 = vunpack.c.l.b16 %v2485
        %v2518 = vpack.c.b16 %v2503, %v2502
        %v2519 = vpack.c.b16 %v2505, %v2504
        %v2520 = vpack.c.b16 %v2507, %v2506
        %v2521 = vpack.c.b16 %v2509, %v2508
        %v2522 = vpack.c.b16 %v2511, %v2510
        %v2523 = vpack.c.b16 %v2513, %v2512
        %v2524 = vpack.c.b16 %v2515, %v2514
        %v2525 = vpack.c.b16 %v2517, %v2516
        %2534 = vmatprep.subr.bf16.mxu0 0
        %2535 = vmatpush1.bf16.msra.mxu0 %v2525
        %2536 = vmatprep.subr.bf16.mxu0 0
        %2537 = vmatpush1.bf16.msra.mxu0 %v2524
        %2538 = vmatprep.subr.bf16.mxu0 0
        %2539 = vmatpush1.bf16.msra.mxu0 %v2523
        %2540 = vmatprep.subr.bf16.mxu0 0
        %2541 = vmatpush1.bf16.msra.mxu0 %v2522
        %2542 = vmatprep.subr.bf16.mxu0 0
        %2543 = vmatpush1.bf16.msra.mxu0 %v2521
        %2544 = vmatprep.subr.bf16.mxu0 0
        %2545 = vmatpush1.bf16.msra.mxu0 %v2520
        %2546 = vmatprep.subr.bf16.mxu0 0
        %2547 = vmatpush1.bf16.msra.mxu0 %v2519
        %2548 = vmatprep.subr.bf16.mxu0 0
        %2549 = vmatpush1.bf16.msra.mxu0 %v2518
        %2550 = vmatprep.subr.bf16.mxu0 0
        %2551 = vmatpush2.bf16.msra.mxu0 0
        %2552 = vmatprep.subr.bf16.mxu0 0
        %2553 = vmatpush2.bf16.msra.mxu0 0
        %2554 = vmatprep.subr.bf16.mxu0 0
        %2555 = vmatpush2.bf16.msra.mxu0 0
        %2556 = vmatprep.subr.bf16.mxu0 0
        %2557 = vmatpush2.bf16.msra.mxu0 0
        %2558 = vmatprep.subr.bf16.mxu0 0
        %2559 = vmatpush2.bf16.msra.mxu0 0
        %2560 = vmatprep.subr.bf16.mxu0 0
        %2561 = vmatpush2.bf16.msra.mxu0 0
        %2562 = vmatprep.subr.bf16.mxu0 0
        %2563 = vmatpush2.bf16.msra.mxu0 0
        %2564 = vmatprep.subr.bf16.mxu0 0
        %2565 = vmatpush2.bf16.msra.mxu0 0
        %2566 = vmatprep.mubr.bf16.mxu0 0
        %2567 = vmatmul.mubr.bf16.gmra.mxu0 %v2468
        %v2568 = vpop.f32.mrf.mxu0
        %v2569 = vadd.f32 0.0, %v2568
        %v2570 = vpop.f32.mrf.mxu0
        %v2571 = vpop.f32.mrf.mxu0
        %v2572 = vpop.f32.mrf.mxu0
        %2573 = vdwg.mxu0
        %v2590 = vunpack.c.l.b16 %v2450
        %v2591 = vunpack.c.l.b16 %v2451
        %v2592 = vunpack.c.l.b16 %v2452
        %v2593 = vunpack.c.l.b16 %v2453
        %v2594 = vunpack.c.l.b16 %v2454
        %v2595 = vunpack.c.l.b16 %v2455
        %v2596 = vunpack.c.l.b16 %v2456
        %v2597 = vunpack.c.l.b16 %v2457
        %v2598 = vunpack.c.l.b16 %v2458
        %v2599 = vunpack.c.l.b16 %v2459
        %v2600 = vunpack.c.l.b16 %v2460
        %v2601 = vunpack.c.l.b16 %v2461
        %v2602 = vunpack.c.l.b16 %v2462
        %v2603 = vunpack.c.l.b16 %v2463
        %v2604 = vunpack.c.l.b16 %v2464
        %v2605 = vunpack.c.l.b16 %v2465
        %v2606 = vpack.c.b16 %v2591, %v2590
        %v2607 = vpack.c.b16 %v2593, %v2592
        %v2608 = vpack.c.b16 %v2595, %v2594
        %v2609 = vpack.c.b16 %v2597, %v2596
        %v2610 = vpack.c.b16 %v2599, %v2598
        %v2611 = vpack.c.b16 %v2601, %v2600
        %v2612 = vpack.c.b16 %v2603, %v2602
        %v2613 = vpack.c.b16 %v2605, %v2604
        %2622 = vmatprep.subr.bf16.mxu0 0
        %2623 = vmatpush1.bf16.msra.mxu0 %v2613
        %2624 = vmatprep.subr.bf16.mxu0 0
        %2625 = vmatpush1.bf16.msra.mxu0 %v2612
        %2626 = vmatprep.subr.bf16.mxu0 0
        %2627 = vmatpush1.bf16.msra.mxu0 %v2611
        %2628 = vmatprep.subr.bf16.mxu0 0
        %2629 = vmatpush1.bf16.msra.mxu0 %v2610
        %2630 = vmatprep.subr.bf16.mxu0 0
        %2631 = vmatpush1.bf16.msra.mxu0 %v2609
        %2632 = vmatprep.subr.bf16.mxu0 0
        %2633 = vmatpush1.bf16.msra.mxu0 %v2608
        %2634 = vmatprep.subr.bf16.mxu0 0
        %2635 = vmatpush1.bf16.msra.mxu0 %v2607
        %2636 = vmatprep.subr.bf16.mxu0 0
        %2637 = vmatpush1.bf16.msra.mxu0 %v2606
        %2638 = vmatprep.subr.bf16.mxu0 0
        %2639 = vmatpush2.bf16.msra.mxu0 0
        %2640 = vmatprep.subr.bf16.mxu0 0
        %2641 = vmatpush2.bf16.msra.mxu0 0
        %2642 = vmatprep.subr.bf16.mxu0 0
        %2643 = vmatpush2.bf16.msra.mxu0 0
        %2644 = vmatprep.subr.bf16.mxu0 0
        %2645 = vmatpush2.bf16.msra.mxu0 0
        %2646 = vmatprep.subr.bf16.mxu0 0
        %2647 = vmatpush2.bf16.msra.mxu0 0
        %2648 = vmatprep.subr.bf16.mxu0 0
        %2649 = vmatpush2.bf16.msra.mxu0 0
        %2650 = vmatprep.subr.bf16.mxu0 0
        %2651 = vmatpush2.bf16.msra.mxu0 0
        %2652 = vmatprep.subr.bf16.mxu0 0
        %2653 = vmatpush2.bf16.msra.mxu0 0
        %2654 = vmatprep.mubr.bf16.mxu0 0
        %2655 = vmatmul.mubr.bf16.gmra.mxu0 %v2449
        %v2656 = vpop.f32.mrf.mxu0
        %v2657 = vadd.f32 %v2569, %v2656
        %v2658 = vpop.f32.mrf.mxu0
        %v2659 = vpop.f32.mrf.mxu0
        %v2660 = vpop.f32.mrf.mxu0
        %2661 = vdwg.mxu0
        %s2662 = scalar_lea.vmem [#allocation5], 2
        %v2663 = vld [vmem:[%s2662] ss:$8 sm:$0x3]
        %v2664 = vpack.c.bf16 %v2663, %v2663
        %s2665 = scalar_lea.vmem %s631, 128
        %v2666 = vld [vmem:[%s2665] sm:$0xf]
        %v2667 = vld [vmem:[%s2665 + $0x4] sm:$0xf]
        %v2668 = vld [vmem:[%s2665 + $0x8] sm:$0xf]
        %v2669 = vld [vmem:[%s2665 + $0xc] sm:$0xf]
        %v2670 = vld [vmem:[%s2665 + $0x10] sm:$0xf]
        %v2671 = vld [vmem:[%s2665 + $0x14] sm:$0xf]
        %v2672 = vld [vmem:[%s2665 + $0x18] sm:$0xf]
        %v2673 = vld [vmem:[%s2665 + $0x1c] sm:$0xf]
        %v2674 = vld [vmem:[%s2665 + $0x20] sm:$0xf]
        %v2675 = vld [vmem:[%s2665 + $0x24] sm:$0xf]
        %v2676 = vld [vmem:[%s2665 + $0x28] sm:$0xf]
        %v2677 = vld [vmem:[%s2665 + $0x2c] sm:$0xf]
        %v2678 = vld [vmem:[%s2665 + $0x30] sm:$0xf]
        %v2679 = vld [vmem:[%s2665 + $0x34] sm:$0xf]
        %v2680 = vld [vmem:[%s2665 + $0x38] sm:$0xf]
        %v2681 = vld [vmem:[%s2665 + $0x3c] sm:$0xf]
        %v2698 = vunpack.c.l.b16 %v2666
        %v2699 = vunpack.c.l.b16 %v2667
        %v2700 = vunpack.c.l.b16 %v2668
        %v2701 = vunpack.c.l.b16 %v2669
        %v2702 = vunpack.c.l.b16 %v2670
        %v2703 = vunpack.c.l.b16 %v2671
        %v2704 = vunpack.c.l.b16 %v2672
        %v2705 = vunpack.c.l.b16 %v2673
        %v2706 = vunpack.c.l.b16 %v2674
        %v2707 = vunpack.c.l.b16 %v2675
        %v2708 = vunpack.c.l.b16 %v2676
        %v2709 = vunpack.c.l.b16 %v2677
        %v2710 = vunpack.c.l.b16 %v2678
        %v2711 = vunpack.c.l.b16 %v2679
        %v2712 = vunpack.c.l.b16 %v2680
        %v2713 = vunpack.c.l.b16 %v2681
        %v2714 = vpack.c.b16 %v2699, %v2698
        %v2715 = vpack.c.b16 %v2701, %v2700
        %v2716 = vpack.c.b16 %v2703, %v2702
        %v2717 = vpack.c.b16 %v2705, %v2704
        %v2718 = vpack.c.b16 %v2707, %v2706
        %v2719 = vpack.c.b16 %v2709, %v2708
        %v2720 = vpack.c.b16 %v2711, %v2710
        %v2721 = vpack.c.b16 %v2713, %v2712
        %2730 = vmatprep.subr.bf16.mxu0 0
        %2731 = vmatpush1.bf16.msra.mxu0 %v2721
        %2732 = vmatprep.subr.bf16.mxu0 0
        %2733 = vmatpush1.bf16.msra.mxu0 %v2720
        %2734 = vmatprep.subr.bf16.mxu0 0
        %2735 = vmatpush1.bf16.msra.mxu0 %v2719
        %2736 = vmatprep.subr.bf16.mxu0 0
        %2737 = vmatpush1.bf16.msra.mxu0 %v2718
        %2738 = vmatprep.subr.bf16.mxu0 0
        %2739 = vmatpush1.bf16.msra.mxu0 %v2717
        %2740 = vmatprep.subr.bf16.mxu0 0
        %2741 = vmatpush1.bf16.msra.mxu0 %v2716
        %2742 = vmatprep.subr.bf16.mxu0 0
        %2743 = vmatpush1.bf16.msra.mxu0 %v2715
        %2744 = vmatprep.subr.bf16.mxu0 0
        %2745 = vmatpush1.bf16.msra.mxu0 %v2714
        %2746 = vmatprep.subr.bf16.mxu0 0
        %2747 = vmatpush2.bf16.msra.mxu0 0
        %2748 = vmatprep.subr.bf16.mxu0 0
        %2749 = vmatpush2.bf16.msra.mxu0 0
        %2750 = vmatprep.subr.bf16.mxu0 0
        %2751 = vmatpush2.bf16.msra.mxu0 0
        %2752 = vmatprep.subr.bf16.mxu0 0
        %2753 = vmatpush2.bf16.msra.mxu0 0
        %2754 = vmatprep.subr.bf16.mxu0 0
        %2755 = vmatpush2.bf16.msra.mxu0 0
        %2756 = vmatprep.subr.bf16.mxu0 0
        %2757 = vmatpush2.bf16.msra.mxu0 0
        %2758 = vmatprep.subr.bf16.mxu0 0
        %2759 = vmatpush2.bf16.msra.mxu0 0
        %2760 = vmatprep.subr.bf16.mxu0 0
        %2761 = vmatpush2.bf16.msra.mxu0 0
        %2762 = vmatprep.mubr.bf16.mxu0 0
        %2763 = vmatmul.mubr.bf16.gmra.mxu0 %v2664
        %v2764 = vpop.f32.mrf.mxu0
        %v2765 = vadd.f32 0.0, %v2764
        %v2766 = vpop.f32.mrf.mxu0
        %v2767 = vpop.f32.mrf.mxu0
        %v2768 = vpop.f32.mrf.mxu0
        %2769 = vdwg.mxu0
        %v2770 = vadd.f32 %v2657, %v2765
        %s2771 = scalar_lea.vmem [#allocation5], 3
        %v2772 = vld [vmem:[%s2771] ss:$8 sm:$0x3]
        %v2773 = vpack.c.bf16 %v2772, %v2772
        %s2774 = scalar_lea.vmem %s631, 192
        %v2775 = vld [vmem:[%s2774] sm:$0xf]
        %v2776 = vld [vmem:[%s2774 + $0x4] sm:$0xf]
        %v2777 = vld [vmem:[%s2774 + $0x8] sm:$0xf]
        %v2778 = vld [vmem:[%s2774 + $0xc] sm:$0xf]
        %v2779 = vld [vmem:[%s2774 + $0x10] sm:$0xf]
        %v2780 = vld [vmem:[%s2774 + $0x14] sm:$0xf]
        %v2781 = vld [vmem:[%s2774 + $0x18] sm:$0xf]
        %v2782 = vld [vmem:[%s2774 + $0x1c] sm:$0xf]
        %v2783 = vld [vmem:[%s2774 + $0x20] sm:$0xf]
        %v2784 = vld [vmem:[%s2774 + $0x24] sm:$0xf]
        %v2785 = vld [vmem:[%s2774 + $0x28] sm:$0xf]
        %v2786 = vld [vmem:[%s2774 + $0x2c] sm:$0xf]
        %v2787 = vld [vmem:[%s2774 + $0x30] sm:$0xf]
        %v2788 = vld [vmem:[%s2774 + $0x34] sm:$0xf]
        %v2789 = vld [vmem:[%s2774 + $0x38] sm:$0xf]
        %v2790 = vld [vmem:[%s2774 + $0x3c] sm:$0xf]
        %v2807 = vunpack.c.l.b16 %v2775
        %v2808 = vunpack.c.l.b16 %v2776
        %v2809 = vunpack.c.l.b16 %v2777
        %v2810 = vunpack.c.l.b16 %v2778
        %v2811 = vunpack.c.l.b16 %v2779
        %v2812 = vunpack.c.l.b16 %v2780
        %v2813 = vunpack.c.l.b16 %v2781
        %v2814 = vunpack.c.l.b16 %v2782
        %v2815 = vunpack.c.l.b16 %v2783
        %v2816 = vunpack.c.l.b16 %v2784
        %v2817 = vunpack.c.l.b16 %v2785
        %v2818 = vunpack.c.l.b16 %v2786
        %v2819 = vunpack.c.l.b16 %v2787
        %v2820 = vunpack.c.l.b16 %v2788
        %v2821 = vunpack.c.l.b16 %v2789
        %v2822 = vunpack.c.l.b16 %v2790
        %v2823 = vpack.c.b16 %v2808, %v2807
        %v2824 = vpack.c.b16 %v2810, %v2809
        %v2825 = vpack.c.b16 %v2812, %v2811
        %v2826 = vpack.c.b16 %v2814, %v2813
        %v2827 = vpack.c.b16 %v2816, %v2815
        %v2828 = vpack.c.b16 %v2818, %v2817
        %v2829 = vpack.c.b16 %v2820, %v2819
        %v2830 = vpack.c.b16 %v2822, %v2821
        %2839 = vmatprep.subr.bf16.mxu0 0
        %2840 = vmatpush1.bf16.msra.mxu0 %v2830
        %2841 = vmatprep.subr.bf16.mxu0 0
        %2842 = vmatpush1.bf16.msra.mxu0 %v2829
        %2843 = vmatprep.subr.bf16.mxu0 0
        %2844 = vmatpush1.bf16.msra.mxu0 %v2828
        %2845 = vmatprep.subr.bf16.mxu0 0
        %2846 = vmatpush1.bf16.msra.mxu0 %v2827
        %2847 = vmatprep.subr.bf16.mxu0 0
        %2848 = vmatpush1.bf16.msra.mxu0 %v2826
        %2849 = vmatprep.subr.bf16.mxu0 0
        %2850 = vmatpush1.bf16.msra.mxu0 %v2825
        %2851 = vmatprep.subr.bf16.mxu0 0
        %2852 = vmatpush1.bf16.msra.mxu0 %v2824
        %2853 = vmatprep.subr.bf16.mxu0 0
        %2854 = vmatpush1.bf16.msra.mxu0 %v2823
        %2855 = vmatprep.subr.bf16.mxu0 0
        %2856 = vmatpush2.bf16.msra.mxu0 0
        %2857 = vmatprep.subr.bf16.mxu0 0
        %2858 = vmatpush2.bf16.msra.mxu0 0
        %2859 = vmatprep.subr.bf16.mxu0 0
        %2860 = vmatpush2.bf16.msra.mxu0 0
        %2861 = vmatprep.subr.bf16.mxu0 0
        %2862 = vmatpush2.bf16.msra.mxu0 0
        %2863 = vmatprep.subr.bf16.mxu0 0
        %2864 = vmatpush2.bf16.msra.mxu0 0
        %2865 = vmatprep.subr.bf16.mxu0 0
        %2866 = vmatpush2.bf16.msra.mxu0 0
        %2867 = vmatprep.subr.bf16.mxu0 0
        %2868 = vmatpush2.bf16.msra.mxu0 0
        %2869 = vmatprep.subr.bf16.mxu0 0
        %2870 = vmatpush2.bf16.msra.mxu0 0
        %2871 = vmatprep.mubr.bf16.mxu0 0
        %2872 = vmatmul.mubr.bf16.gmra.mxu0 %v2773
        %v2873 = vpop.f32.mrf.mxu0
        %v2874 = vadd.f32 0.0, %v2873
        %v2875 = vpop.f32.mrf.mxu0
        %v2876 = vpop.f32.mrf.mxu0
        %v2877 = vpop.f32.mrf.mxu0
        %2878 = vdwg.mxu0
        %v2879 = vadd.f32 %v2770, %v2874
        %s2880 = scalar_lea.vmem [#allocation5], 4
        %v2881 = vld [vmem:[%s2880] ss:$8 sm:$0x3]
        %v2882 = vpack.c.bf16 %v2881, %v2881
        %s2883 = scalar_lea.vmem %s631, 256
        %v2884 = vld [vmem:[%s2883] sm:$0xf]
        %v2885 = vld [vmem:[%s2883 + $0x4] sm:$0xf]
        %v2886 = vld [vmem:[%s2883 + $0x8] sm:$0xf]
        %v2887 = vld [vmem:[%s2883 + $0xc] sm:$0xf]
        %v2888 = vld [vmem:[%s2883 + $0x10] sm:$0xf]
        %v2889 = vld [vmem:[%s2883 + $0x14] sm:$0xf]
        %v2890 = vld [vmem:[%s2883 + $0x18] sm:$0xf]
        %v2891 = vld [vmem:[%s2883 + $0x1c] sm:$0xf]
        %v2892 = vld [vmem:[%s2883 + $0x20] sm:$0xf]
        %v2893 = vld [vmem:[%s2883 + $0x24] sm:$0xf]
        %v2894 = vld [vmem:[%s2883 + $0x28] sm:$0xf]
        %v2895 = vld [vmem:[%s2883 + $0x2c] sm:$0xf]
        %v2896 = vld [vmem:[%s2883 + $0x30] sm:$0xf]
        %v2897 = vld [vmem:[%s2883 + $0x34] sm:$0xf]
        %v2898 = vld [vmem:[%s2883 + $0x38] sm:$0xf]
        %v2899 = vld [vmem:[%s2883 + $0x3c] sm:$0xf]
        %v2916 = vunpack.c.l.b16 %v2884
        %v2917 = vunpack.c.l.b16 %v2885
        %v2918 = vunpack.c.l.b16 %v2886
        %v2919 = vunpack.c.l.b16 %v2887
        %v2920 = vunpack.c.l.b16 %v2888
        %v2921 = vunpack.c.l.b16 %v2889
        %v2922 = vunpack.c.l.b16 %v2890
        %v2923 = vunpack.c.l.b16 %v2891
        %v2924 = vunpack.c.l.b16 %v2892
        %v2925 = vunpack.c.l.b16 %v2893
        %v2926 = vunpack.c.l.b16 %v2894
        %v2927 = vunpack.c.l.b16 %v2895
        %v2928 = vunpack.c.l.b16 %v2896
        %v2929 = vunpack.c.l.b16 %v2897
        %v2930 = vunpack.c.l.b16 %v2898
        %v2931 = vunpack.c.l.b16 %v2899
        %v2932 = vpack.c.b16 %v2917, %v2916
        %v2933 = vpack.c.b16 %v2919, %v2918
        %v2934 = vpack.c.b16 %v2921, %v2920
        %v2935 = vpack.c.b16 %v2923, %v2922
        %v2936 = vpack.c.b16 %v2925, %v2924
        %v2937 = vpack.c.b16 %v2927, %v2926
        %v2938 = vpack.c.b16 %v2929, %v2928
        %v2939 = vpack.c.b16 %v2931, %v2930
        %2948 = vmatprep.subr.bf16.mxu0 0
        %2949 = vmatpush1.bf16.msra.mxu0 %v2939
        %2950 = vmatprep.subr.bf16.mxu0 0
        %2951 = vmatpush1.bf16.msra.mxu0 %v2938
        %2952 = vmatprep.subr.bf16.mxu0 0
        %2953 = vmatpush1.bf16.msra.mxu0 %v2937
        %2954 = vmatprep.subr.bf16.mxu0 0
        %2955 = vmatpush1.bf16.msra.mxu0 %v2936
        %2956 = vmatprep.subr.bf16.mxu0 0
        %2957 = vmatpush1.bf16.msra.mxu0 %v2935
        %2958 = vmatprep.subr.bf16.mxu0 0
        %2959 = vmatpush1.bf16.msra.mxu0 %v2934
        %2960 = vmatprep.subr.bf16.mxu0 0
        %2961 = vmatpush1.bf16.msra.mxu0 %v2933
        %2962 = vmatprep.subr.bf16.mxu0 0
        %2963 = vmatpush1.bf16.msra.mxu0 %v2932
        %2964 = vmatprep.subr.bf16.mxu0 0
        %2965 = vmatpush2.bf16.msra.mxu0 0
        %2966 = vmatprep.subr.bf16.mxu0 0
        %2967 = vmatpush2.bf16.msra.mxu0 0
        %2968 = vmatprep.subr.bf16.mxu0 0
        %2969 = vmatpush2.bf16.msra.mxu0 0
        %2970 = vmatprep.subr.bf16.mxu0 0
        %2971 = vmatpush2.bf16.msra.mxu0 0
        %2972 = vmatprep.subr.bf16.mxu0 0
        %2973 = vmatpush2.bf16.msra.mxu0 0
        %2974 = vmatprep.subr.bf16.mxu0 0
        %2975 = vmatpush2.bf16.msra.mxu0 0
        %2976 = vmatprep.subr.bf16.mxu0 0
        %2977 = vmatpush2.bf16.msra.mxu0 0
        %2978 = vmatprep.subr.bf16.mxu0 0
        %2979 = vmatpush2.bf16.msra.mxu0 0
        %2980 = vmatprep.mubr.bf16.mxu0 0
        %2981 = vmatmul.mubr.bf16.gmra.mxu0 %v2882
        %v2982 = vpop.f32.mrf.mxu0
        %v2983 = vadd.f32 0.0, %v2982
        %v2984 = vpop.f32.mrf.mxu0
        %v2985 = vpop.f32.mrf.mxu0
        %v2986 = vpop.f32.mrf.mxu0
        %2987 = vdwg.mxu0
        %v2988 = vadd.f32 %v2879, %v2983
        %v2989 = vld [vmem:[%s634] sm:$0x1]
        %v2991 = vlaneseq
        %v2992 = vshrl.u32 %v2991, 7
        %v2993 = vsub.s32 0, %v2992
        %v2994 = vrot.slane %v2989, %v2993
        %v2996 = vadd.f32 %v2988, %v2994
        %v2997 = vmax.f32 %v2996, 0.0
        %v2998 = vpack.c.bf16 %v2997, %v2997
        %v2999 = vld [vmem:[%s512] sm:$0xf]
        %v3000 = vld [vmem:[%s512 + $0x4] sm:$0xf]
        %v3001 = vld [vmem:[%s512 + $0x8] sm:$0xf]
        %v3002 = vld [vmem:[%s512 + $0xc] sm:$0xf]
        %v3003 = vld [vmem:[%s512 + $0x10] sm:$0xf]
        %v3004 = vld [vmem:[%s512 + $0x14] sm:$0xf]
        %v3005 = vld [vmem:[%s512 + $0x18] sm:$0xf]
        %v3006 = vld [vmem:[%s512 + $0x1c] sm:$0xf]
        %v3007 = vld [vmem:[%s512 + $0x20] sm:$0xf]
        %v3008 = vld [vmem:[%s512 + $0x24] sm:$0xf]
        %v3009 = vld [vmem:[%s512 + $0x28] sm:$0xf]
        %v3010 = vld [vmem:[%s512 + $0x2c] sm:$0xf]
        %v3011 = vld [vmem:[%s512 + $0x30] sm:$0xf]
        %v3012 = vld [vmem:[%s512 + $0x34] sm:$0xf]
        %v3013 = vld [vmem:[%s512 + $0x38] sm:$0xf]
        %v3014 = vld [vmem:[%s512 + $0x3c] sm:$0xf]
        %v3015 = vld [vmem:[%s637] sm:$0x1]
        %v3017 = vlaneseq
        %v3018 = vshrl.u32 %v3017, 7
        %v3019 = vsub.s32 0, %v3018
        %v3020 = vrot.slane %v3015, %v3019
        %v3038 = vunpack.c.l.b16 %v2999
        %v3039 = vunpack.c.l.b16 %v3000
        %v3040 = vunpack.c.l.b16 %v3001
        %v3041 = vunpack.c.l.b16 %v3002
        %v3042 = vunpack.c.l.b16 %v3003
        %v3043 = vunpack.c.l.b16 %v3004
        %v3044 = vunpack.c.l.b16 %v3005
        %v3045 = vunpack.c.l.b16 %v3006
        %v3046 = vunpack.c.l.b16 %v3007
        %v3047 = vunpack.c.l.b16 %v3008
        %v3048 = vunpack.c.l.b16 %v3009
        %v3049 = vunpack.c.l.b16 %v3010
        %v3050 = vunpack.c.l.b16 %v3011
        %v3051 = vunpack.c.l.b16 %v3012
        %v3052 = vunpack.c.l.b16 %v3013
        %v3053 = vunpack.c.l.b16 %v3014
        %v3054 = vpack.c.b16 %v3039, %v3038
        %v3055 = vpack.c.b16 %v3041, %v3040
        %v3056 = vpack.c.b16 %v3043, %v3042
        %v3057 = vpack.c.b16 %v3045, %v3044
        %v3058 = vpack.c.b16 %v3047, %v3046
        %v3059 = vpack.c.b16 %v3049, %v3048
        %v3060 = vpack.c.b16 %v3051, %v3050
        %v3061 = vpack.c.b16 %v3053, %v3052
        %3070 = vmatprep.subr.bf16.mxu0 0
        %3071 = vmatpush1.bf16.msra.mxu0 %v3061
        %3072 = vmatprep.subr.bf16.mxu0 0
        %3073 = vmatpush1.bf16.msra.mxu0 %v3060
        %3074 = vmatprep.subr.bf16.mxu0 0
        %3075 = vmatpush1.bf16.msra.mxu0 %v3059
        %3076 = vmatprep.subr.bf16.mxu0 0
        %3077 = vmatpush1.bf16.msra.mxu0 %v3058
        %3078 = vmatprep.subr.bf16.mxu0 0
        %3079 = vmatpush1.bf16.msra.mxu0 %v3057
        %3080 = vmatprep.subr.bf16.mxu0 0
        %3081 = vmatpush1.bf16.msra.mxu0 %v3056
        %3082 = vmatprep.subr.bf16.mxu0 0
        %3083 = vmatpush1.bf16.msra.mxu0 %v3055
        %3084 = vmatprep.subr.bf16.mxu0 0
        %3085 = vmatpush1.bf16.msra.mxu0 %v3054
        %3086 = vmatprep.subr.bf16.mxu0 0
        %3087 = vmatpush2.bf16.msra.mxu0 0
        %3088 = vmatprep.subr.bf16.mxu0 0
        %3089 = vmatpush2.bf16.msra.mxu0 0
        %3090 = vmatprep.subr.bf16.mxu0 0
        %3091 = vmatpush2.bf16.msra.mxu0 0
        %3092 = vmatprep.subr.bf16.mxu0 0
        %3093 = vmatpush2.bf16.msra.mxu0 0
        %3094 = vmatprep.subr.bf16.mxu0 0
        %3095 = vmatpush2.bf16.msra.mxu0 0
        %3096 = vmatprep.subr.bf16.mxu0 0
        %3097 = vmatpush2.bf16.msra.mxu0 0
        %3098 = vmatprep.subr.bf16.mxu0 0
        %3099 = vmatpush2.bf16.msra.mxu0 0
        %3100 = vmatprep.subr.bf16.mxu0 0
        %3101 = vmatpush2.bf16.msra.mxu0 0
        %3102 = vmatprep.mubr.bf16.mxu0 0
        %3103 = vmatmul.mubr.bf16.gmra.mxu0 %v2998
        %v3104 = vpop.f32.mrf.mxu0
        %v3105 = vadd.f32 %v3020, %v3104
        %v3106 = vpop.f32.mrf.mxu0
        %v3107 = vpop.f32.mrf.mxu0
        %v3108 = vpop.f32.mrf.mxu0
        %3109 = vdwg.mxu0
        %v3110 = vmax.f32 %v3105, 0.0
        %v3111 = vpack.c.bf16 %v3110, %v3110
        %v3112 = vld [vmem:[%s521] sm:$0xf]
        %v3113 = vld [vmem:[%s521 + $0x4] sm:$0xf]
        %v3114 = vld [vmem:[%s521 + $0x8] sm:$0xf]
        %v3115 = vld [vmem:[%s521 + $0xc] sm:$0xf]
        %v3116 = vld [vmem:[%s521 + $0x10] sm:$0xf]
        %v3117 = vld [vmem:[%s521 + $0x14] sm:$0xf]
        %v3118 = vld [vmem:[%s521 + $0x18] sm:$0xf]
        %v3119 = vld [vmem:[%s521 + $0x1c] sm:$0xf]
        %v3120 = vld [vmem:[%s521 + $0x20] sm:$0xf]
        %v3121 = vld [vmem:[%s521 + $0x24] sm:$0xf]
        %v3122 = vld [vmem:[%s521 + $0x28] sm:$0xf]
        %v3123 = vld [vmem:[%s521 + $0x2c] sm:$0xf]
        %v3124 = vld [vmem:[%s521 + $0x30] sm:$0xf]
        %v3125 = vld [vmem:[%s521 + $0x34] sm:$0xf]
        %v3126 = vld [vmem:[%s521 + $0x38] sm:$0xf]
        %v3127 = vld [vmem:[%s521 + $0x3c] sm:$0xf]
        %v3128 = vld [vmem:[%s640] sm:$0x1]
        %v3130 = vlaneseq
        %v3131 = vshrl.u32 %v3130, 7
        %v3132 = vsub.s32 0, %v3131
        %v3133 = vrot.slane %v3128, %v3132
        %v3151 = vunpack.c.l.b16 %v3112
        %v3152 = vunpack.c.l.b16 %v3113
        %v3153 = vunpack.c.l.b16 %v3114
        %v3154 = vunpack.c.l.b16 %v3115
        %v3155 = vunpack.c.l.b16 %v3116
        %v3156 = vunpack.c.l.b16 %v3117
        %v3157 = vunpack.c.l.b16 %v3118
        %v3158 = vunpack.c.l.b16 %v3119
        %v3159 = vunpack.c.l.b16 %v3120
        %v3160 = vunpack.c.l.b16 %v3121
        %v3161 = vunpack.c.l.b16 %v3122
        %v3162 = vunpack.c.l.b16 %v3123
        %v3163 = vunpack.c.l.b16 %v3124
        %v3164 = vunpack.c.l.b16 %v3125
        %v3165 = vunpack.c.l.b16 %v3126
        %v3166 = vunpack.c.l.b16 %v3127
        %v3167 = vpack.c.b16 %v3152, %v3151
        %v3168 = vpack.c.b16 %v3154, %v3153
        %v3169 = vpack.c.b16 %v3156, %v3155
        %v3170 = vpack.c.b16 %v3158, %v3157
        %v3171 = vpack.c.b16 %v3160, %v3159
        %v3172 = vpack.c.b16 %v3162, %v3161
        %v3173 = vpack.c.b16 %v3164, %v3163
        %v3174 = vpack.c.b16 %v3166, %v3165
        %3183 = vmatprep.subr.bf16.mxu0 0
        %3184 = vmatpush1.bf16.msra.mxu0 %v3174
        %3185 = vmatprep.subr.bf16.mxu0 0
        %3186 = vmatpush1.bf16.msra.mxu0 %v3173
        %3187 = vmatprep.subr.bf16.mxu0 0
        %3188 = vmatpush1.bf16.msra.mxu0 %v3172
        %3189 = vmatprep.subr.bf16.mxu0 0
        %3190 = vmatpush1.bf16.msra.mxu0 %v3171
        %3191 = vmatprep.subr.bf16.mxu0 0
        %3192 = vmatpush1.bf16.msra.mxu0 %v3170
        %3193 = vmatprep.subr.bf16.mxu0 0
        %3194 = vmatpush1.bf16.msra.mxu0 %v3169
        %3195 = vmatprep.subr.bf16.mxu0 0
        %3196 = vmatpush1.bf16.msra.mxu0 %v3168
        %3197 = vmatprep.subr.bf16.mxu0 0
        %3198 = vmatpush1.bf16.msra.mxu0 %v3167
        %3199 = vmatprep.subr.bf16.mxu0 0
        %3200 = vmatpush2.bf16.msra.mxu0 0
        %3201 = vmatprep.subr.bf16.mxu0 0
        %3202 = vmatpush2.bf16.msra.mxu0 0
        %3203 = vmatprep.subr.bf16.mxu0 0
        %3204 = vmatpush2.bf16.msra.mxu0 0
        %3205 = vmatprep.subr.bf16.mxu0 0
        %3206 = vmatpush2.bf16.msra.mxu0 0
        %3207 = vmatprep.subr.bf16.mxu0 0
        %3208 = vmatpush2.bf16.msra.mxu0 0
        %3209 = vmatprep.subr.bf16.mxu0 0
        %3210 = vmatpush2.bf16.msra.mxu0 0
        %3211 = vmatprep.subr.bf16.mxu0 0
        %3212 = vmatpush2.bf16.msra.mxu0 0
        %3213 = vmatprep.subr.bf16.mxu0 0
        %3214 = vmatpush2.bf16.msra.mxu0 0
        %3215 = vmatprep.mubr.bf16.mxu0 0
        %3216 = vmatmul.mubr.bf16.gmra.mxu0 %v3111
        %v3217 = vpop.f32.mrf.mxu0
        %v3218 = vadd.f32 %v3133, %v3217
        %v3219 = vpop.f32.mrf.mxu0
        %v3220 = vpop.f32.mrf.mxu0
        %v3221 = vpop.f32.mrf.mxu0
        %3222 = vdwg.mxu0
        %3223 = vst [vmem:[%s647] sm:$0x3] %v3218
        %p3224 = scmp.lt.s32.totalorder %s32, 1
        %s3225 = scalar_select %p3224, %s32, 1
        %p3226 = scmp.lt.s32.totalorder %s33, 0
        %s3227 = scalar_select %p3226, %s33, 0
        %s3228 = sadd.s32 %s3227, %s3225
        %s3229 = smul.addr %s3228, 2
        %s3230 = scalar_lea.vmem %s11, %s3229
        // Predicated region
        $region77: #{doublenet_forward.1} parent=63 // pred_check
          %p3231 = pneg %p348
        $region78: #{doublenet_forward.1} parent=63 // pred_check_branch
          %3233 = sbr.rel (%p3231) target = $region80
        $region79: #{doublenet_forward.1} parent=63 // pred_region
          _
        $region80: #{doublenet_forward.1} parent=63 // pred_fallthru
          _
      $region64: #{doublenet_forward.1} parent=5 // pred_fallthru
        _
      %p3234 = scmp.le.s32.totalorder 2, %s23
      // Predicated region
      $region81: #{doublenet_forward.1} parent=5 // pred_check
        %p3235 = pneg %p3234
      $region82: #{doublenet_forward.1} parent=5 // pred_check_branch
        %3237 = sbr.rel (%p3235) target = $region84
      $region83: #{doublenet_forward.1} parent=5 // pred_region
        %s3238 = ssub.s32 %s23, 2
        // Predicated region
        $region85: #{doublenet_forward.1} parent=83 // pred_check
          %p3239 = pneg %p354
        $region86: #{doublenet_forward.1} parent=83 // pred_check_branch
          %3241 = sbr.rel (%p3239) target = $region88
        $region87: #{doublenet_forward.1} parent=83 // pred_region
          %p3242 = scmp.lt.s32.totalorder %s34, 1
          %s3243 = scalar_select %p3242, %s34, 1
          %p3244 = scmp.lt.s32.totalorder %s35, 0
          %s3245 = scalar_select %p3244, %s35, 0
          %s3246 = sadd.s32 %s3245, %s3243
          %s3247 = smul.addr %s3246, 2
          %s3248 = scalar_lea.vmem %s11, %s3247
        $region88: #{doublenet_forward.1} parent=83 // pred_fallthru
          _
      $region84: #{doublenet_forward.1} parent=5 // pred_fallthru
        _
    $region6: #{doublenet_forward.1} parent=1 // loop_footer
      %s27 = sadd.s32 1, %s23
    $region7: #{doublenet_forward.1} parent=1 // loop_footer_branch
      %22 = sbr.rel target = $region3
    $region8: #{doublenet_forward.1} parent=1 // loop_exit
      _
    %3249 = vsyncpa [#allocation7], 1
    %s3250 = scalar_lea.sflag [#allocation7], 1
    %3251 = vsyncpa %s3250, 1
    %3252 = vsyncpa [#allocation9], 1
    %s3253 = scalar_lea.sflag [#allocation9], 1
    %3254 = vsyncpa %s3253, 1

</llo_original>
